<compile_context>
chip_gen: v7x
topology: tpu7x:2x2x1
jax: 0.10.0
libtpu: 0.0.40
codegen_flags: <defaults>
</compile_context>

<pallas_src>
import functools

import jax
import jax.numpy as jnp
from jax.experimental import pallas as pl
from jax.experimental.pallas import tpu as pltpu

_NEG = -1e30
_BLK = 128


def _round_up(v, m):
    return (v + m - 1) // m * m


def _pad2(a, rows, cols):
    return jnp.pad(a, ((0, rows - a.shape[0]), (0, cols - a.shape[1])))


# ---------------------------------------------------------------------------
# Kernel: one dense GATConv layer for one tile of target (destination) nodes.
# ---------------------------------------------------------------------------
def _gat_conv_kernel(x_full_ref, x_tile_ref, adj_ref, w_ref, b_ref, out_ref, *,
                     heads, concat):
    # x_full_ref : [Np, Din]          bf16  all source nodes (resident across grid)
    # x_tile_ref : [Ti, Din]          bf16  this tile's target nodes
    # adj_ref    : [Ti, Np]           int8  adj[i, j] != 0  <=>  edge j -> i
    # w_ref      : [Din, (H+1)*128]   bf16  per-head feature blocks + logits block
    # b_ref      : [1, out_width]     f32
    # out_ref    : [Ti, out_width]
    w_all = w_ref[...]

    # One matmul produces per-head features and attention logits for every
    # source node (attention vectors were folded into the last 128 lanes of w).
    xw = jnp.dot(x_full_ref[...], w_all,
                 preferred_element_type=jnp.float32)              # [Np, (H+1)*128]

    # Source logits: single column->row relayout (one transpose of the logits
    # block) instead of one relayout per head per layer.
    src_logits = jnp.transpose(xw[:, heads * _BLK:(heads + 1) * _BLK])  # [128, Np]

    # Target-tile logits: tiny matmul of the tile's rows against the logits
    # block only (keeps destination logits in sublane orientation, no dynamic
    # sublane slicing of the full xw value).
    dst_logits = jnp.dot(x_tile_ref[...],
                         w_all[:, heads * _BLK:(heads + 1) * _BLK],
                         preferred_element_type=jnp.float32)      # [Ti, 128]

    edge_mask = adj_ref[...].astype(jnp.float32) > 0.0            # [Ti, Np]

    head_outs = []
    for h in range(heads):                      # heads is tiny & static -> unrolled
        a_src = src_logits[h:h + 1, :]                            # [1, Np]
        a_dst = dst_logits[:, heads + h:heads + h + 1]            # [Ti, 1]
        e = a_dst + a_src                       # e[i, j] = a_dst[i] + a_src[j]
        e = jnp.maximum(e, 0.2 * e)             # LeakyReLU(0.2)
        e = jnp.where(edge_mask, e, _NEG)       # mask non-edges
        m = jnp.max(e, axis=-1, keepdims=True)  # softmax over source nodes j
        p = jnp.exp(e - m)                      # masked entries underflow to exact 0
        inv = pl.reciprocal(jnp.sum(p, axis=-1, keepdims=True), approx=True)
        attn = (p * inv).astype(jnp.bfloat16)
        xh = xw[:, h * _BLK:(h + 1) * _BLK].astype(jnp.bfloat16)  # [Np, 128]
        head_outs.append(jnp.dot(attn, xh, preferred_element_type=jnp.float32))

    if concat:
        out = jnp.concatenate(head_outs, axis=-1)   # 128-aligned, no lane relayout
    else:
        out = head_outs[0]
        for o in head_outs[1:]:
            out = out + o
        out = out * (1.0 / heads)                   # mean over heads
    out_ref[...] = (out + b_ref[...]).astype(out_ref.dtype)


def _gat_conv(x_full, adj, w_ext, bias, *, heads, concat, tile_i, out_dtype):
    """Row-tiled dense GATConv: grid over target-node tiles."""
    n_pad, din = x_full.shape
    out_width = bias.shape[1]
    kernel = functools.partial(_gat_conv_kernel, heads=heads, concat=concat)
    return pl.pallas_call(
        kernel,
        out_shape=jax.ShapeDtypeStruct((n_pad, out_width), out_dtype),
        grid=(n_pad // tile_i,),
        in_specs=[
            pl.BlockSpec((n_pad, din), lambda i: (0, 0)),            # x (all sources)
            pl.BlockSpec((tile_i, din), lambda i: (i, 0)),           # x (target tile)
            pl.BlockSpec((tile_i, n_pad), lambda i: (i, 0)),         # adj row tile
            pl.BlockSpec((din, w_ext.shape[1]), lambda i: (0, 0)),   # folded weights
            pl.BlockSpec((1, out_width), lambda i: (0, 0)),          # bias
        ],
        out_specs=pl.BlockSpec((tile_i, out_width), lambda i: (i, 0)),
        compiler_params=pltpu.CompilerParams(
            dimension_semantics=("parallel",),       # rows split across TCs on v7x
            vmem_limit_bytes=48 * 1024 * 1024,       # explicit budget (fits v7x)
        ),
    )(x_full, x_full, adj, w_ext, bias)


# ---------------------------------------------------------------------------
# One-time parameter folding / padding (hoisted out of the per-call wrapper).
# ---------------------------------------------------------------------------
def prepare_gat_params(params, *, heads, in_channels):
    f1 = params["att_src1"].shape[1]        # layer-1 hidden per head
    f2 = params["att_src2"].shape[1]        # layer-2 out_channels per head
    fin_pad = _round_up(max(in_channels, _BLK), _BLK)

    # ---- layer 1: GATConv(in_channels, f1, heads, concat=True) ----
    w1 = params["w1"].astype(jnp.float32)                        # [fin, H*f1]
    blocks1 = []
    logits1 = jnp.zeros((fin_pad, _BLK), jnp.float32)
    for h in range(heads):
        wh = w1[:, h * f1:(h + 1) * f1]                          # [fin, f1]
        blocks1.append(_pad2(wh, fin_pad, _BLK))
        logits1 = logits1.at[:in_channels, h].set(wh @ params["att_src1"][h])
        logits1 = logits1.at[:in_channels, heads + h].set(wh @ params["att_dst1"][h])
    w1_ext = jnp.concatenate(blocks1 + [logits1], axis=1).astype(jnp.bfloat16)

    b1 = params["bias1"].reshape(-1)
    b1_ext = jnp.zeros((1, heads * _BLK), jnp.float32)
    for h in range(heads):
        b1_ext = b1_ext.at[0, h * _BLK:h * _BLK + f1].set(b1[h * f1:(h + 1) * f1])

    # ---- layer 2: GATConv(H*f1, f2, heads, concat=False) ----
    # Its input follows layer 1's padded layout: input-head g occupies padded
    # rows g*128 .. g*128+f1-1 (all other rows are exactly zero).
    w2 = params["w2"].astype(jnp.float32)                        # [H*f1, H*f2]

    def remap_rows(m):                                           # [H*f1, c] -> [H*128, c]
        return jnp.concatenate(
            [_pad2(m[g * f1:(g + 1) * f1, :], _BLK, m.shape[1]) for g in range(heads)],
            axis=0)

    blocks2 = []
    logits2 = jnp.zeros((heads * _BLK, _BLK), jnp.float32)
    for h in range(heads):
        wh = w2[:, h * f2:(h + 1) * f2]                          # [H*f1, f2]
        blocks2.append(_pad2(remap_rows(wh), heads * _BLK, _BLK))
        vs = remap_rows((wh @ params["att_src2"][h])[:, None])[:, 0]
        vd = remap_rows((wh @ params["att_dst2"][h])[:, None])[:, 0]
        logits2 = logits2.at[:, h].set(vs)
        logits2 = logits2.at[:, heads + h].set(vd)
    w2_ext = jnp.concatenate(blocks2 + [logits2], axis=1).astype(jnp.bfloat16)

    b2_ext = jnp.zeros((1, _BLK), jnp.float32).at[0, :f2].set(
        params["bias2"].reshape(-1))

    return {"w1_ext": w1_ext, "b1_ext": b1_ext,
            "w2_ext": w2_ext, "b2_ext": b2_ext}


def edge_index_to_adj(edge_index, num_nodes, num_nodes_pad):
    """adj[i, j] = 1 iff edge j -> i; self-loops added (add_self_loops=True).

    Stored as int8 (the kernel only needs a 0/1 edge mask); padded rows /
    columns stay zero.
    """
    # TODO(synk): duplicate edges collapse in the dense 0/1 mask (PyG's scatter
    # softmax counts duplicates separately); exact multigraph semantics would
    # need the CSR / scalar-prefetch path described at the top of the file.
    src, dst = edge_index[0], edge_index[1]
    adj = jnp.zeros((num_nodes_pad, num_nodes_pad), jnp.int8)
    adj = adj.at[dst, src].set(1)
    diag = jnp.arange(num_nodes)
    adj = adj.at[diag, diag].set(1)
    return adj


def gat_forward(x, edge_index, prepared, *, heads, out_channels, tile_i=128):
    """Matches GAT.forward: conv1 (heads concatenated) then conv2 (head mean)."""
    n, fin = x.shape
    fin_pad = prepared["w1_ext"].shape[0]
    tile_i = min(tile_i, _round_up(n, _BLK))
    n_pad = _round_up(n, tile_i)

    x_p = jnp.zeros((n_pad, fin_pad), jnp.bfloat16).at[:n, :fin].set(
        x.astype(jnp.bfloat16))
    adj = edge_index_to_adj(edge_index, n, n_pad)   # built once, used by both layers

    h1 = _gat_conv(x_p, adj, prepared["w1_ext"], prepared["b1_ext"],
                   heads=heads, concat=True, tile_i=tile_i, out_dtype=jnp.bfloat16)
    out = _gat_conv(h1, adj, prepared["w2_ext"], prepared["b2_ext"],
                    heads=heads, concat=False, tile_i=tile_i, out_dtype=jnp.float32)
    return out[:n, :out_channels]


def glorot(key, shape):
    fan_in, fan_out = shape[-2], shape[-1]
    limit = (6.0 / (fan_in + fan_out)) ** 0.5
    return jax.random.uniform(key, shape, jnp.float32, -limit, limit)


if __name__ == "__main__":
    N = 128                 # nodes
    IN_CHANNELS = 16
    HIDDEN = 32
    NUM_CLASSES = 8         # out_channels of the last GATConv
    HEADS = 2
    NUM_EDGES = 512

    key = jax.random.PRNGKey(0)
    ks = jax.random.split(key, 12)

    # Inputs
    x = jax.random.normal(ks[0], (N, IN_CHANNELS), jnp.float32)
    src = jax.random.randint(ks[1], (NUM_EDGES,), 0, N)
    dst = jax.random.randint(ks[2], (NUM_EDGES,), 0, N)
    edge_index = jnp.stack([src, dst], axis=0)          # [2, E]

    # Parameters (deterministic synthetic init; shapes follow GATConv __init__)
    params = {
        # layer 1: GATConv(IN_CHANNELS, HIDDEN, heads=2, concat=True)
        "w1": glorot(ks[3], (IN_CHANNELS, HEADS * HIDDEN)),
        "att_src1": glorot(ks[4], (HEADS, HIDDEN)),
        "att_dst1": glorot(ks[5], (HEADS, HIDDEN)),
        "bias1": jnp.zeros((1, HEADS * HIDDEN), jnp.float32),
        # layer 2: GATConv(HIDDEN*HEADS, NUM_CLASSES, heads=2, concat=False)
        "w2": glorot(ks[6], (HEADS * HIDDEN, HEADS * NUM_CLASSES)),
        "att_src2": glorot(ks[7], (HEADS, NUM_CLASSES)),
        "att_dst2": glorot(ks[8], (HEADS, NUM_CLASSES)),
        "bias2": jnp.zeros((1, NUM_CLASSES), jnp.float32),
    }

    # Weight folding / padding happens ONCE, outside the forward pass.
    prepared = prepare_gat_params(params, heads=HEADS, in_channels=IN_CHANNELS)
    fwd = jax.jit(functools.partial(gat_forward, heads=HEADS,
                                    out_channels=NUM_CLASSES))

    out = jax.block_until_ready(fwd(x, edge_index, prepared))
    assert out.shape == (N, NUM_CLASSES), out.shape
    assert bool(jnp.all(jnp.isfinite(out)))
    print("KERNEL_OK")
</pallas_src>

<mosaic_0001>
module attributes {stable_mosaic.version = 11 : i64} {
  func.func @_gat_conv_kernel(%arg0: i32, %arg1: memref<128x128xbf16, #tpu.memory_space<vmem>>, %arg2: memref<128x128xbf16, #tpu.memory_space<vmem>>, %arg3: memref<128x128xi8, #tpu.memory_space<vmem>>, %arg4: memref<128x384xbf16, #tpu.memory_space<vmem>>, %arg5: memref<1x256xf32, #tpu.memory_space<vmem>>, %arg6: memref<128x256xbf16, #tpu.memory_space<vmem>>) attributes {dimension_semantics = [#tpu.dimension_semantics<parallel>], iteration_bounds = array<i64: 1>, scalar_prefetch = 0 : i64, scratch_operands = 0 : i64, tpu.core_type = #tpu.core_type<tc>, window_params = [{pipeline_mode = #tpu.pipeline_mode<synchronous>, transform_indices = @transform_0, window_bounds = array<i64: 128, 128>}, {transform_indices = @transform_1, window_bounds = array<i64: 128, 128>}, {transform_indices = @transform_2, window_bounds = array<i64: 128, 128>}, {pipeline_mode = #tpu.pipeline_mode<synchronous>, transform_indices = @transform_3, window_bounds = array<i64: 128, 384>}, {pipeline_mode = #tpu.pipeline_mode<synchronous>, transform_indices = @transform_4, window_bounds = array<i64: 1, 256>}, {transform_indices = @transform_5, window_bounds = array<i64: 128, 256>}]} {
    %c0 = arith.constant 0 : index
    %c0_0 = arith.constant 0 : index
    %0 = vector.load %arg4[%c0, %c0_0] : memref<128x384xbf16, #tpu.memory_space<vmem>>, vector<128x384xbf16>
    %c0_1 = arith.constant 0 : index
    %c0_2 = arith.constant 0 : index
    %1 = vector.load %arg1[%c0_1, %c0_2] : memref<128x128xbf16, #tpu.memory_space<vmem>>, vector<128x128xbf16>
    %cst = arith.constant dense<0.000000e+00> : vector<128x384xf32>
    %2 = tpu.matmul %1, %0, %cst {dimension_numbers = #tpu.dot_dimension_numbers<[1], [0], [0], [1], [0, 0, 1, 1], [], []>} : vector<128x128xbf16>, vector<128x384xbf16>, vector<128x384xf32> -> vector<128x384xf32>
    %3 = vector.extract_strided_slice %2 {offsets = [0, 256], sizes = [128, 128], strides = [1, 1]} : vector<128x384xf32> to vector<128x128xf32>
    %4 = tpu.transpose %3, [1, 0] : vector<128x128xf32> -> vector<128x128xf32>
    %c0_3 = arith.constant 0 : index
    %c0_4 = arith.constant 0 : index
    %5 = vector.load %arg2[%c0_3, %c0_4] : memref<128x128xbf16, #tpu.memory_space<vmem>>, vector<128x128xbf16>
    %6 = vector.extract_strided_slice %0 {offsets = [0, 256], sizes = [128, 128], strides = [1, 1]} : vector<128x384xbf16> to vector<128x128xbf16>
    %cst_5 = arith.constant dense<0.000000e+00> : vector<128x128xf32>
    %7 = tpu.matmul %5, %6, %cst_5 {dimension_numbers = #tpu.dot_dimension_numbers<[1], [0], [0], [1], [0, 0, 1, 1], [], []>} : vector<128x128xbf16>, vector<128x128xbf16>, vector<128x128xf32> -> vector<128x128xf32>
    %c0_6 = arith.constant 0 : index
    %c0_7 = arith.constant 0 : index
    %8 = vector.load %arg3[%c0_6, %c0_7] : memref<128x128xi8, #tpu.memory_space<vmem>>, vector<128x128xi8>
    %9 = arith.sitofp %8 : vector<128x128xi8> to vector<128x128xf32>
    %cst_8 = arith.constant 0.000000e+00 : f32
    %10 = vector.broadcast %cst_8 : f32 to vector<128x128xf32>
    %11 = arith.cmpf ogt, %9, %10 : vector<128x128xf32>
    %12 = vector.extract_strided_slice %4 {offsets = [0, 0], sizes = [1, 128], strides = [1, 1]} : vector<128x128xf32> to vector<1x128xf32>
    %13 = vector.extract_strided_slice %7 {offsets = [0, 2], sizes = [128, 1], strides = [1, 1]} : vector<128x128xf32> to vector<128x1xf32>
    %14 = vector.broadcast %13 : vector<128x1xf32> to vector<128x128xf32>
    %15 = vector.broadcast %12 : vector<1x128xf32> to vector<128x128xf32>
    %16 = arith.addf %14, %15 : vector<128x128xf32>
    %cst_9 = arith.constant 2.000000e-01 : f32
    %17 = vector.broadcast %cst_9 : f32 to vector<128x128xf32>
    %18 = arith.mulf %17, %16 : vector<128x128xf32>
    %19 = arith.maximumf %16, %18 : vector<128x128xf32>
    %cst_10 = arith.constant -1.000000e+30 : f32
    %20 = vector.broadcast %cst_10 : f32 to vector<128x128xf32>
    %21 = arith.select %11, %19, %20 : vector<128x128xi1>, vector<128x128xf32>
    %cst_11 = arith.constant dense<0xFF800000> : vector<128xf32>
    %22 = vector.multi_reduction <maximumf>, %21, %cst_11 [1] : vector<128x128xf32> to vector<128xf32>
    %23 = vector.shape_cast %22 : vector<128xf32> to vector<128x1xf32>
    %24 = vector.broadcast %23 : vector<128x1xf32> to vector<128x128xf32>
    %25 = arith.subf %21, %24 : vector<128x128xf32>
    %26 = math.exp %25 : vector<128x128xf32>
    %cst_12 = arith.constant dense<0.000000e+00> : vector<128xf32>
    %27 = vector.multi_reduction <add>, %26, %cst_12 [1] : vector<128x128xf32> to vector<128xf32>
    %28 = vector.shape_cast %27 : vector<128xf32> to vector<128x1xf32>
    %29 = tpu.reciprocal %28 {approx = true} : vector<128x1xf32> -> vector<128x1xf32>
    %30 = vector.broadcast %29 : vector<128x1xf32> to vector<128x128xf32>
    %31 = arith.mulf %26, %30 : vector<128x128xf32>
    %32 = arith.truncf %31 : vector<128x128xf32> to vector<128x128xbf16>
    %33 = vector.extract_strided_slice %2 {offsets = [0, 0], sizes = [128, 128], strides = [1, 1]} : vector<128x384xf32> to vector<128x128xf32>
    %34 = arith.truncf %33 : vector<128x128xf32> to vector<128x128xbf16>
    %cst_13 = arith.constant dense<0.000000e+00> : vector<128x128xf32>
    %35 = tpu.matmul %32, %34, %cst_13 {dimension_numbers = #tpu.dot_dimension_numbers<[1], [0], [0], [1], [0, 0, 1, 1], [], []>} : vector<128x128xbf16>, vector<128x128xbf16>, vector<128x128xf32> -> vector<128x128xf32>
    %36 = vector.extract_strided_slice %4 {offsets = [1, 0], sizes = [1, 128], strides = [1, 1]} : vector<128x128xf32> to vector<1x128xf32>
    %37 = vector.extract_strided_slice %7 {offsets = [0, 3], sizes = [128, 1], strides = [1, 1]} : vector<128x128xf32> to vector<128x1xf32>
    %38 = vector.broadcast %37 : vector<128x1xf32> to vector<128x128xf32>
    %39 = vector.broadcast %36 : vector<1x128xf32> to vector<128x128xf32>
    %40 = arith.addf %38, %39 : vector<128x128xf32>
    %cst_14 = arith.constant 2.000000e-01 : f32
    %41 = vector.broadcast %cst_14 : f32 to vector<128x128xf32>
    %42 = arith.mulf %41, %40 : vector<128x128xf32>
    %43 = arith.maximumf %40, %42 : vector<128x128xf32>
    %cst_15 = arith.constant -1.000000e+30 : f32
    %44 = vector.broadcast %cst_15 : f32 to vector<128x128xf32>
    %45 = arith.select %11, %43, %44 : vector<128x128xi1>, vector<128x128xf32>
    %cst_16 = arith.constant dense<0xFF800000> : vector<128xf32>
    %46 = vector.multi_reduction <maximumf>, %45, %cst_16 [1] : vector<128x128xf32> to vector<128xf32>
    %47 = vector.shape_cast %46 : vector<128xf32> to vector<128x1xf32>
    %48 = vector.broadcast %47 : vector<128x1xf32> to vector<128x128xf32>
    %49 = arith.subf %45, %48 : vector<128x128xf32>
    %50 = math.exp %49 : vector<128x128xf32>
    %cst_17 = arith.constant dense<0.000000e+00> : vector<128xf32>
    %51 = vector.multi_reduction <add>, %50, %cst_17 [1] : vector<128x128xf32> to vector<128xf32>
    %52 = vector.shape_cast %51 : vector<128xf32> to vector<128x1xf32>
    %53 = tpu.reciprocal %52 {approx = true} : vector<128x1xf32> -> vector<128x1xf32>
    %54 = vector.broadcast %53 : vector<128x1xf32> to vector<128x128xf32>
    %55 = arith.mulf %50, %54 : vector<128x128xf32>
    %56 = arith.truncf %55 : vector<128x128xf32> to vector<128x128xbf16>
    %57 = vector.extract_strided_slice %2 {offsets = [0, 128], sizes = [128, 128], strides = [1, 1]} : vector<128x384xf32> to vector<128x128xf32>
    %58 = arith.truncf %57 : vector<128x128xf32> to vector<128x128xbf16>
    %cst_18 = arith.constant dense<0.000000e+00> : vector<128x128xf32>
    %59 = tpu.matmul %56, %58, %cst_18 {dimension_numbers = #tpu.dot_dimension_numbers<[1], [0], [0], [1], [0, 0, 1, 1], [], []>} : vector<128x128xbf16>, vector<128x128xbf16>, vector<128x128xf32> -> vector<128x128xf32>
    %60 = tpu.concatenate %35, %59 in 1 : vector<128x128xf32>, vector<128x128xf32> -> vector<128x256xf32>
    %c0_19 = arith.constant 0 : index
    %c0_20 = arith.constant 0 : index
    %61 = vector.load %arg5[%c0_19, %c0_20] : memref<1x256xf32, #tpu.memory_space<vmem>>, vector<1x256xf32>
    %62 = vector.broadcast %61 : vector<1x256xf32> to vector<128x256xf32>
    %63 = arith.addf %60, %62 : vector<128x256xf32>
    %64 = arith.truncf %63 : vector<128x256xf32> to vector<128x256xbf16>
    %c0_21 = arith.constant 0 : index
    %c0_22 = arith.constant 0 : index
    %65 = vector.load %arg6[%c0_21, %c0_22] : memref<128x256xbf16, #tpu.memory_space<vmem>>, vector<128x256xbf16>
    tpu.vector_store %arg6[%c0_21, %c0_22], %64 {strides = array<i32>} : memref<128x256xbf16, #tpu.memory_space<vmem>>, vector<128x256xbf16>,
    return
  }
  func.func @transform_0(%arg0: i32) -> (i32, i32) {
    %c0_i32 = arith.constant 0 : i32
    %c0_i32_0 = arith.constant 0 : i32
    %c0_i32_1 = arith.constant 0 : i32
    return %c0_i32, %c0_i32_0 : i32, i32
  }
  func.func @transform_1(%arg0: i32) -> (i32, i32) {
    %c0_i32 = arith.constant 0 : i32
    %c0_i32_0 = arith.constant 0 : i32
    return %arg0, %c0_i32 : i32, i32
  }
  func.func @transform_2(%arg0: i32) -> (i32, i32) {
    %c0_i32 = arith.constant 0 : i32
    %c0_i32_0 = arith.constant 0 : i32
    return %arg0, %c0_i32 : i32, i32
  }
  func.func @transform_3(%arg0: i32) -> (i32, i32) {
    %c0_i32 = arith.constant 0 : i32
    %c0_i32_0 = arith.constant 0 : i32
    %c0_i32_1 = arith.constant 0 : i32
    return %c0_i32, %c0_i32_0 : i32, i32
  }
  func.func @transform_4(%arg0: i32) -> (i32, i32) {
    %c0_i32 = arith.constant 0 : i32
    %c0_i32_0 = arith.constant 0 : i32
    %c0_i32_1 = arith.constant 0 : i32
    return %c0_i32, %c0_i32_0 : i32, i32
  }
  func.func @transform_5(%arg0: i32) -> (i32, i32) {
    %c0_i32 = arith.constant 0 : i32
    %c0_i32_0 = arith.constant 0 : i32
    return %arg0, %c0_i32 : i32, i32
  }
}

module attributes {stable_mosaic.version = 11 : i64} {
  func.func @_gat_conv_kernel(%arg0: i32, %arg1: memref<128x256xbf16, #tpu.memory_space<vmem>>, %arg2: memref<128x256xbf16, #tpu.memory_space<vmem>>, %arg3: memref<128x128xi8, #tpu.memory_space<vmem>>, %arg4: memref<256x384xbf16, #tpu.memory_space<vmem>>, %arg5: memref<1x128xf32, #tpu.memory_space<vmem>>, %arg6: memref<128x128xf32, #tpu.memory_space<vmem>>) attributes {dimension_semantics = [#tpu.dimension_semantics<parallel>], iteration_bounds = array<i64: 1>, scalar_prefetch = 0 : i64, scratch_operands = 0 : i64, tpu.core_type = #tpu.core_type<tc>, window_params = [{pipeline_mode = #tpu.pipeline_mode<synchronous>, transform_indices = @transform_0, window_bounds = array<i64: 128, 256>}, {transform_indices = @transform_1, window_bounds = array<i64: 128, 256>}, {transform_indices = @transform_2, window_bounds = array<i64: 128, 128>}, {pipeline_mode = #tpu.pipeline_mode<synchronous>, transform_indices = @transform_3, window_bounds = array<i64: 256, 384>}, {pipeline_mode = #tpu.pipeline_mode<synchronous>, transform_indices = @transform_4, window_bounds = array<i64: 1, 128>}, {transform_indices = @transform_5, window_bounds = array<i64: 128, 128>}]} {
    %c0 = arith.constant 0 : index
    %c0_0 = arith.constant 0 : index
    %0 = vector.load %arg4[%c0, %c0_0] : memref<256x384xbf16, #tpu.memory_space<vmem>>, vector<256x384xbf16>
    %c0_1 = arith.constant 0 : index
    %c0_2 = arith.constant 0 : index
    %1 = vector.load %arg1[%c0_1, %c0_2] : memref<128x256xbf16, #tpu.memory_space<vmem>>, vector<128x256xbf16>
    %cst = arith.constant dense<0.000000e+00> : vector<128x384xf32>
    %2 = tpu.matmul %1, %0, %cst {dimension_numbers = #tpu.dot_dimension_numbers<[1], [0], [0], [1], [0, 0, 1, 1], [], []>} : vector<128x256xbf16>, vector<256x384xbf16>, vector<128x384xf32> -> vector<128x384xf32>
    %3 = vector.extract_strided_slice %2 {offsets = [0, 256], sizes = [128, 128], strides = [1, 1]} : vector<128x384xf32> to vector<128x128xf32>
    %4 = tpu.transpose %3, [1, 0] : vector<128x128xf32> -> vector<128x128xf32>
    %c0_3 = arith.constant 0 : index
    %c0_4 = arith.constant 0 : index
    %5 = vector.load %arg2[%c0_3, %c0_4] : memref<128x256xbf16, #tpu.memory_space<vmem>>, vector<128x256xbf16>
    %6 = vector.extract_strided_slice %0 {offsets = [0, 256], sizes = [256, 128], strides = [1, 1]} : vector<256x384xbf16> to vector<256x128xbf16>
    %cst_5 = arith.constant dense<0.000000e+00> : vector<128x128xf32>
    %7 = tpu.matmul %5, %6, %cst_5 {dimension_numbers = #tpu.dot_dimension_numbers<[1], [0], [0], [1], [0, 0, 1, 1], [], []>} : vector<128x256xbf16>, vector<256x128xbf16>, vector<128x128xf32> -> vector<128x128xf32>
    %c0_6 = arith.constant 0 : index
    %c0_7 = arith.constant 0 : index
    %8 = vector.load %arg3[%c0_6, %c0_7] : memref<128x128xi8, #tpu.memory_space<vmem>>, vector<128x128xi8>
    %9 = arith.sitofp %8 : vector<128x128xi8> to vector<128x128xf32>
    %cst_8 = arith.constant 0.000000e+00 : f32
    %10 = vector.broadcast %cst_8 : f32 to vector<128x128xf32>
    %11 = arith.cmpf ogt, %9, %10 : vector<128x128xf32>
    %12 = vector.extract_strided_slice %4 {offsets = [0, 0], sizes = [1, 128], strides = [1, 1]} : vector<128x128xf32> to vector<1x128xf32>
    %13 = vector.extract_strided_slice %7 {offsets = [0, 2], sizes = [128, 1], strides = [1, 1]} : vector<128x128xf32> to vector<128x1xf32>
    %14 = vector.broadcast %13 : vector<128x1xf32> to vector<128x128xf32>
    %15 = vector.broadcast %12 : vector<1x128xf32> to vector<128x128xf32>
    %16 = arith.addf %14, %15 : vector<128x128xf32>
    %cst_9 = arith.constant 2.000000e-01 : f32
    %17 = vector.broadcast %cst_9 : f32 to vector<128x128xf32>
    %18 = arith.mulf %17, %16 : vector<128x128xf32>
    %19 = arith.maximumf %16, %18 : vector<128x128xf32>
    %cst_10 = arith.constant -1.000000e+30 : f32
    %20 = vector.broadcast %cst_10 : f32 to vector<128x128xf32>
    %21 = arith.select %11, %19, %20 : vector<128x128xi1>, vector<128x128xf32>
    %cst_11 = arith.constant dense<0xFF800000> : vector<128xf32>
    %22 = vector.multi_reduction <maximumf>, %21, %cst_11 [1] : vector<128x128xf32> to vector<128xf32>
    %23 = vector.shape_cast %22 : vector<128xf32> to vector<128x1xf32>
    %24 = vector.broadcast %23 : vector<128x1xf32> to vector<128x128xf32>
    %25 = arith.subf %21, %24 : vector<128x128xf32>
    %26 = math.exp %25 : vector<128x128xf32>
    %cst_12 = arith.constant dense<0.000000e+00> : vector<128xf32>
    %27 = vector.multi_reduction <add>, %26, %cst_12 [1] : vector<128x128xf32> to vector<128xf32>
    %28 = vector.shape_cast %27 : vector<128xf32> to vector<128x1xf32>
    %29 = tpu.reciprocal %28 {approx = true} : vector<128x1xf32> -> vector<128x1xf32>
    %30 = vector.broadcast %29 : vector<128x1xf32> to vector<128x128xf32>
    %31 = arith.mulf %26, %30 : vector<128x128xf32>
    %32 = arith.truncf %31 : vector<128x128xf32> to vector<128x128xbf16>
    %33 = vector.extract_strided_slice %2 {offsets = [0, 0], sizes = [128, 128], strides = [1, 1]} : vector<128x384xf32> to vector<128x128xf32>
    %34 = arith.truncf %33 : vector<128x128xf32> to vector<128x128xbf16>
    %cst_13 = arith.constant dense<0.000000e+00> : vector<128x128xf32>
    %35 = tpu.matmul %32, %34, %cst_13 {dimension_numbers = #tpu.dot_dimension_numbers<[1], [0], [0], [1], [0, 0, 1, 1], [], []>} : vector<128x128xbf16>, vector<128x128xbf16>, vector<128x128xf32> -> vector<128x128xf32>
    %36 = vector.extract_strided_slice %4 {offsets = [1, 0], sizes = [1, 128], strides = [1, 1]} : vector<128x128xf32> to vector<1x128xf32>
    %37 = vector.extract_strided_slice %7 {offsets = [0, 3], sizes = [128, 1], strides = [1, 1]} : vector<128x128xf32> to vector<128x1xf32>
    %38 = vector.broadcast %37 : vector<128x1xf32> to vector<128x128xf32>
    %39 = vector.broadcast %36 : vector<1x128xf32> to vector<128x128xf32>
    %40 = arith.addf %38, %39 : vector<128x128xf32>
    %cst_14 = arith.constant 2.000000e-01 : f32
    %41 = vector.broadcast %cst_14 : f32 to vector<128x128xf32>
    %42 = arith.mulf %41, %40 : vector<128x128xf32>
    %43 = arith.maximumf %40, %42 : vector<128x128xf32>
    %cst_15 = arith.constant -1.000000e+30 : f32
    %44 = vector.broadcast %cst_15 : f32 to vector<128x128xf32>
    %45 = arith.select %11, %43, %44 : vector<128x128xi1>, vector<128x128xf32>
    %cst_16 = arith.constant dense<0xFF800000> : vector<128xf32>
    %46 = vector.multi_reduction <maximumf>, %45, %cst_16 [1] : vector<128x128xf32> to vector<128xf32>
    %47 = vector.shape_cast %46 : vector<128xf32> to vector<128x1xf32>
    %48 = vector.broadcast %47 : vector<128x1xf32> to vector<128x128xf32>
    %49 = arith.subf %45, %48 : vector<128x128xf32>
    %50 = math.exp %49 : vector<128x128xf32>
    %cst_17 = arith.constant dense<0.000000e+00> : vector<128xf32>
    %51 = vector.multi_reduction <add>, %50, %cst_17 [1] : vector<128x128xf32> to vector<128xf32>
    %52 = vector.shape_cast %51 : vector<128xf32> to vector<128x1xf32>
    %53 = tpu.reciprocal %52 {approx = true} : vector<128x1xf32> -> vector<128x1xf32>
    %54 = vector.broadcast %53 : vector<128x1xf32> to vector<128x128xf32>
    %55 = arith.mulf %50, %54 : vector<128x128xf32>
    %56 = arith.truncf %55 : vector<128x128xf32> to vector<128x128xbf16>
    %57 = vector.extract_strided_slice %2 {offsets = [0, 128], sizes = [128, 128], strides = [1, 1]} : vector<128x384xf32> to vector<128x128xf32>
    %58 = arith.truncf %57 : vector<128x128xf32> to vector<128x128xbf16>
    %cst_18 = arith.constant dense<0.000000e+00> : vector<128x128xf32>
    %59 = tpu.matmul %56, %58, %cst_18 {dimension_numbers = #tpu.dot_dimension_numbers<[1], [0], [0], [1], [0, 0, 1, 1], [], []>} : vector<128x128xbf16>, vector<128x128xbf16>, vector<128x128xf32> -> vector<128x128xf32>
    %60 = arith.addf %35, %59 : vector<128x128xf32>
    %cst_19 = arith.constant 5.000000e-01 : f32
    %61 = vector.broadcast %cst_19 : f32 to vector<128x128xf32>
    %62 = arith.mulf %60, %61 : vector<128x128xf32>
    %c0_20 = arith.constant 0 : index
    %c0_21 = arith.constant 0 : index
    %63 = vector.load %arg5[%c0_20, %c0_21] : memref<1x128xf32, #tpu.memory_space<vmem>>, vector<1x128xf32>
    %64 = vector.broadcast %63 : vector<1x128xf32> to vector<128x128xf32>
    %65 = arith.addf %62, %64 : vector<128x128xf32>
    %c0_22 = arith.constant 0 : index
    %c0_23 = arith.constant 0 : index
    %66 = vector.load %arg6[%c0_22, %c0_23] : memref<128x128xf32, #tpu.memory_space<vmem>>, vector<128x128xf32>
    tpu.vector_store %arg6[%c0_22, %c0_23], %65 {strides = array<i32>} : memref<128x128xf32, #tpu.memory_space<vmem>>, vector<128x128xf32>,
    return
  }
  func.func @transform_0(%arg0: i32) -> (i32, i32) {
    %c0_i32 = arith.constant 0 : i32
    %c0_i32_0 = arith.constant 0 : i32
    %c0_i32_1 = arith.constant 0 : i32
    return %c0_i32, %c0_i32_0 : i32, i32
  }
  func.func @transform_1(%arg0: i32) -> (i32, i32) {
    %c0_i32 = arith.constant 0 : i32
    %c0_i32_0 = arith.constant 0 : i32
    return %arg0, %c0_i32 : i32, i32
  }
  func.func @transform_2(%arg0: i32) -> (i32, i32) {
    %c0_i32 = arith.constant 0 : i32
    %c0_i32_0 = arith.constant 0 : i32
    return %arg0, %c0_i32 : i32, i32
  }
  func.func @transform_3(%arg0: i32) -> (i32, i32) {
    %c0_i32 = arith.constant 0 : i32
    %c0_i32_0 = arith.constant 0 : i32
    %c0_i32_1 = arith.constant 0 : i32
    return %c0_i32, %c0_i32_0 : i32, i32
  }
  func.func @transform_4(%arg0: i32) -> (i32, i32) {
    %c0_i32 = arith.constant 0 : i32
    %c0_i32_0 = arith.constant 0 : i32
    %c0_i32_1 = arith.constant 0 : i32
    return %c0_i32, %c0_i32_0 : i32, i32
  }
  func.func @transform_5(%arg0: i32) -> (i32, i32) {
    %c0_i32 = arith.constant 0 : i32
    %c0_i32_0 = arith.constant 0 : i32
    return %arg0, %c0_i32 : i32, i32
  }
}

</mosaic_0001>

<llo_original>
// kernel: gat_forward.2
$region0: #{gat_forward.2}
  #allocation0 [shape = 'u32[]', space=smem, size = 0x4, offset = 0x4, fixed_abs, tag = 'smem constant byte address 0x4 - core index']
  #allocation1 [shape = 'u32[144,128]{1,0:T(1,128)}', space=vmem, size = 0x12000, scoped, tag = 'internal scratch']
  %s0 = inlined_call_operand.vmem [shape: bf16[128,128], index: 0, kind: input, shape index: {}, may-alias: {0,1}]
  %s1 = inlined_call_operand.vmem [shape: bf16[128,128], index: 1, kind: input, shape index: {}, may-alias: {0,1}]
  %s2 = inlined_call_operand.vmem [shape: s8[128,128], index: 2, kind: input, shape index: {}]
  %s3 = inlined_call_operand.vmem [shape: bf16[128,384], index: 3, kind: input, shape index: {}]
  %s4 = inlined_call_operand.vmem [shape: f32[1,256], index: 4, kind: input, shape index: {}]
  %s5 = inlined_call_operand.vmem [shape: bf16[128,256], index: 5, kind: output, shape index: {}]
  %s6 = sld [smem:[#allocation0]]
  $region30: #{gat_forward.2} parent=0
    _
  %s8 = ssub.s32 1, %s6
  %s9 = scalar_select 0, %s8, %s6
  // Predicated region
  $region2: #{gat_forward.2} parent=0 // pred_check
    _
  $region3: #{gat_forward.2} parent=0 // pred_check_branch
    %11 = sbr.rel (0) target = $region5
  $region4: #{gat_forward.2} parent=0 // pred_region
    _
  $region5: #{gat_forward.2} parent=0 // pred_fallthru
    _
  // Predicated region
  $region6: #{gat_forward.2} parent=0 // pred_check
    _
  $region7: #{gat_forward.2} parent=0 // pred_check_branch
    %13 = sbr.rel (0) target = $region9
  $region8: #{gat_forward.2} parent=0 // pred_region
    _
  $region9: #{gat_forward.2} parent=0 // pred_fallthru
    _
  // Predicated region
  $region10: #{gat_forward.2} parent=0 // pred_check
    _
  $region11: #{gat_forward.2} parent=0 // pred_check_branch
    %15 = sbr.rel (0) target = $region13
  $region12: #{gat_forward.2} parent=0 // pred_region
    _
  $region13: #{gat_forward.2} parent=0 // pred_fallthru
    _
  // Predicated region
  $region14: #{gat_forward.2} parent=0 // pred_check
    _
  $region15: #{gat_forward.2} parent=0 // pred_check_branch
    %17 = sbr.rel (0) target = $region17
  $region16: #{gat_forward.2} parent=0 // pred_region
    _
  $region17: #{gat_forward.2} parent=0 // pred_fallthru
    _
  // Predicated region
  $region18: #{gat_forward.2} parent=0 // pred_check
    _
  $region19: #{gat_forward.2} parent=0 // pred_check_branch
    %19 = sbr.rel (0) target = $region21
  $region20: #{gat_forward.2} parent=0 // pred_region
    _
  $region21: #{gat_forward.2} parent=0 // pred_fallthru
    _
  %v21 = vld [vmem:[%s3] sm:$0xff]
  %v22 = vld [vmem:[%s3 + $0x8] sm:$0xf]
  %v23 = vld [vmem:[%s3 + $0xc] sm:$0xff]
  %v24 = vld [vmem:[%s3 + $0x14] sm:$0xf]
  %v25 = vld [vmem:[%s3 + $0x18] sm:$0xff]
  %v26 = vld [vmem:[%s3 + $0x20] sm:$0xf]
  %v27 = vld [vmem:[%s3 + $0x24] sm:$0xff]
  %v28 = vld [vmem:[%s3 + $0x2c] sm:$0xf]
  %v29 = vld [vmem:[%s3 + $0x30] sm:$0xff]
  %v30 = vld [vmem:[%s3 + $0x38] sm:$0xf]
  %v31 = vld [vmem:[%s3 + $0x3c] sm:$0xff]
  %v32 = vld [vmem:[%s3 + $0x44] sm:$0xf]
  %v33 = vld [vmem:[%s3 + $0x48] sm:$0xff]
  %v34 = vld [vmem:[%s3 + $0x50] sm:$0xf]
  %v35 = vld [vmem:[%s3 + $0x54] sm:$0xff]
  %v36 = vld [vmem:[%s3 + $0x5c] sm:$0xf]
  %v37 = vld [vmem:[%s3 + $0x60] sm:$0xff]
  %v38 = vld [vmem:[%s3 + $0x68] sm:$0xf]
  %v39 = vld [vmem:[%s3 + $0x6c] sm:$0xff]
  %v40 = vld [vmem:[%s3 + $0x74] sm:$0xf]
  %v41 = vld [vmem:[%s3 + $0x78] sm:$0xff]
  %v42 = vld [vmem:[%s3 + $0x80] sm:$0xf]
  %v43 = vld [vmem:[%s3 + $0x84] sm:$0xff]
  %v44 = vld [vmem:[%s3 + $0x8c] sm:$0xf]
  %v45 = vld [vmem:[%s3 + $0x90] sm:$0xff]
  %v46 = vld [vmem:[%s3 + $0x98] sm:$0xf]
  %v47 = vld [vmem:[%s3 + $0x9c] sm:$0xff]
  %v48 = vld [vmem:[%s3 + $0xa4] sm:$0xf]
  %v49 = vld [vmem:[%s3 + $0xa8] sm:$0xff]
  %v50 = vld [vmem:[%s3 + $0xb0] sm:$0xf]
  %v51 = vld [vmem:[%s3 + $0xb4] sm:$0xff]
  %v52 = vld [vmem:[%s3 + $0xbc] sm:$0xf]
  %v53 = vld [vmem:[%s0] sm:$0xf]
  %v54 = vld [vmem:[%s0 + $0x4] sm:$0xf]
  %v55 = vld [vmem:[%s0 + $0x8] sm:$0xf]
  %v56 = vld [vmem:[%s0 + $0xc] sm:$0xf]
  %v57 = vld [vmem:[%s0 + $0x10] sm:$0xf]
  %v58 = vld [vmem:[%s0 + $0x14] sm:$0xf]
  %v59 = vld [vmem:[%s0 + $0x18] sm:$0xf]
  %v60 = vld [vmem:[%s0 + $0x1c] sm:$0xf]
  %v61 = vld [vmem:[%s0 + $0x20] sm:$0xf]
  %v62 = vld [vmem:[%s0 + $0x24] sm:$0xf]
  %v63 = vld [vmem:[%s0 + $0x28] sm:$0xf]
  %v64 = vld [vmem:[%s0 + $0x2c] sm:$0xf]
  %v65 = vld [vmem:[%s0 + $0x30] sm:$0xf]
  %v66 = vld [vmem:[%s0 + $0x34] sm:$0xf]
  %v67 = vld [vmem:[%s0 + $0x38] sm:$0xf]
  %v68 = vld [vmem:[%s0 + $0x3c] sm:$0xf]
  %v85 = vunpack.c.l.b16 %v53
  %v86 = vunpack.c.l.b16 %v54
  %v87 = vunpack.c.l.b16 %v55
  %v88 = vunpack.c.l.b16 %v56
  %v89 = vunpack.c.l.b16 %v57
  %v90 = vunpack.c.l.b16 %v58
  %v91 = vunpack.c.l.b16 %v59
  %v92 = vunpack.c.l.b16 %v60
  %v93 = vunpack.c.l.b16 %v61
  %v94 = vunpack.c.l.b16 %v62
  %v95 = vunpack.c.l.b16 %v63
  %v96 = vunpack.c.l.b16 %v64
  %v97 = vunpack.c.l.b16 %v65
  %v98 = vunpack.c.l.b16 %v66
  %v99 = vunpack.c.l.b16 %v67
  %v100 = vunpack.c.l.b16 %v68
  %v101 = vpack.c.b16 %v86, %v85
  %v102 = vpack.c.b16 %v88, %v87
  %v103 = vpack.c.b16 %v90, %v89
  %v104 = vpack.c.b16 %v92, %v91
  %v105 = vpack.c.b16 %v94, %v93
  %v106 = vpack.c.b16 %v96, %v95
  %v107 = vpack.c.b16 %v98, %v97
  %v108 = vpack.c.b16 %v100, %v99
  %v149 = vunpack.c.l.b16 %v21
  %v150 = vunpack.c.h.b16 %v21
  %v151 = vunpack.c.l.b16 %v22
  %v152 = vunpack.c.l.b16 %v23
  %v153 = vunpack.c.h.b16 %v23
  %v154 = vunpack.c.l.b16 %v24
  %v155 = vunpack.c.l.b16 %v25
  %v156 = vunpack.c.h.b16 %v25
  %v157 = vunpack.c.l.b16 %v26
  %v158 = vunpack.c.l.b16 %v27
  %v159 = vunpack.c.h.b16 %v27
  %v160 = vunpack.c.l.b16 %v28
  %v161 = vunpack.c.l.b16 %v29
  %v162 = vunpack.c.h.b16 %v29
  %v163 = vunpack.c.l.b16 %v30
  %v164 = vunpack.c.l.b16 %v31
  %v165 = vunpack.c.h.b16 %v31
  %v166 = vunpack.c.l.b16 %v32
  %v167 = vunpack.c.l.b16 %v33
  %v168 = vunpack.c.h.b16 %v33
  %v169 = vunpack.c.l.b16 %v34
  %v170 = vunpack.c.l.b16 %v35
  %v171 = vunpack.c.h.b16 %v35
  %v172 = vunpack.c.l.b16 %v36
  %v173 = vunpack.c.l.b16 %v37
  %v174 = vunpack.c.h.b16 %v37
  %v175 = vunpack.c.l.b16 %v38
  %v176 = vunpack.c.l.b16 %v39
  %v177 = vunpack.c.h.b16 %v39
  %v178 = vunpack.c.l.b16 %v40
  %v179 = vunpack.c.l.b16 %v41
  %v180 = vunpack.c.h.b16 %v41
  %v181 = vunpack.c.l.b16 %v42
  %v182 = vunpack.c.l.b16 %v43
  %v183 = vunpack.c.h.b16 %v43
  %v184 = vunpack.c.l.b16 %v44
  %v185 = vunpack.c.l.b16 %v45
  %v186 = vunpack.c.h.b16 %v45
  %v187 = vunpack.c.l.b16 %v46
  %v188 = vunpack.c.l.b16 %v47
  %v189 = vunpack.c.h.b16 %v47
  %v190 = vunpack.c.l.b16 %v48
  %v191 = vunpack.c.l.b16 %v49
  %v192 = vunpack.c.h.b16 %v49
  %v193 = vunpack.c.l.b16 %v50
  %v194 = vunpack.c.l.b16 %v51
  %v195 = vunpack.c.h.b16 %v51
  %v196 = vunpack.c.l.b16 %v52
  %v197 = vpack.c.b16 %v152, %v149
  %v198 = vpack.c.b16 %v153, %v150
  %v199 = vpack.c.b16 %v154, %v151
  %v200 = vpack.c.b16 %v158, %v155
  %v201 = vpack.c.b16 %v159, %v156
  %v202 = vpack.c.b16 %v160, %v157
  %v203 = vpack.c.b16 %v164, %v161
  %v204 = vpack.c.b16 %v165, %v162
  %v205 = vpack.c.b16 %v166, %v163
  %v206 = vpack.c.b16 %v170, %v167
  %v207 = vpack.c.b16 %v171, %v168
  %v208 = vpack.c.b16 %v172, %v169
  %v209 = vpack.c.b16 %v176, %v173
  %v210 = vpack.c.b16 %v177, %v174
  %v211 = vpack.c.b16 %v178, %v175
  %v212 = vpack.c.b16 %v182, %v179
  %v213 = vpack.c.b16 %v183, %v180
  %v214 = vpack.c.b16 %v184, %v181
  %v215 = vpack.c.b16 %v188, %v185
  %v216 = vpack.c.b16 %v189, %v186
  %v217 = vpack.c.b16 %v190, %v187
  %v218 = vpack.c.b16 %v194, %v191
  %v219 = vpack.c.b16 %v195, %v192
  %v220 = vpack.c.b16 %v196, %v193
  %245 = vmatprep.subr.bf16.mxu0 %v198
  %246 = vmatpush1.bf16.msra.mxu0 %v197
  %247 = vmatprep.subr.bf16.mxu0 %v201
  %248 = vmatpush1.bf16.msra.mxu0 %v200
  %249 = vmatprep.subr.bf16.mxu0 %v204
  %250 = vmatpush1.bf16.msra.mxu0 %v203
  %251 = vmatprep.subr.bf16.mxu0 %v207
  %252 = vmatpush1.bf16.msra.mxu0 %v206
  %253 = vmatprep.subr.bf16.mxu0 %v210
  %254 = vmatpush1.bf16.msra.mxu0 %v209
  %255 = vmatprep.subr.bf16.mxu0 %v213
  %256 = vmatpush1.bf16.msra.mxu0 %v212
  %257 = vmatprep.subr.bf16.mxu0 %v216
  %258 = vmatpush1.bf16.msra.mxu0 %v215
  %259 = vmatprep.subr.bf16.mxu0 %v219
  %260 = vmatpush1.bf16.msra.mxu0 %v218
  %261 = vmatprep.subr.bf16.mxu0 0
  %262 = vmatpush1.bf16.msra.mxu0 0
  %263 = vmatprep.subr.bf16.mxu0 0
  %264 = vmatpush1.bf16.msra.mxu0 0
  %265 = vmatprep.subr.bf16.mxu0 0
  %266 = vmatpush1.bf16.msra.mxu0 0
  %267 = vmatprep.subr.bf16.mxu0 0
  %268 = vmatpush1.bf16.msra.mxu0 0
  %269 = vmatprep.subr.bf16.mxu0 0
  %270 = vmatpush1.bf16.msra.mxu0 0
  %271 = vmatprep.subr.bf16.mxu0 0
  %272 = vmatpush1.bf16.msra.mxu0 0
  %273 = vmatprep.subr.bf16.mxu0 0
  %274 = vmatpush1.bf16.msra.mxu0 0
  %275 = vmatprep.subr.bf16.mxu0 0
  %276 = vmatpush1.bf16.msra.mxu0 0
  %277 = vmatprep.mubr.bf16.mxu0 0
  %278 = vmatmul.mubr.bf16.gmra.mrb[0].mxu0 %v101
  %v279 = vpop.f32.mrb[0].mxu0
  %v280 = vadd.f32 0.0, %v279
  %v281 = vpop.f32.mrb[0].mxu0
  %v282 = vadd.f32 0.0, %v281
  %v283 = vpop.f32.mrb[0].mxu0
  %v284 = vadd.f32 0.0, %v283
  %v285 = vpop.f32.mrb[0].mxu0
  %v286 = vadd.f32 0.0, %v285
  %287 = vmatprep.mubr.bf16.mxu0 0
  %288 = vmatmul.mubr.bf16.gmra.mrb[0].mxu0 %v102
  %v289 = vpop.f32.mrb[0].mxu0
  %v290 = vadd.f32 0.0, %v289
  %v291 = vpop.f32.mrb[0].mxu0
  %v292 = vadd.f32 0.0, %v291
  %v293 = vpop.f32.mrb[0].mxu0
  %v294 = vadd.f32 0.0, %v293
  %v295 = vpop.f32.mrb[0].mxu0
  %v296 = vadd.f32 0.0, %v295
  %297 = vmatprep.mubr.bf16.mxu0 0
  %298 = vmatmul.mubr.bf16.gmra.mrb[0].mxu0 %v103
  %v299 = vpop.f32.mrb[0].mxu0
  %v300 = vadd.f32 0.0, %v299
  %v301 = vpop.f32.mrb[0].mxu0
  %v302 = vadd.f32 0.0, %v301
  %v303 = vpop.f32.mrb[0].mxu0
  %v304 = vadd.f32 0.0, %v303
  %v305 = vpop.f32.mrb[0].mxu0
  %v306 = vadd.f32 0.0, %v305
  %307 = vmatprep.mubr.bf16.mxu0 0
  %308 = vmatmul.mubr.bf16.gmra.mrb[0].mxu0 %v104
  %v309 = vpop.f32.mrb[0].mxu0
  %v310 = vadd.f32 0.0, %v309
  %v311 = vpop.f32.mrb[0].mxu0
  %v312 = vadd.f32 0.0, %v311
  %v313 = vpop.f32.mrb[0].mxu0
  %v314 = vadd.f32 0.0, %v313
  %v315 = vpop.f32.mrb[0].mxu0
  %v316 = vadd.f32 0.0, %v315
  %317 = vmatprep.mubr.bf16.mxu0 0
  %318 = vmatmul.mubr.bf16.gmra.mrb[0].mxu0 %v105
  %v319 = vpop.f32.mrb[0].mxu0
  %v320 = vadd.f32 0.0, %v319
  %v321 = vpop.f32.mrb[0].mxu0
  %v322 = vadd.f32 0.0, %v321
  %v323 = vpop.f32.mrb[0].mxu0
  %v324 = vadd.f32 0.0, %v323
  %v325 = vpop.f32.mrb[0].mxu0
  %v326 = vadd.f32 0.0, %v325
  %327 = vmatprep.mubr.bf16.mxu0 0
  %328 = vmatmul.mubr.bf16.gmra.mrb[0].mxu0 %v106
  %v329 = vpop.f32.mrb[0].mxu0
  %v330 = vadd.f32 0.0, %v329
  %v331 = vpop.f32.mrb[0].mxu0
  %v332 = vadd.f32 0.0, %v331
  %v333 = vpop.f32.mrb[0].mxu0
  %v334 = vadd.f32 0.0, %v333
  %v335 = vpop.f32.mrb[0].mxu0
  %v336 = vadd.f32 0.0, %v335
  %337 = vmatprep.mubr.bf16.mxu0 0
  %338 = vmatmul.mubr.bf16.gmra.mrb[0].mxu0 %v107
  %v339 = vpop.f32.mrb[0].mxu0
  %v340 = vadd.f32 0.0, %v339
  %v341 = vpop.f32.mrb[0].mxu0
  %v342 = vadd.f32 0.0, %v341
  %v343 = vpop.f32.mrb[0].mxu0
  %v344 = vadd.f32 0.0, %v343
  %v345 = vpop.f32.mrb[0].mxu0
  %v346 = vadd.f32 0.0, %v345
  %347 = vmatprep.mubr.bf16.mxu0 0
  %348 = vmatmul.mubr.bf16.gmra.mrb[0].mxu0 %v108
  %v349 = vpop.f32.mrb[0].mxu0
  %v350 = vadd.f32 0.0, %v349
  %v351 = vpop.f32.mrb[0].mxu0
  %v352 = vadd.f32 0.0, %v351
  %v353 = vpop.f32.mrb[0].mxu0
  %v354 = vadd.f32 0.0, %v353
  %v355 = vpop.f32.mrb[0].mxu0
  %v356 = vadd.f32 0.0, %v355
  %357 = vdwg.mxu0
  %358 = vmatprep.subr.bf16.mxu0 0
  %359 = vmatpush1.bf16.msra.mxu0 %v199
  %360 = vmatprep.subr.bf16.mxu0 0
  %361 = vmatpush1.bf16.msra.mxu0 %v202
  %362 = vmatprep.subr.bf16.mxu0 0
  %363 = vmatpush1.bf16.msra.mxu0 %v205
  %364 = vmatprep.subr.bf16.mxu0 0
  %365 = vmatpush1.bf16.msra.mxu0 %v208
  %366 = vmatprep.subr.bf16.mxu0 0
  %367 = vmatpush1.bf16.msra.mxu0 %v211
  %368 = vmatprep.subr.bf16.mxu0 0
  %369 = vmatpush1.bf16.msra.mxu0 %v214
  %370 = vmatprep.subr.bf16.mxu0 0
  %371 = vmatpush1.bf16.msra.mxu0 %v217
  %372 = vmatprep.subr.bf16.mxu0 0
  %373 = vmatpush1.bf16.msra.mxu0 %v220
  %374 = vmatprep.subr.bf16.mxu0 0
  %375 = vmatpush1.bf16.msra.mxu0 0
  %376 = vmatprep.subr.bf16.mxu0 0
  %377 = vmatpush1.bf16.msra.mxu0 0
  %378 = vmatprep.subr.bf16.mxu0 0
  %379 = vmatpush1.bf16.msra.mxu0 0
  %380 = vmatprep.subr.bf16.mxu0 0
  %381 = vmatpush1.bf16.msra.mxu0 0
  %382 = vmatprep.subr.bf16.mxu0 0
  %383 = vmatpush1.bf16.msra.mxu0 0
  %384 = vmatprep.subr.bf16.mxu0 0
  %385 = vmatpush1.bf16.msra.mxu0 0
  %386 = vmatprep.subr.bf16.mxu0 0
  %387 = vmatpush1.bf16.msra.mxu0 0
  %388 = vmatprep.subr.bf16.mxu0 0
  %389 = vmatpush1.bf16.msra.mxu0 0
  %390 = vmatprep.mubr.bf16.mxu0 0
  %391 = vmatmul.mubr.bf16.gmra.mrb[0].mxu0 %v101
  %v392 = vpop.f32.mrb[0].mxu0
  %v393 = vadd.f32 0.0, %v392
  %v394 = vpop.f32.mrb[0].mxu0
  %v395 = vpop.f32.mrb[0].mxu0
  %v396 = vadd.f32 0.0, %v395
  %v397 = vpop.f32.mrb[0].mxu0
  %398 = vmatprep.mubr.bf16.mxu0 0
  %399 = vmatmul.mubr.bf16.gmra.mrb[0].mxu0 %v102
  %v400 = vpop.f32.mrb[0].mxu0
  %v401 = vadd.f32 0.0, %v400
  %v402 = vpop.f32.mrb[0].mxu0
  %v403 = vpop.f32.mrb[0].mxu0
  %v404 = vadd.f32 0.0, %v403
  %v405 = vpop.f32.mrb[0].mxu0
  %406 = vmatprep.mubr.bf16.mxu0 0
  %407 = vmatmul.mubr.bf16.gmra.mrb[0].mxu0 %v103
  %v408 = vpop.f32.mrb[0].mxu0
  %v409 = vadd.f32 0.0, %v408
  %v410 = vpop.f32.mrb[0].mxu0
  %v411 = vpop.f32.mrb[0].mxu0
  %v412 = vadd.f32 0.0, %v411
  %v413 = vpop.f32.mrb[0].mxu0
  %414 = vmatprep.mubr.bf16.mxu0 0
  %415 = vmatmul.mubr.bf16.gmra.mrb[0].mxu0 %v104
  %v416 = vpop.f32.mrb[0].mxu0
  %v417 = vadd.f32 0.0, %v416
  %v418 = vpop.f32.mrb[0].mxu0
  %v419 = vpop.f32.mrb[0].mxu0
  %v420 = vadd.f32 0.0, %v419
  %v421 = vpop.f32.mrb[0].mxu0
  %422 = vmatprep.mubr.bf16.mxu0 0
  %423 = vmatmul.mubr.bf16.gmra.mrb[0].mxu0 %v105
  %v424 = vpop.f32.mrb[0].mxu0
  %v425 = vadd.f32 0.0, %v424
  %v426 = vpop.f32.mrb[0].mxu0
  %v427 = vpop.f32.mrb[0].mxu0
  %v428 = vadd.f32 0.0, %v427
  %v429 = vpop.f32.mrb[0].mxu0
  %430 = vmatprep.mubr.bf16.mxu0 0
  %431 = vmatmul.mubr.bf16.gmra.mrb[0].mxu0 %v106
  %v432 = vpop.f32.mrb[0].mxu0
  %v433 = vadd.f32 0.0, %v432
  %v434 = vpop.f32.mrb[0].mxu0
  %v435 = vpop.f32.mrb[0].mxu0
  %v436 = vadd.f32 0.0, %v435
  %v437 = vpop.f32.mrb[0].mxu0
  %438 = vmatprep.mubr.bf16.mxu0 0
  %439 = vmatmul.mubr.bf16.gmra.mrb[0].mxu0 %v107
  %v440 = vpop.f32.mrb[0].mxu0
  %v441 = vadd.f32 0.0, %v440
  %v442 = vpop.f32.mrb[0].mxu0
  %v443 = vpop.f32.mrb[0].mxu0
  %v444 = vadd.f32 0.0, %v443
  %v445 = vpop.f32.mrb[0].mxu0
  %446 = vmatprep.mubr.bf16.mxu0 0
  %447 = vmatmul.mubr.bf16.gmra.mrb[0].mxu0 %v108
  %v448 = vpop.f32.mrb[0].mxu0
  %v449 = vadd.f32 0.0, %v448
  %v450 = vpop.f32.mrb[0].mxu0
  %v451 = vpop.f32.mrb[0].mxu0
  %v452 = vadd.f32 0.0, %v451
  %v453 = vpop.f32.mrb[0].mxu0
  %454 = vdwg.mxu0
  %455 = vxpose.xlu0.b32.start [1/16] %v393, 128
  %456 = vxpose.xlu0.b32.cont [2/16] %v396, 128
  %457 = vxpose.xlu0.b32.cont [3/16] %v401, 128
  %458 = vxpose.xlu0.b32.cont [4/16] %v404, 128
  %459 = vxpose.xlu0.b32.cont [5/16] %v409, 128
  %460 = vxpose.xlu0.b32.cont [6/16] %v412, 128
  %461 = vxpose.xlu0.b32.cont [7/16] %v417, 128
  %462 = vxpose.xlu0.b32.cont [8/16] %v420, 128
  %463 = vxpose.xlu0.b32.cont [9/16] %v425, 128
  %464 = vxpose.xlu0.b32.cont [10/16] %v428, 128
  %465 = vxpose.xlu0.b32.cont [11/16] %v433, 128
  %466 = vxpose.xlu0.b32.cont [12/16] %v436, 128
  %467 = vxpose.xlu0.b32.cont [13/16] %v441, 128
  %468 = vxpose.xlu0.b32.cont [14/16] %v444, 128
  %469 = vxpose.xlu0.b32.cont [15/16] %v449, 128
  %470 = vxpose.xlu0.b32.end [16/16] %v452, 128
  %v471 = vpop.trf.xlu0
  %v472 = vpop.trf.xlu0
  %v473 = vpop.trf.xlu0
  %v474 = vpop.trf.xlu0
  %v475 = vpop.trf.xlu0
  %v476 = vpop.trf.xlu0
  %v477 = vpop.trf.xlu0
  %v478 = vpop.trf.xlu0
  %v479 = vpop.trf.xlu0
  %v480 = vpop.trf.xlu0
  %v481 = vpop.trf.xlu0
  %v482 = vpop.trf.xlu0
  %v483 = vpop.trf.xlu0
  %v484 = vpop.trf.xlu0
  %v485 = vpop.trf.xlu0
  %v486 = vpop.trf.xlu0
  %v487 = vld [vmem:[%s1] sm:$0xf]
  %v488 = vld [vmem:[%s1 + $0x4] sm:$0xf]
  %v489 = vld [vmem:[%s1 + $0x8] sm:$0xf]
  %v490 = vld [vmem:[%s1 + $0xc] sm:$0xf]
  %v491 = vld [vmem:[%s1 + $0x10] sm:$0xf]
  %v492 = vld [vmem:[%s1 + $0x14] sm:$0xf]
  %v493 = vld [vmem:[%s1 + $0x18] sm:$0xf]
  %v494 = vld [vmem:[%s1 + $0x1c] sm:$0xf]
  %v495 = vld [vmem:[%s1 + $0x20] sm:$0xf]
  %v496 = vld [vmem:[%s1 + $0x24] sm:$0xf]
  %v497 = vld [vmem:[%s1 + $0x28] sm:$0xf]
  %v498 = vld [vmem:[%s1 + $0x2c] sm:$0xf]
  %v499 = vld [vmem:[%s1 + $0x30] sm:$0xf]
  %v500 = vld [vmem:[%s1 + $0x34] sm:$0xf]
  %v501 = vld [vmem:[%s1 + $0x38] sm:$0xf]
  %v502 = vld [vmem:[%s1 + $0x3c] sm:$0xf]
  %v519 = vunpack.c.l.b16 %v487
  %v520 = vunpack.c.l.b16 %v488
  %v521 = vunpack.c.l.b16 %v489
  %v522 = vunpack.c.l.b16 %v490
  %v523 = vunpack.c.l.b16 %v491
  %v524 = vunpack.c.l.b16 %v492
  %v525 = vunpack.c.l.b16 %v493
  %v526 = vunpack.c.l.b16 %v494
  %v527 = vunpack.c.l.b16 %v495
  %v528 = vunpack.c.l.b16 %v496
  %v529 = vunpack.c.l.b16 %v497
  %v530 = vunpack.c.l.b16 %v498
  %v531 = vunpack.c.l.b16 %v499
  %v532 = vunpack.c.l.b16 %v500
  %v533 = vunpack.c.l.b16 %v501
  %v534 = vunpack.c.l.b16 %v502
  %v535 = vpack.c.b16 %v520, %v519
  %v536 = vpack.c.b16 %v522, %v521
  %v537 = vpack.c.b16 %v524, %v523
  %v538 = vpack.c.b16 %v526, %v525
  %v539 = vpack.c.b16 %v528, %v527
  %v540 = vpack.c.b16 %v530, %v529
  %v541 = vpack.c.b16 %v532, %v531
  %v542 = vpack.c.b16 %v534, %v533
  %551 = vmatprep.subr.bf16.mxu0 0
  %552 = vmatpush1.bf16.msra.mxu0 %v199
  %553 = vmatprep.subr.bf16.mxu0 0
  %554 = vmatpush1.bf16.msra.mxu0 %v202
  %555 = vmatprep.subr.bf16.mxu0 0
  %556 = vmatpush1.bf16.msra.mxu0 %v205
  %557 = vmatprep.subr.bf16.mxu0 0
  %558 = vmatpush1.bf16.msra.mxu0 %v208
  %559 = vmatprep.subr.bf16.mxu0 0
  %560 = vmatpush1.bf16.msra.mxu0 %v211
  %561 = vmatprep.subr.bf16.mxu0 0
  %562 = vmatpush1.bf16.msra.mxu0 %v214
  %563 = vmatprep.subr.bf16.mxu0 0
  %564 = vmatpush1.bf16.msra.mxu0 %v217
  %565 = vmatprep.subr.bf16.mxu0 0
  %566 = vmatpush1.bf16.msra.mxu0 %v220
  %567 = vmatprep.subr.bf16.mxu0 0
  %568 = vmatpush1.bf16.msra.mxu0 0
  %569 = vmatprep.subr.bf16.mxu0 0
  %570 = vmatpush1.bf16.msra.mxu0 0
  %571 = vmatprep.subr.bf16.mxu0 0
  %572 = vmatpush1.bf16.msra.mxu0 0
  %573 = vmatprep.subr.bf16.mxu0 0
  %574 = vmatpush1.bf16.msra.mxu0 0
  %575 = vmatprep.subr.bf16.mxu0 0
  %576 = vmatpush1.bf16.msra.mxu0 0
  %577 = vmatprep.subr.bf16.mxu0 0
  %578 = vmatpush1.bf16.msra.mxu0 0
  %579 = vmatprep.subr.bf16.mxu0 0
  %580 = vmatpush1.bf16.msra.mxu0 0
  %581 = vmatprep.subr.bf16.mxu0 0
  %582 = vmatpush1.bf16.msra.mxu0 0
  %583 = vmatprep.mubr.bf16.mxu0 0
  %584 = vmatmul.mubr.bf16.gmra.mrb[0].mxu0 %v535
  %v585 = vpop.f32.mrb[0].mxu0
  %v586 = vadd.f32 0.0, %v585
  %v587 = vpop.f32.mrb[0].mxu0
  %v588 = vpop.f32.mrb[0].mxu0
  %v589 = vadd.f32 0.0, %v588
  %v590 = vpop.f32.mrb[0].mxu0
  %591 = vmatprep.mubr.bf16.mxu0 0
  %592 = vmatmul.mubr.bf16.gmra.mrb[0].mxu0 %v536
  %v593 = vpop.f32.mrb[0].mxu0
  %v594 = vadd.f32 0.0, %v593
  %v595 = vpop.f32.mrb[0].mxu0
  %v596 = vpop.f32.mrb[0].mxu0
  %v597 = vadd.f32 0.0, %v596
  %v598 = vpop.f32.mrb[0].mxu0
  %599 = vmatprep.mubr.bf16.mxu0 0
  %600 = vmatmul.mubr.bf16.gmra.mrb[0].mxu0 %v537
  %v601 = vpop.f32.mrb[0].mxu0
  %v602 = vadd.f32 0.0, %v601
  %v603 = vpop.f32.mrb[0].mxu0
  %v604 = vpop.f32.mrb[0].mxu0
  %v605 = vadd.f32 0.0, %v604
  %v606 = vpop.f32.mrb[0].mxu0
  %607 = vmatprep.mubr.bf16.mxu0 0
  %608 = vmatmul.mubr.bf16.gmra.mrb[0].mxu0 %v538
  %v609 = vpop.f32.mrb[0].mxu0
  %v610 = vadd.f32 0.0, %v609
  %v611 = vpop.f32.mrb[0].mxu0
  %v612 = vpop.f32.mrb[0].mxu0
  %v613 = vadd.f32 0.0, %v612
  %v614 = vpop.f32.mrb[0].mxu0
  %615 = vmatprep.mubr.bf16.mxu0 0
  %616 = vmatmul.mubr.bf16.gmra.mrb[0].mxu0 %v539
  %v617 = vpop.f32.mrb[0].mxu0
  %v618 = vadd.f32 0.0, %v617
  %v619 = vpop.f32.mrb[0].mxu0
  %v620 = vpop.f32.mrb[0].mxu0
  %v621 = vadd.f32 0.0, %v620
  %v622 = vpop.f32.mrb[0].mxu0
  %623 = vmatprep.mubr.bf16.mxu0 0
  %624 = vmatmul.mubr.bf16.gmra.mrb[0].mxu0 %v540
  %v625 = vpop.f32.mrb[0].mxu0
  %v626 = vadd.f32 0.0, %v625
  %v627 = vpop.f32.mrb[0].mxu0
  %v628 = vpop.f32.mrb[0].mxu0
  %v629 = vadd.f32 0.0, %v628
  %v630 = vpop.f32.mrb[0].mxu0
  %631 = vmatprep.mubr.bf16.mxu0 0
  %632 = vmatmul.mubr.bf16.gmra.mrb[0].mxu0 %v541
  %v633 = vpop.f32.mrb[0].mxu0
  %v634 = vadd.f32 0.0, %v633
  %v635 = vpop.f32.mrb[0].mxu0
  %v636 = vpop.f32.mrb[0].mxu0
  %v637 = vadd.f32 0.0, %v636
  %v638 = vpop.f32.mrb[0].mxu0
  %639 = vmatprep.mubr.bf16.mxu0 0
  %640 = vmatmul.mubr.bf16.gmra.mrb[0].mxu0 %v542
  %v641 = vpop.f32.mrb[0].mxu0
  %v642 = vadd.f32 0.0, %v641
  %v643 = vpop.f32.mrb[0].mxu0
  %v644 = vpop.f32.mrb[0].mxu0
  %v645 = vadd.f32 0.0, %v644
  %v646 = vpop.f32.mrb[0].mxu0
  %647 = vdwg.mxu0
  %v648 = vld [vmem:[%s2] sm:$0x3]
  %v649 = vld [vmem:[%s2 + $0x2] sm:$0x3]
  %v650 = vld [vmem:[%s2 + $0x4] sm:$0x3]
  %v651 = vld [vmem:[%s2 + $0x6] sm:$0x3]
  %v652 = vld [vmem:[%s2 + $0x8] sm:$0x3]
  %v653 = vld [vmem:[%s2 + $0xa] sm:$0x3]
  %v654 = vld [vmem:[%s2 + $0xc] sm:$0x3]
  %v655 = vld [vmem:[%s2 + $0xe] sm:$0x3]
  %v656 = vld [vmem:[%s2 + $0x10] sm:$0x3]
  %v657 = vld [vmem:[%s2 + $0x12] sm:$0x3]
  %v658 = vld [vmem:[%s2 + $0x14] sm:$0x3]
  %v659 = vld [vmem:[%s2 + $0x16] sm:$0x3]
  %v660 = vld [vmem:[%s2 + $0x18] sm:$0x3]
  %v661 = vld [vmem:[%s2 + $0x1a] sm:$0x3]
  %v662 = vld [vmem:[%s2 + $0x1c] sm:$0x3]
  %v663 = vld [vmem:[%s2 + $0x1e] sm:$0x3]
  %v664 = vunpack.c.0.s8 %v648
  %v665 = vunpack.c.0.s8 %v649
  %v666 = vunpack.c.0.s8 %v650
  %v667 = vunpack.c.0.s8 %v651
  %v668 = vunpack.c.0.s8 %v652
  %v669 = vunpack.c.0.s8 %v653
  %v670 = vunpack.c.0.s8 %v654
  %v671 = vunpack.c.0.s8 %v655
  %v672 = vunpack.c.0.s8 %v656
  %v673 = vunpack.c.0.s8 %v657
  %v674 = vunpack.c.0.s8 %v658
  %v675 = vunpack.c.0.s8 %v659
  %v676 = vunpack.c.0.s8 %v660
  %v677 = vunpack.c.0.s8 %v661
  %v678 = vunpack.c.0.s8 %v662
  %v679 = vunpack.c.0.s8 %v663
  %v680 = vcvt.s32.f32 %v664
  %v681 = vcvt.s32.f32 %v665
  %v682 = vcvt.s32.f32 %v666
  %v683 = vcvt.s32.f32 %v667
  %v684 = vcvt.s32.f32 %v668
  %v685 = vcvt.s32.f32 %v669
  %v686 = vcvt.s32.f32 %v670
  %v687 = vcvt.s32.f32 %v671
  %v688 = vcvt.s32.f32 %v672
  %v689 = vcvt.s32.f32 %v673
  %v690 = vcvt.s32.f32 %v674
  %v691 = vcvt.s32.f32 %v675
  %v692 = vcvt.s32.f32 %v676
  %v693 = vcvt.s32.f32 %v677
  %v694 = vcvt.s32.f32 %v678
  %v695 = vcvt.s32.f32 %v679
  %vm696 = vcmp.gt.f32.partialorder %v680, 0.0
  %vm697 = vcmp.gt.f32.partialorder %v681, 0.0
  %vm698 = vcmp.gt.f32.partialorder %v682, 0.0
  %vm699 = vcmp.gt.f32.partialorder %v683, 0.0
  %vm700 = vcmp.gt.f32.partialorder %v684, 0.0
  %vm701 = vcmp.gt.f32.partialorder %v685, 0.0
  %vm702 = vcmp.gt.f32.partialorder %v686, 0.0
  %vm703 = vcmp.gt.f32.partialorder %v687, 0.0
  %vm704 = vcmp.gt.f32.partialorder %v688, 0.0
  %vm705 = vcmp.gt.f32.partialorder %v689, 0.0
  %vm706 = vcmp.gt.f32.partialorder %v690, 0.0
  %vm707 = vcmp.gt.f32.partialorder %v691, 0.0
  %vm708 = vcmp.gt.f32.partialorder %v692, 0.0
  %vm709 = vcmp.gt.f32.partialorder %v693, 0.0
  %vm710 = vcmp.gt.f32.partialorder %v694, 0.0
  %vm711 = vcmp.gt.f32.partialorder %v695, 0.0
  %713 = vset.pattern.permute.xlu0 2
  %714 = vperm.xlu0 %713, %v586
  %v715 = vpop.permute.xlu0 %714
  %718 = vset.pattern.permute.xlu0 2
  %719 = vperm.xlu0 %718, %v589
  %v720 = vpop.permute.xlu0 %719
  %723 = vset.pattern.permute.xlu0 2
  %724 = vperm.xlu0 %723, %v594
  %v725 = vpop.permute.xlu0 %724
  %728 = vset.pattern.permute.xlu0 2
  %729 = vperm.xlu0 %728, %v597
  %v730 = vpop.permute.xlu0 %729
  %733 = vset.pattern.permute.xlu0 2
  %734 = vperm.xlu0 %733, %v602
  %v735 = vpop.permute.xlu0 %734
  %738 = vset.pattern.permute.xlu0 2
  %739 = vperm.xlu0 %738, %v605
  %v740 = vpop.permute.xlu0 %739
  %743 = vset.pattern.permute.xlu0 2
  %744 = vperm.xlu0 %743, %v610
  %v745 = vpop.permute.xlu0 %744
  %748 = vset.pattern.permute.xlu0 2
  %749 = vperm.xlu0 %748, %v613
  %v750 = vpop.permute.xlu0 %749
  %753 = vset.pattern.permute.xlu0 2
  %754 = vperm.xlu0 %753, %v618
  %v755 = vpop.permute.xlu0 %754
  %758 = vset.pattern.permute.xlu0 2
  %759 = vperm.xlu0 %758, %v621
  %v760 = vpop.permute.xlu0 %759
  %763 = vset.pattern.permute.xlu0 2
  %764 = vperm.xlu0 %763, %v626
  %v765 = vpop.permute.xlu0 %764
  %768 = vset.pattern.permute.xlu0 2
  %769 = vperm.xlu0 %768, %v629
  %v770 = vpop.permute.xlu0 %769
  %773 = vset.pattern.permute.xlu0 2
  %774 = vperm.xlu0 %773, %v634
  %v775 = vpop.permute.xlu0 %774
  %778 = vset.pattern.permute.xlu0 2
  %779 = vperm.xlu0 %778, %v637
  %v780 = vpop.permute.xlu0 %779
  %783 = vset.pattern.permute.xlu0 2
  %784 = vperm.xlu0 %783, %v642
  %v785 = vpop.permute.xlu0 %784
  %788 = vset.pattern.permute.xlu0 2
  %789 = vperm.xlu0 %788, %v645
  %v790 = vpop.permute.xlu0 %789
  %v792 = vlaneseq
  %v793 = vshrl.u32 %v792, 7
  %v794 = vsub.s32 0, %v793
  %v795 = vrot.slane %v471, %v794
  %v796 = vadd.f32 %v715, %v795
  %v797 = vadd.f32 %v720, %v795
  %v798 = vadd.f32 %v725, %v795
  %v799 = vadd.f32 %v730, %v795
  %v800 = vadd.f32 %v735, %v795
  %v801 = vadd.f32 %v740, %v795
  %v802 = vadd.f32 %v745, %v795
  %v803 = vadd.f32 %v750, %v795
  %v804 = vadd.f32 %v755, %v795
  %v805 = vadd.f32 %v760, %v795
  %v806 = vadd.f32 %v765, %v795
  %v807 = vadd.f32 %v770, %v795
  %v808 = vadd.f32 %v775, %v795
  %v809 = vadd.f32 %v780, %v795
  %v810 = vadd.f32 %v785, %v795
  %v811 = vadd.f32 %v790, %v795
  %v812 = vmul.f32 %v796, 0.2
  %v813 = vmul.f32 %v797, 0.2
  %v814 = vmul.f32 %v798, 0.2
  %v815 = vmul.f32 %v799, 0.2
  %v816 = vmul.f32 %v800, 0.2
  %v817 = vmul.f32 %v801, 0.2
  %v818 = vmul.f32 %v802, 0.2
  %v819 = vmul.f32 %v803, 0.2
  %v820 = vmul.f32 %v804, 0.2
  %v821 = vmul.f32 %v805, 0.2
  %v822 = vmul.f32 %v806, 0.2
  %v823 = vmul.f32 %v807, 0.2
  %v824 = vmul.f32 %v808, 0.2
  %v825 = vmul.f32 %v809, 0.2
  %v826 = vmul.f32 %v810, 0.2
  %v827 = vmul.f32 %v811, 0.2
  %v828 = vmax.f32 %v796, %v812
  %v829 = vmax.f32 %v797, %v813
  %v830 = vmax.f32 %v798, %v814
  %v831 = vmax.f32 %v799, %v815
  %v832 = vmax.f32 %v800, %v816
  %v833 = vmax.f32 %v801, %v817
  %v834 = vmax.f32 %v802, %v818
  %v835 = vmax.f32 %v803, %v819
  %v836 = vmax.f32 %v804, %v820
  %v837 = vmax.f32 %v805, %v821
  %v838 = vmax.f32 %v806, %v822
  %v839 = vmax.f32 %v807, %v823
  %v840 = vmax.f32 %v808, %v824
  %v841 = vmax.f32 %v809, %v825
  %v842 = vmax.f32 %v810, %v826
  %v843 = vmax.f32 %v811, %v827
  %v844 = vsel %vm696, %v828, -1e+30
  %v845 = vsel %vm697, %v829, -1e+30
  %v846 = vsel %vm698, %v830, -1e+30
  %v847 = vsel %vm699, %v831, -1e+30
  %v848 = vsel %vm700, %v832, -1e+30
  %v849 = vsel %vm701, %v833, -1e+30
  %v850 = vsel %vm702, %v834, -1e+30
  %v851 = vsel %vm703, %v835, -1e+30
  %v852 = vsel %vm704, %v836, -1e+30
  %v853 = vsel %vm705, %v837, -1e+30
  %v854 = vsel %vm706, %v838, -1e+30
  %v855 = vsel %vm707, %v839, -1e+30
  %v856 = vsel %vm708, %v840, -1e+30
  %v857 = vsel %vm709, %v841, -1e+30
  %v858 = vsel %vm710, %v842, -1e+30
  %v859 = vsel %vm711, %v843, -1e+30
  %860 = vmax.xlane.f32.xlu0 %v844
  %v861 = vpop.xlane.xlu0 %860
  %862 = vmax.xlane.f32.xlu0 %v845
  %v863 = vpop.xlane.xlu0 %862
  %864 = vmax.xlane.f32.xlu0 %v846
  %v865 = vpop.xlane.xlu0 %864
  %866 = vmax.xlane.f32.xlu0 %v847
  %v867 = vpop.xlane.xlu0 %866
  %868 = vmax.xlane.f32.xlu0 %v848
  %v869 = vpop.xlane.xlu0 %868
  %870 = vmax.xlane.f32.xlu0 %v849
  %v871 = vpop.xlane.xlu0 %870
  %872 = vmax.xlane.f32.xlu0 %v850
  %v873 = vpop.xlane.xlu0 %872
  %874 = vmax.xlane.f32.xlu0 %v851
  %v875 = vpop.xlane.xlu0 %874
  %876 = vmax.xlane.f32.xlu0 %v852
  %v877 = vpop.xlane.xlu0 %876
  %878 = vmax.xlane.f32.xlu0 %v853
  %v879 = vpop.xlane.xlu0 %878
  %880 = vmax.xlane.f32.xlu0 %v854
  %v881 = vpop.xlane.xlu0 %880
  %882 = vmax.xlane.f32.xlu0 %v855
  %v883 = vpop.xlane.xlu0 %882
  %884 = vmax.xlane.f32.xlu0 %v856
  %v885 = vpop.xlane.xlu0 %884
  %886 = vmax.xlane.f32.xlu0 %v857
  %v887 = vpop.xlane.xlu0 %886
  %888 = vmax.xlane.f32.xlu0 %v858
  %v889 = vpop.xlane.xlu0 %888
  %890 = vmax.xlane.f32.xlu0 %v859
  %v891 = vpop.xlane.xlu0 %890
  %v892 = vsub.f32 %v844, %v861
  %v893 = vsub.f32 %v845, %v863
  %v894 = vsub.f32 %v846, %v865
  %v895 = vsub.f32 %v847, %v867
  %v896 = vsub.f32 %v848, %v869
  %v897 = vsub.f32 %v849, %v871
  %v898 = vsub.f32 %v850, %v873
  %v899 = vsub.f32 %v851, %v875
  %v900 = vsub.f32 %v852, %v877
  %v901 = vsub.f32 %v853, %v879
  %v902 = vsub.f32 %v854, %v881
  %v903 = vsub.f32 %v855, %v883
  %v904 = vsub.f32 %v856, %v885
  %v905 = vsub.f32 %v857, %v887
  %v906 = vsub.f32 %v858, %v889
  %v907 = vsub.f32 %v859, %v891
  %v908 = vmul.f32 %v892, 1.442695
  %v909 = vpow.pop %v908
  %v910 = vmul.f32 %v893, 1.442695
  %v911 = vpow.pop %v910
  %v912 = vmul.f32 %v894, 1.442695
  %v913 = vpow.pop %v912
  %v914 = vmul.f32 %v895, 1.442695
  %v915 = vpow.pop %v914
  %v916 = vmul.f32 %v896, 1.442695
  %v917 = vpow.pop %v916
  %v918 = vmul.f32 %v897, 1.442695
  %v919 = vpow.pop %v918
  %v920 = vmul.f32 %v898, 1.442695
  %v921 = vpow.pop %v920
  %v922 = vmul.f32 %v899, 1.442695
  %v923 = vpow.pop %v922
  %v924 = vmul.f32 %v900, 1.442695
  %v925 = vpow.pop %v924
  %v926 = vmul.f32 %v901, 1.442695
  %v927 = vpow.pop %v926
  %v928 = vmul.f32 %v902, 1.442695
  %v929 = vpow.pop %v928
  %v930 = vmul.f32 %v903, 1.442695
  %v931 = vpow.pop %v930
  %v932 = vmul.f32 %v904, 1.442695
  %v933 = vpow.pop %v932
  %v934 = vmul.f32 %v905, 1.442695
  %v935 = vpow.pop %v934
  %v936 = vmul.f32 %v906, 1.442695
  %v937 = vpow.pop %v936
  %v938 = vmul.f32 %v907, 1.442695
  %v939 = vpow.pop %v938
  %940 = vadd.xlane.f32.xlu0 %v909
  %v941 = vpop.xlane.xlu0 %940
  %942 = vadd.xlane.f32.xlu0 %v911
  %v943 = vpop.xlane.xlu0 %942
  %944 = vadd.xlane.f32.xlu0 %v913
  %v945 = vpop.xlane.xlu0 %944
  %946 = vadd.xlane.f32.xlu0 %v915
  %v947 = vpop.xlane.xlu0 %946
  %948 = vadd.xlane.f32.xlu0 %v917
  %v949 = vpop.xlane.xlu0 %948
  %950 = vadd.xlane.f32.xlu0 %v919
  %v951 = vpop.xlane.xlu0 %950
  %952 = vadd.xlane.f32.xlu0 %v921
  %v953 = vpop.xlane.xlu0 %952
  %954 = vadd.xlane.f32.xlu0 %v923
  %v955 = vpop.xlane.xlu0 %954
  %956 = vadd.xlane.f32.xlu0 %v925
  %v957 = vpop.xlane.xlu0 %956
  %958 = vadd.xlane.f32.xlu0 %v927
  %v959 = vpop.xlane.xlu0 %958
  %960 = vadd.xlane.f32.xlu0 %v929
  %v961 = vpop.xlane.xlu0 %960
  %962 = vadd.xlane.f32.xlu0 %v931
  %v963 = vpop.xlane.xlu0 %962
  %964 = vadd.xlane.f32.xlu0 %v933
  %v965 = vpop.xlane.xlu0 %964
  %966 = vadd.xlane.f32.xlu0 %v935
  %v967 = vpop.xlane.xlu0 %966
  %968 = vadd.xlane.f32.xlu0 %v937
  %v969 = vpop.xlane.xlu0 %968
  %970 = vadd.xlane.f32.xlu0 %v939
  %v971 = vpop.xlane.xlu0 %970
  %v972 = vrcp.pop %v941
  %v973 = vrcp.pop %v943
  %v974 = vrcp.pop %v945
  %v975 = vrcp.pop %v947
  %v976 = vrcp.pop %v949
  %v977 = vrcp.pop %v951
  %v978 = vrcp.pop %v953
  %v979 = vrcp.pop %v955
  %v980 = vrcp.pop %v957
  %v981 = vrcp.pop %v959
  %v982 = vrcp.pop %v961
  %v983 = vrcp.pop %v963
  %v984 = vrcp.pop %v965
  %v985 = vrcp.pop %v967
  %v986 = vrcp.pop %v969
  %v987 = vrcp.pop %v971
  %v988 = vmul.f32 %v909, %v972
  %v989 = vmul.f32 %v911, %v973
  %v990 = vmul.f32 %v913, %v974
  %v991 = vmul.f32 %v915, %v975
  %v992 = vmul.f32 %v917, %v976
  %v993 = vmul.f32 %v919, %v977
  %v994 = vmul.f32 %v921, %v978
  %v995 = vmul.f32 %v923, %v979
  %v996 = vmul.f32 %v925, %v980
  %v997 = vmul.f32 %v927, %v981
  %v998 = vmul.f32 %v929, %v982
  %v999 = vmul.f32 %v931, %v983
  %v1000 = vmul.f32 %v933, %v984
  %v1001 = vmul.f32 %v935, %v985
  %v1002 = vmul.f32 %v937, %v986
  %v1003 = vmul.f32 %v939, %v987
  %v1004 = vpack.c.bf16 %v989, %v988
  %v1005 = vpack.c.bf16 %v991, %v990
  %v1006 = vpack.c.bf16 %v993, %v992
  %v1007 = vpack.c.bf16 %v995, %v994
  %v1008 = vpack.c.bf16 %v997, %v996
  %v1009 = vpack.c.bf16 %v999, %v998
  %v1010 = vpack.c.bf16 %v1001, %v1000
  %v1011 = vpack.c.bf16 %v1003, %v1002
  %v1012 = vpack.c.bf16 %v284, %v280
  %v1013 = vpack.c.bf16 %v294, %v290
  %v1014 = vpack.c.bf16 %v304, %v300
  %v1015 = vpack.c.bf16 %v314, %v310
  %v1016 = vpack.c.bf16 %v324, %v320
  %v1017 = vpack.c.bf16 %v334, %v330
  %v1018 = vpack.c.bf16 %v344, %v340
  %v1019 = vpack.c.bf16 %v354, %v350
  %1020 = vmatprep.subr.bf16.mxu0 0
  %1021 = vmatpush1.bf16.msra.mxu0 %v1012
  %1022 = vmatprep.subr.bf16.mxu0 0
  %1023 = vmatpush1.bf16.msra.mxu0 %v1013
  %1024 = vmatprep.subr.bf16.mxu0 0
  %1025 = vmatpush1.bf16.msra.mxu0 %v1014
  %1026 = vmatprep.subr.bf16.mxu0 0
  %1027 = vmatpush1.bf16.msra.mxu0 %v1015
  %1028 = vmatprep.subr.bf16.mxu0 0
  %1029 = vmatpush1.bf16.msra.mxu0 %v1016
  %1030 = vmatprep.subr.bf16.mxu0 0
  %1031 = vmatpush1.bf16.msra.mxu0 %v1017
  %1032 = vmatprep.subr.bf16.mxu0 0
  %1033 = vmatpush1.bf16.msra.mxu0 %v1018
  %1034 = vmatprep.subr.bf16.mxu0 0
  %1035 = vmatpush1.bf16.msra.mxu0 %v1019
  %1036 = vmatprep.subr.bf16.mxu0 0
  %1037 = vmatpush1.bf16.msra.mxu0 0
  %1038 = vmatprep.subr.bf16.mxu0 0
  %1039 = vmatpush1.bf16.msra.mxu0 0
  %1040 = vmatprep.subr.bf16.mxu0 0
  %1041 = vmatpush1.bf16.msra.mxu0 0
  %1042 = vmatprep.subr.bf16.mxu0 0
  %1043 = vmatpush1.bf16.msra.mxu0 0
  %1044 = vmatprep.subr.bf16.mxu0 0
  %1045 = vmatpush1.bf16.msra.mxu0 0
  %1046 = vmatprep.subr.bf16.mxu0 0
  %1047 = vmatpush1.bf16.msra.mxu0 0
  %1048 = vmatprep.subr.bf16.mxu0 0
  %1049 = vmatpush1.bf16.msra.mxu0 0
  %1050 = vmatprep.subr.bf16.mxu0 0
  %1051 = vmatpush1.bf16.msra.mxu0 0
  %1052 = vmatprep.mubr.bf16.mxu0 0
  %1053 = vmatmul.mubr.bf16.gmra.mrb[0].mxu0 %v1004
  %v1054 = vpop.f32.mrb[0].mxu0
  %v1055 = vadd.f32 0.0, %v1054
  %v1056 = vpop.f32.mrb[0].mxu0
  %v1057 = vpop.f32.mrb[0].mxu0
  %v1058 = vadd.f32 0.0, %v1057
  %v1059 = vpop.f32.mrb[0].mxu0
  %1060 = vmatprep.mubr.bf16.mxu0 0
  %1061 = vmatmul.mubr.bf16.gmra.mrb[0].mxu0 %v1005
  %v1062 = vpop.f32.mrb[0].mxu0
  %v1063 = vadd.f32 0.0, %v1062
  %v1064 = vpop.f32.mrb[0].mxu0
  %v1065 = vpop.f32.mrb[0].mxu0
  %v1066 = vadd.f32 0.0, %v1065
  %v1067 = vpop.f32.mrb[0].mxu0
  %1068 = vmatprep.mubr.bf16.mxu0 0
  %1069 = vmatmul.mubr.bf16.gmra.mrb[0].mxu0 %v1006
  %v1070 = vpop.f32.mrb[0].mxu0
  %v1071 = vadd.f32 0.0, %v1070
  %v1072 = vpop.f32.mrb[0].mxu0
  %v1073 = vpop.f32.mrb[0].mxu0
  %v1074 = vadd.f32 0.0, %v1073
  %v1075 = vpop.f32.mrb[0].mxu0
  %1076 = vmatprep.mubr.bf16.mxu0 0
  %1077 = vmatmul.mubr.bf16.gmra.mrb[0].mxu0 %v1007
  %v1078 = vpop.f32.mrb[0].mxu0
  %v1079 = vadd.f32 0.0, %v1078
  %v1080 = vpop.f32.mrb[0].mxu0
  %v1081 = vpop.f32.mrb[0].mxu0
  %v1082 = vadd.f32 0.0, %v1081
  %v1083 = vpop.f32.mrb[0].mxu0
  %1084 = vmatprep.mubr.bf16.mxu0 0
  %1085 = vmatmul.mubr.bf16.gmra.mrb[0].mxu0 %v1008
  %v1086 = vpop.f32.mrb[0].mxu0
  %v1087 = vadd.f32 0.0, %v1086
  %v1088 = vpop.f32.mrb[0].mxu0
  %v1089 = vpop.f32.mrb[0].mxu0
  %v1090 = vadd.f32 0.0, %v1089
  %v1091 = vpop.f32.mrb[0].mxu0
  %1092 = vmatprep.mubr.bf16.mxu0 0
  %1093 = vmatmul.mubr.bf16.gmra.mrb[0].mxu0 %v1009
  %v1094 = vpop.f32.mrb[0].mxu0
  %v1095 = vadd.f32 0.0, %v1094
  %v1096 = vpop.f32.mrb[0].mxu0
  %v1097 = vpop.f32.mrb[0].mxu0
  %v1098 = vadd.f32 0.0, %v1097
  %v1099 = vpop.f32.mrb[0].mxu0
  %1100 = vmatprep.mubr.bf16.mxu0 0
  %1101 = vmatmul.mubr.bf16.gmra.mrb[0].mxu0 %v1010
  %v1102 = vpop.f32.mrb[0].mxu0
  %v1103 = vadd.f32 0.0, %v1102
  %v1104 = vpop.f32.mrb[0].mxu0
  %v1105 = vpop.f32.mrb[0].mxu0
  %v1106 = vadd.f32 0.0, %v1105
  %v1107 = vpop.f32.mrb[0].mxu0
  %1108 = vmatprep.mubr.bf16.mxu0 0
  %1109 = vmatmul.mubr.bf16.gmra.mrb[0].mxu0 %v1011
  %v1110 = vpop.f32.mrb[0].mxu0
  %v1111 = vadd.f32 0.0, %v1110
  %v1112 = vpop.f32.mrb[0].mxu0
  %v1113 = vpop.f32.mrb[0].mxu0
  %v1114 = vadd.f32 0.0, %v1113
  %v1115 = vpop.f32.mrb[0].mxu0
  %1116 = vdwg.mxu0
  %1117 = vset.pattern.permute.xlu0 3
  %1118 = vperm.xlu0 %1117, %v586
  %v1119 = vpop.permute.xlu0 %1118
  %1121 = vset.pattern.permute.xlu0 3
  %1122 = vperm.xlu0 %1121, %v589
  %v1123 = vpop.permute.xlu0 %1122
  %1125 = vset.pattern.permute.xlu0 3
  %1126 = vperm.xlu0 %1125, %v594
  %v1127 = vpop.permute.xlu0 %1126
  %1129 = vset.pattern.permute.xlu0 3
  %1130 = vperm.xlu0 %1129, %v597
  %v1131 = vpop.permute.xlu0 %1130
  %1133 = vset.pattern.permute.xlu0 3
  %1134 = vperm.xlu0 %1133, %v602
  %v1135 = vpop.permute.xlu0 %1134
  %1137 = vset.pattern.permute.xlu0 3
  %1138 = vperm.xlu0 %1137, %v605
  %v1139 = vpop.permute.xlu0 %1138
  %1141 = vset.pattern.permute.xlu0 3
  %1142 = vperm.xlu0 %1141, %v610
  %v1143 = vpop.permute.xlu0 %1142
  %1145 = vset.pattern.permute.xlu0 3
  %1146 = vperm.xlu0 %1145, %v613
  %v1147 = vpop.permute.xlu0 %1146
  %1149 = vset.pattern.permute.xlu0 3
  %1150 = vperm.xlu0 %1149, %v618
  %v1151 = vpop.permute.xlu0 %1150
  %1153 = vset.pattern.permute.xlu0 3
  %1154 = vperm.xlu0 %1153, %v621
  %v1155 = vpop.permute.xlu0 %1154
  %1157 = vset.pattern.permute.xlu0 3
  %1158 = vperm.xlu0 %1157, %v626
  %v1159 = vpop.permute.xlu0 %1158
  %1161 = vset.pattern.permute.xlu0 3
  %1162 = vperm.xlu0 %1161, %v629
  %v1163 = vpop.permute.xlu0 %1162
  %1165 = vset.pattern.permute.xlu0 3
  %1166 = vperm.xlu0 %1165, %v634
  %v1167 = vpop.permute.xlu0 %1166
  %1169 = vset.pattern.permute.xlu0 3
  %1170 = vperm.xlu0 %1169, %v637
  %v1171 = vpop.permute.xlu0 %1170
  %1173 = vset.pattern.permute.xlu0 3
  %1174 = vperm.xlu0 %1173, %v642
  %v1175 = vpop.permute.xlu0 %1174
  %1177 = vset.pattern.permute.xlu0 3
  %1178 = vperm.xlu0 %1177, %v645
  %v1179 = vpop.permute.xlu0 %1178
  %v1181 = vlaneseq
  %v1182 = vshrl.u32 %v1181, 7
  %v1183 = vsub.s32 1, %v1182
  %v1184 = vrot.slane %v471, %v1183
  %v1185 = vadd.f32 %v1119, %v1184
  %v1186 = vadd.f32 %v1123, %v1184
  %v1187 = vadd.f32 %v1127, %v1184
  %v1188 = vadd.f32 %v1131, %v1184
  %v1189 = vadd.f32 %v1135, %v1184
  %v1190 = vadd.f32 %v1139, %v1184
  %v1191 = vadd.f32 %v1143, %v1184
  %v1192 = vadd.f32 %v1147, %v1184
  %v1193 = vadd.f32 %v1151, %v1184
  %v1194 = vadd.f32 %v1155, %v1184
  %v1195 = vadd.f32 %v1159, %v1184
  %v1196 = vadd.f32 %v1163, %v1184
  %v1197 = vadd.f32 %v1167, %v1184
  %v1198 = vadd.f32 %v1171, %v1184
  %v1199 = vadd.f32 %v1175, %v1184
  %v1200 = vadd.f32 %v1179, %v1184
  %v1201 = vmul.f32 %v1185, 0.2
  %v1202 = vmul.f32 %v1186, 0.2
  %v1203 = vmul.f32 %v1187, 0.2
  %v1204 = vmul.f32 %v1188, 0.2
  %v1205 = vmul.f32 %v1189, 0.2
  %v1206 = vmul.f32 %v1190, 0.2
  %v1207 = vmul.f32 %v1191, 0.2
  %v1208 = vmul.f32 %v1192, 0.2
  %v1209 = vmul.f32 %v1193, 0.2
  %v1210 = vmul.f32 %v1194, 0.2
  %v1211 = vmul.f32 %v1195, 0.2
  %v1212 = vmul.f32 %v1196, 0.2
  %v1213 = vmul.f32 %v1197, 0.2
  %v1214 = vmul.f32 %v1198, 0.2
  %v1215 = vmul.f32 %v1199, 0.2
  %v1216 = vmul.f32 %v1200, 0.2
  %v1217 = vmax.f32 %v1185, %v1201
  %v1218 = vmax.f32 %v1186, %v1202
  %v1219 = vmax.f32 %v1187, %v1203
  %v1220 = vmax.f32 %v1188, %v1204
  %v1221 = vmax.f32 %v1189, %v1205
  %v1222 = vmax.f32 %v1190, %v1206
  %v1223 = vmax.f32 %v1191, %v1207
  %v1224 = vmax.f32 %v1192, %v1208
  %v1225 = vmax.f32 %v1193, %v1209
  %v1226 = vmax.f32 %v1194, %v1210
  %v1227 = vmax.f32 %v1195, %v1211
  %v1228 = vmax.f32 %v1196, %v1212
  %v1229 = vmax.f32 %v1197, %v1213
  %v1230 = vmax.f32 %v1198, %v1214
  %v1231 = vmax.f32 %v1199, %v1215
  %v1232 = vmax.f32 %v1200, %v1216
  %v1233 = vsel %vm696, %v1217, -1e+30
  %v1234 = vsel %vm697, %v1218, -1e+30
  %v1235 = vsel %vm698, %v1219, -1e+30
  %v1236 = vsel %vm699, %v1220, -1e+30
  %v1237 = vsel %vm700, %v1221, -1e+30
  %v1238 = vsel %vm701, %v1222, -1e+30
  %v1239 = vsel %vm702, %v1223, -1e+30
  %v1240 = vsel %vm703, %v1224, -1e+30
  %v1241 = vsel %vm704, %v1225, -1e+30
  %v1242 = vsel %vm705, %v1226, -1e+30
  %v1243 = vsel %vm706, %v1227, -1e+30
  %v1244 = vsel %vm707, %v1228, -1e+30
  %v1245 = vsel %vm708, %v1229, -1e+30
  %v1246 = vsel %vm709, %v1230, -1e+30
  %v1247 = vsel %vm710, %v1231, -1e+30
  %v1248 = vsel %vm711, %v1232, -1e+30
  %1249 = vmax.xlane.f32.xlu0 %v1233
  %v1250 = vpop.xlane.xlu0 %1249
  %1251 = vmax.xlane.f32.xlu0 %v1234
  %v1252 = vpop.xlane.xlu0 %1251
  %1253 = vmax.xlane.f32.xlu0 %v1235
  %v1254 = vpop.xlane.xlu0 %1253
  %1255 = vmax.xlane.f32.xlu0 %v1236
  %v1256 = vpop.xlane.xlu0 %1255
  %1257 = vmax.xlane.f32.xlu0 %v1237
  %v1258 = vpop.xlane.xlu0 %1257
  %1259 = vmax.xlane.f32.xlu0 %v1238
  %v1260 = vpop.xlane.xlu0 %1259
  %1261 = vmax.xlane.f32.xlu0 %v1239
  %v1262 = vpop.xlane.xlu0 %1261
  %1263 = vmax.xlane.f32.xlu0 %v1240
  %v1264 = vpop.xlane.xlu0 %1263
  %1265 = vmax.xlane.f32.xlu0 %v1241
  %v1266 = vpop.xlane.xlu0 %1265
  %1267 = vmax.xlane.f32.xlu0 %v1242
  %v1268 = vpop.xlane.xlu0 %1267
  %1269 = vmax.xlane.f32.xlu0 %v1243
  %v1270 = vpop.xlane.xlu0 %1269
  %1271 = vmax.xlane.f32.xlu0 %v1244
  %v1272 = vpop.xlane.xlu0 %1271
  %1273 = vmax.xlane.f32.xlu0 %v1245
  %v1274 = vpop.xlane.xlu0 %1273
  %1275 = vmax.xlane.f32.xlu0 %v1246
  %v1276 = vpop.xlane.xlu0 %1275
  %1277 = vmax.xlane.f32.xlu0 %v1247
  %v1278 = vpop.xlane.xlu0 %1277
  %1279 = vmax.xlane.f32.xlu0 %v1248
  %v1280 = vpop.xlane.xlu0 %1279
  %v1281 = vsub.f32 %v1233, %v1250
  %v1282 = vsub.f32 %v1234, %v1252
  %v1283 = vsub.f32 %v1235, %v1254
  %v1284 = vsub.f32 %v1236, %v1256
  %v1285 = vsub.f32 %v1237, %v1258
  %v1286 = vsub.f32 %v1238, %v1260
  %v1287 = vsub.f32 %v1239, %v1262
  %v1288 = vsub.f32 %v1240, %v1264
  %v1289 = vsub.f32 %v1241, %v1266
  %v1290 = vsub.f32 %v1242, %v1268
  %v1291 = vsub.f32 %v1243, %v1270
  %v1292 = vsub.f32 %v1244, %v1272
  %v1293 = vsub.f32 %v1245, %v1274
  %v1294 = vsub.f32 %v1246, %v1276
  %v1295 = vsub.f32 %v1247, %v1278
  %v1296 = vsub.f32 %v1248, %v1280
  %v1297 = vmul.f32 %v1281, 1.442695
  %v1298 = vpow.pop %v1297
  %v1299 = vmul.f32 %v1282, 1.442695
  %v1300 = vpow.pop %v1299
  %v1301 = vmul.f32 %v1283, 1.442695
  %v1302 = vpow.pop %v1301
  %v1303 = vmul.f32 %v1284, 1.442695
  %v1304 = vpow.pop %v1303
  %v1305 = vmul.f32 %v1285, 1.442695
  %v1306 = vpow.pop %v1305
  %v1307 = vmul.f32 %v1286, 1.442695
  %v1308 = vpow.pop %v1307
  %v1309 = vmul.f32 %v1287, 1.442695
  %v1310 = vpow.pop %v1309
  %v1311 = vmul.f32 %v1288, 1.442695
  %v1312 = vpow.pop %v1311
  %v1313 = vmul.f32 %v1289, 1.442695
  %v1314 = vpow.pop %v1313
  %v1315 = vmul.f32 %v1290, 1.442695
  %v1316 = vpow.pop %v1315
  %v1317 = vmul.f32 %v1291, 1.442695
  %v1318 = vpow.pop %v1317
  %v1319 = vmul.f32 %v1292, 1.442695
  %v1320 = vpow.pop %v1319
  %v1321 = vmul.f32 %v1293, 1.442695
  %v1322 = vpow.pop %v1321
  %v1323 = vmul.f32 %v1294, 1.442695
  %v1324 = vpow.pop %v1323
  %v1325 = vmul.f32 %v1295, 1.442695
  %v1326 = vpow.pop %v1325
  %v1327 = vmul.f32 %v1296, 1.442695
  %v1328 = vpow.pop %v1327
  %1329 = vadd.xlane.f32.xlu0 %v1298
  %v1330 = vpop.xlane.xlu0 %1329
  %1331 = vadd.xlane.f32.xlu0 %v1300
  %v1332 = vpop.xlane.xlu0 %1331
  %1333 = vadd.xlane.f32.xlu0 %v1302
  %v1334 = vpop.xlane.xlu0 %1333
  %1335 = vadd.xlane.f32.xlu0 %v1304
  %v1336 = vpop.xlane.xlu0 %1335
  %1337 = vadd.xlane.f32.xlu0 %v1306
  %v1338 = vpop.xlane.xlu0 %1337
  %1339 = vadd.xlane.f32.xlu0 %v1308
  %v1340 = vpop.xlane.xlu0 %1339
  %1341 = vadd.xlane.f32.xlu0 %v1310
  %v1342 = vpop.xlane.xlu0 %1341
  %1343 = vadd.xlane.f32.xlu0 %v1312
  %v1344 = vpop.xlane.xlu0 %1343
  %1345 = vadd.xlane.f32.xlu0 %v1314
  %v1346 = vpop.xlane.xlu0 %1345
  %1347 = vadd.xlane.f32.xlu0 %v1316
  %v1348 = vpop.xlane.xlu0 %1347
  %1349 = vadd.xlane.f32.xlu0 %v1318
  %v1350 = vpop.xlane.xlu0 %1349
  %1351 = vadd.xlane.f32.xlu0 %v1320
  %v1352 = vpop.xlane.xlu0 %1351
  %1353 = vadd.xlane.f32.xlu0 %v1322
  %v1354 = vpop.xlane.xlu0 %1353
  %1355 = vadd.xlane.f32.xlu0 %v1324
  %v1356 = vpop.xlane.xlu0 %1355
  %1357 = vadd.xlane.f32.xlu0 %v1326
  %v1358 = vpop.xlane.xlu0 %1357
  %1359 = vadd.xlane.f32.xlu0 %v1328
  %v1360 = vpop.xlane.xlu0 %1359
  %v1361 = vrcp.pop %v1330
  %v1362 = vrcp.pop %v1332
  %v1363 = vrcp.pop %v1334
  %v1364 = vrcp.pop %v1336
  %v1365 = vrcp.pop %v1338
  %v1366 = vrcp.pop %v1340
  %v1367 = vrcp.pop %v1342
  %v1368 = vrcp.pop %v1344
  %v1369 = vrcp.pop %v1346
  %v1370 = vrcp.pop %v1348
  %v1371 = vrcp.pop %v1350
  %v1372 = vrcp.pop %v1352
  %v1373 = vrcp.pop %v1354
  %v1374 = vrcp.pop %v1356
  %v1375 = vrcp.pop %v1358
  %v1376 = vrcp.pop %v1360
  %v1377 = vmul.f32 %v1298, %v1361
  %v1378 = vmul.f32 %v1300, %v1362
  %v1379 = vmul.f32 %v1302, %v1363
  %v1380 = vmul.f32 %v1304, %v1364
  %v1381 = vmul.f32 %v1306, %v1365
  %v1382 = vmul.f32 %v1308, %v1366
  %v1383 = vmul.f32 %v1310, %v1367
  %v1384 = vmul.f32 %v1312, %v1368
  %v1385 = vmul.f32 %v1314, %v1369
  %v1386 = vmul.f32 %v1316, %v1370
  %v1387 = vmul.f32 %v1318, %v1371
  %v1388 = vmul.f32 %v1320, %v1372
  %v1389 = vmul.f32 %v1322, %v1373
  %v1390 = vmul.f32 %v1324, %v1374
  %v1391 = vmul.f32 %v1326, %v1375
  %v1392 = vmul.f32 %v1328, %v1376
  %v1393 = vpack.c.bf16 %v1378, %v1377
  %v1394 = vpack.c.bf16 %v1380, %v1379
  %v1395 = vpack.c.bf16 %v1382, %v1381
  %v1396 = vpack.c.bf16 %v1384, %v1383
  %v1397 = vpack.c.bf16 %v1386, %v1385
  %v1398 = vpack.c.bf16 %v1388, %v1387
  %v1399 = vpack.c.bf16 %v1390, %v1389
  %v1400 = vpack.c.bf16 %v1392, %v1391
  %v1401 = vpack.c.bf16 %v286, %v282
  %v1402 = vpack.c.bf16 %v296, %v292
  %v1403 = vpack.c.bf16 %v306, %v302
  %v1404 = vpack.c.bf16 %v316, %v312
  %v1405 = vpack.c.bf16 %v326, %v322
  %v1406 = vpack.c.bf16 %v336, %v332
  %v1407 = vpack.c.bf16 %v346, %v342
  %v1408 = vpack.c.bf16 %v356, %v352
  %1409 = vmatprep.subr.bf16.mxu0 0
  %1410 = vmatpush1.bf16.msra.mxu0 %v1401
  %1411 = vmatprep.subr.bf16.mxu0 0
  %1412 = vmatpush1.bf16.msra.mxu0 %v1402
  %1413 = vmatprep.subr.bf16.mxu0 0
  %1414 = vmatpush1.bf16.msra.mxu0 %v1403
  %1415 = vmatprep.subr.bf16.mxu0 0
  %1416 = vmatpush1.bf16.msra.mxu0 %v1404
  %1417 = vmatprep.subr.bf16.mxu0 0
  %1418 = vmatpush1.bf16.msra.mxu0 %v1405
  %1419 = vmatprep.subr.bf16.mxu0 0
  %1420 = vmatpush1.bf16.msra.mxu0 %v1406
  %1421 = vmatprep.subr.bf16.mxu0 0
  %1422 = vmatpush1.bf16.msra.mxu0 %v1407
  %1423 = vmatprep.subr.bf16.mxu0 0
  %1424 = vmatpush1.bf16.msra.mxu0 %v1408
  %1425 = vmatprep.subr.bf16.mxu0 0
  %1426 = vmatpush1.bf16.msra.mxu0 0
  %1427 = vmatprep.subr.bf16.mxu0 0
  %1428 = vmatpush1.bf16.msra.mxu0 0
  %1429 = vmatprep.subr.bf16.mxu0 0
  %1430 = vmatpush1.bf16.msra.mxu0 0
  %1431 = vmatprep.subr.bf16.mxu0 0
  %1432 = vmatpush1.bf16.msra.mxu0 0
  %1433 = vmatprep.subr.bf16.mxu0 0
  %1434 = vmatpush1.bf16.msra.mxu0 0
  %1435 = vmatprep.subr.bf16.mxu0 0
  %1436 = vmatpush1.bf16.msra.mxu0 0
  %1437 = vmatprep.subr.bf16.mxu0 0
  %1438 = vmatpush1.bf16.msra.mxu0 0
  %1439 = vmatprep.subr.bf16.mxu0 0
  %1440 = vmatpush1.bf16.msra.mxu0 0
  %1441 = vmatprep.mubr.bf16.mxu0 0
  %1442 = vmatmul.mubr.bf16.gmra.mrb[0].mxu0 %v1393
  %v1443 = vpop.f32.mrb[0].mxu0
  %v1444 = vadd.f32 0.0, %v1443
  %v1445 = vpop.f32.mrb[0].mxu0
  %v1446 = vpop.f32.mrb[0].mxu0
  %v1447 = vadd.f32 0.0, %v1446
  %v1448 = vpop.f32.mrb[0].mxu0
  %1449 = vmatprep.mubr.bf16.mxu0 0
  %1450 = vmatmul.mubr.bf16.gmra.mrb[0].mxu0 %v1394
  %v1451 = vpop.f32.mrb[0].mxu0
  %v1452 = vadd.f32 0.0, %v1451
  %v1453 = vpop.f32.mrb[0].mxu0
  %v1454 = vpop.f32.mrb[0].mxu0
  %v1455 = vadd.f32 0.0, %v1454
  %v1456 = vpop.f32.mrb[0].mxu0
  %1457 = vmatprep.mubr.bf16.mxu0 0
  %1458 = vmatmul.mubr.bf16.gmra.mrb[0].mxu0 %v1395
  %v1459 = vpop.f32.mrb[0].mxu0
  %v1460 = vadd.f32 0.0, %v1459
  %v1461 = vpop.f32.mrb[0].mxu0
  %v1462 = vpop.f32.mrb[0].mxu0
  %v1463 = vadd.f32 0.0, %v1462
  %v1464 = vpop.f32.mrb[0].mxu0
  %1465 = vmatprep.mubr.bf16.mxu0 0
  %1466 = vmatmul.mubr.bf16.gmra.mrb[0].mxu0 %v1396
  %v1467 = vpop.f32.mrb[0].mxu0
  %v1468 = vadd.f32 0.0, %v1467
  %v1469 = vpop.f32.mrb[0].mxu0
  %v1470 = vpop.f32.mrb[0].mxu0
  %v1471 = vadd.f32 0.0, %v1470
  %v1472 = vpop.f32.mrb[0].mxu0
  %1473 = vmatprep.mubr.bf16.mxu0 0
  %1474 = vmatmul.mubr.bf16.gmra.mrb[0].mxu0 %v1397
  %v1475 = vpop.f32.mrb[0].mxu0
  %v1476 = vadd.f32 0.0, %v1475
  %v1477 = vpop.f32.mrb[0].mxu0
  %v1478 = vpop.f32.mrb[0].mxu0
  %v1479 = vadd.f32 0.0, %v1478
  %v1480 = vpop.f32.mrb[0].mxu0
  %1481 = vmatprep.mubr.bf16.mxu0 0
  %1482 = vmatmul.mubr.bf16.gmra.mrb[0].mxu0 %v1398
  %v1483 = vpop.f32.mrb[0].mxu0
  %v1484 = vadd.f32 0.0, %v1483
  %v1485 = vpop.f32.mrb[0].mxu0
  %v1486 = vpop.f32.mrb[0].mxu0
  %v1487 = vadd.f32 0.0, %v1486
  %v1488 = vpop.f32.mrb[0].mxu0
  %1489 = vmatprep.mubr.bf16.mxu0 0
  %1490 = vmatmul.mubr.bf16.gmra.mrb[0].mxu0 %v1399
  %v1491 = vpop.f32.mrb[0].mxu0
  %v1492 = vadd.f32 0.0, %v1491
  %v1493 = vpop.f32.mrb[0].mxu0
  %v1494 = vpop.f32.mrb[0].mxu0
  %v1495 = vadd.f32 0.0, %v1494
  %v1496 = vpop.f32.mrb[0].mxu0
  %1497 = vmatprep.mubr.bf16.mxu0 0
  %1498 = vmatmul.mubr.bf16.gmra.mrb[0].mxu0 %v1400
  %v1499 = vpop.f32.mrb[0].mxu0
  %v1500 = vadd.f32 0.0, %v1499
  %v1501 = vpop.f32.mrb[0].mxu0
  %v1502 = vpop.f32.mrb[0].mxu0
  %v1503 = vadd.f32 0.0, %v1502
  %v1504 = vpop.f32.mrb[0].mxu0
  %1505 = vdwg.mxu0
  %v1506 = vld [vmem:[%s4] sm:$0x3]
  %v1508 = vlaneseq
  %v1509 = vshrl.u32 %v1508, 7
  %v1510 = vsub.s32 0, %v1509
  %v1511 = vrot.slane %v1506, %v1510
  %v1512 = vlaneseq
  %v1513 = vshrl.u32 %v1512, 7
  %v1514 = vsub.s32 1, %v1513
  %v1515 = vrot.slane %v1506, %v1514
  %v1518 = vadd.f32 %v1055, %v1511
  %v1519 = vadd.f32 %v1444, %v1515
  %v1520 = vadd.f32 %v1058, %v1511
  %v1521 = vadd.f32 %v1447, %v1515
  %v1522 = vadd.f32 %v1063, %v1511
  %v1523 = vadd.f32 %v1452, %v1515
  %v1524 = vadd.f32 %v1066, %v1511
  %v1525 = vadd.f32 %v1455, %v1515
  %v1526 = vadd.f32 %v1071, %v1511
  %v1527 = vadd.f32 %v1460, %v1515
  %v1528 = vadd.f32 %v1074, %v1511
  %v1529 = vadd.f32 %v1463, %v1515
  %v1530 = vadd.f32 %v1079, %v1511
  %v1531 = vadd.f32 %v1468, %v1515
  %v1532 = vadd.f32 %v1082, %v1511
  %v1533 = vadd.f32 %v1471, %v1515
  %v1534 = vadd.f32 %v1087, %v1511
  %v1535 = vadd.f32 %v1476, %v1515
  %v1536 = vadd.f32 %v1090, %v1511
  %v1537 = vadd.f32 %v1479, %v1515
  %v1538 = vadd.f32 %v1095, %v1511
  %v1539 = vadd.f32 %v1484, %v1515
  %v1540 = vadd.f32 %v1098, %v1511
  %v1541 = vadd.f32 %v1487, %v1515
  %v1542 = vadd.f32 %v1103, %v1511
  %v1543 = vadd.f32 %v1492, %v1515
  %v1544 = vadd.f32 %v1106, %v1511
  %v1545 = vadd.f32 %v1495, %v1515
  %v1546 = vadd.f32 %v1111, %v1511
  %v1547 = vadd.f32 %v1500, %v1515
  %v1548 = vadd.f32 %v1114, %v1511
  %v1549 = vadd.f32 %v1503, %v1515
  %v1550 = vpack.c.bf16 %v1520, %v1518
  %v1551 = vpack.c.bf16 %v1521, %v1519
  %v1552 = vpack.c.bf16 %v1524, %v1522
  %v1553 = vpack.c.bf16 %v1525, %v1523
  %v1554 = vpack.c.bf16 %v1528, %v1526
  %v1555 = vpack.c.bf16 %v1529, %v1527
  %v1556 = vpack.c.bf16 %v1532, %v1530
  %v1557 = vpack.c.bf16 %v1533, %v1531
  %v1558 = vpack.c.bf16 %v1536, %v1534
  %v1559 = vpack.c.bf16 %v1537, %v1535
  %v1560 = vpack.c.bf16 %v1540, %v1538
  %v1561 = vpack.c.bf16 %v1541, %v1539
  %v1562 = vpack.c.bf16 %v1544, %v1542
  %v1563 = vpack.c.bf16 %v1545, %v1543
  %v1564 = vpack.c.bf16 %v1548, %v1546
  %v1565 = vpack.c.bf16 %v1549, %v1547
  %v1582 = vunpack.c.l.b16 %v1550
  %v1583 = vunpack.c.l.b16 %v1551
  %v1584 = vunpack.c.h.b16 %v1550
  %v1585 = vunpack.c.h.b16 %v1551
  %v1586 = vunpack.c.l.b16 %v1552
  %v1587 = vunpack.c.l.b16 %v1553
  %v1588 = vunpack.c.h.b16 %v1552
  %v1589 = vunpack.c.h.b16 %v1553
  %v1590 = vunpack.c.l.b16 %v1554
  %v1591 = vunpack.c.l.b16 %v1555
  %v1592 = vunpack.c.h.b16 %v1554
  %v1593 = vunpack.c.h.b16 %v1555
  %v1594 = vunpack.c.l.b16 %v1556
  %v1595 = vunpack.c.l.b16 %v1557
  %v1596 = vunpack.c.h.b16 %v1556
  %v1597 = vunpack.c.h.b16 %v1557
  %v1598 = vunpack.c.l.b16 %v1558
  %v1599 = vunpack.c.l.b16 %v1559
  %v1600 = vunpack.c.h.b16 %v1558
  %v1601 = vunpack.c.h.b16 %v1559
  %v1602 = vunpack.c.l.b16 %v1560
  %v1603 = vunpack.c.l.b16 %v1561
  %v1604 = vunpack.c.h.b16 %v1560
  %v1605 = vunpack.c.h.b16 %v1561
  %v1606 = vunpack.c.l.b16 %v1562
  %v1607 = vunpack.c.l.b16 %v1563
  %v1608 = vunpack.c.h.b16 %v1562
  %v1609 = vunpack.c.h.b16 %v1563
  %v1610 = vunpack.c.l.b16 %v1564
  %v1611 = vunpack.c.l.b16 %v1565
  %v1612 = vunpack.c.h.b16 %v1564
  %v1613 = vunpack.c.h.b16 %v1565
  %v1614 = vpack.c.b16 %v1583, %v1582
  %v1615 = vpack.c.b16 %v1585, %v1584
  %v1616 = vpack.c.b16 %v1587, %v1586
  %v1617 = vpack.c.b16 %v1589, %v1588
  %v1618 = vpack.c.b16 %v1591, %v1590
  %v1619 = vpack.c.b16 %v1593, %v1592
  %v1620 = vpack.c.b16 %v1595, %v1594
  %v1621 = vpack.c.b16 %v1597, %v1596
  %v1622 = vpack.c.b16 %v1599, %v1598
  %v1623 = vpack.c.b16 %v1601, %v1600
  %v1624 = vpack.c.b16 %v1603, %v1602
  %v1625 = vpack.c.b16 %v1605, %v1604
  %v1626 = vpack.c.b16 %v1607, %v1606
  %v1627 = vpack.c.b16 %v1609, %v1608
  %v1628 = vpack.c.b16 %v1611, %v1610
  %v1629 = vpack.c.b16 %v1613, %v1612
  %1646 = vst [vmem:[%s5] sm:$0xff] %v1614
  %1647 = vst [vmem:[%s5 + $0x8] sm:$0xff] %v1615
  %1648 = vst [vmem:[%s5 + $0x10] sm:$0xff] %v1616
  %1649 = vst [vmem:[%s5 + $0x18] sm:$0xff] %v1617
  %1650 = vst [vmem:[%s5 + $0x20] sm:$0xff] %v1618
  %1651 = vst [vmem:[%s5 + $0x28] sm:$0xff] %v1619
  %1652 = vst [vmem:[%s5 + $0x30] sm:$0xff] %v1620
  %1653 = vst [vmem:[%s5 + $0x38] sm:$0xff] %v1621
  %1654 = vst [vmem:[%s5 + $0x40] sm:$0xff] %v1622
  %1655 = vst [vmem:[%s5 + $0x48] sm:$0xff] %v1623
  %1656 = vst [vmem:[%s5 + $0x50] sm:$0xff] %v1624
  %1657 = vst [vmem:[%s5 + $0x58] sm:$0xff] %v1625
  %1658 = vst [vmem:[%s5 + $0x60] sm:$0xff] %v1626
  %1659 = vst [vmem:[%s5 + $0x68] sm:$0xff] %v1627
  %1660 = vst [vmem:[%s5 + $0x70] sm:$0xff] %v1628
  %1661 = vst [vmem:[%s5 + $0x78] sm:$0xff] %v1629
  // Predicated region
  $region22: #{gat_forward.2} parent=0 // pred_check
    _
  $region23: #{gat_forward.2} parent=0 // pred_check_branch
    %1663 = sbr.rel (0) target = $region25
  $region24: #{gat_forward.2} parent=0 // pred_region
    _
  $region25: #{gat_forward.2} parent=0 // pred_fallthru
    _
  // Predicated region
  $region26: #{gat_forward.2} parent=0 // pred_check
    _
  $region27: #{gat_forward.2} parent=0 // pred_check_branch
    %1665 = sbr.rel (0) target = $region29
  $region28: #{gat_forward.2} parent=0 // pred_region
    _
  $region29: #{gat_forward.2} parent=0 // pred_fallthru
    _

// kernel: gat_forward.3
$region0: #{gat_forward.3}
  #allocation0 [shape = 'u32[]', space=smem, size = 0x4, offset = 0x4, fixed_abs, tag = 'smem constant byte address 0x4 - core index']
  #allocation1 [shape = 'u32[144,128]{1,0:T(1,128)}', space=vmem, size = 0x12000, scoped, tag = 'internal scratch']
  %s0 = inlined_call_operand.vmem [shape: bf16[128,256], index: 0, kind: input, shape index: {}, may-alias: {0,1}]
  %s1 = inlined_call_operand.vmem [shape: bf16[128,256], index: 1, kind: input, shape index: {}, may-alias: {0,1}]
  %s2 = inlined_call_operand.vmem [shape: s8[128,128], index: 2, kind: input, shape index: {}]
  %s3 = inlined_call_operand.vmem [shape: bf16[256,384], index: 3, kind: input, shape index: {}]
  %s4 = inlined_call_operand.vmem [shape: f32[1,128], index: 4, kind: input, shape index: {}]
  %s5 = inlined_call_operand.vmem [shape: f32[128,128], index: 5, kind: output, shape index: {}]
  %s6 = sld [smem:[#allocation0]]
  $region30: #{gat_forward.3} parent=0
    _
  %s8 = ssub.s32 1, %s6
  %s9 = scalar_select 0, %s8, %s6
  // Predicated region
  $region2: #{gat_forward.3} parent=0 // pred_check
    _
  $region3: #{gat_forward.3} parent=0 // pred_check_branch
    %11 = sbr.rel (0) target = $region5
  $region4: #{gat_forward.3} parent=0 // pred_region
    _
  $region5: #{gat_forward.3} parent=0 // pred_fallthru
    _
  // Predicated region
  $region6: #{gat_forward.3} parent=0 // pred_check
    _
  $region7: #{gat_forward.3} parent=0 // pred_check_branch
    %13 = sbr.rel (0) target = $region9
  $region8: #{gat_forward.3} parent=0 // pred_region
    _
  $region9: #{gat_forward.3} parent=0 // pred_fallthru
    _
  // Predicated region
  $region10: #{gat_forward.3} parent=0 // pred_check
    _
  $region11: #{gat_forward.3} parent=0 // pred_check_branch
    %15 = sbr.rel (0) target = $region13
  $region12: #{gat_forward.3} parent=0 // pred_region
    _
  $region13: #{gat_forward.3} parent=0 // pred_fallthru
    _
  // Predicated region
  $region14: #{gat_forward.3} parent=0 // pred_check
    _
  $region15: #{gat_forward.3} parent=0 // pred_check_branch
    %17 = sbr.rel (0) target = $region17
  $region16: #{gat_forward.3} parent=0 // pred_region
    _
  $region17: #{gat_forward.3} parent=0 // pred_fallthru
    _
  // Predicated region
  $region18: #{gat_forward.3} parent=0 // pred_check
    _
  $region19: #{gat_forward.3} parent=0 // pred_check_branch
    %19 = sbr.rel (0) target = $region21
  $region20: #{gat_forward.3} parent=0 // pred_region
    _
  $region21: #{gat_forward.3} parent=0 // pred_fallthru
    _
  %v21 = vld [vmem:[%s3] sm:$0xff]
  %v22 = vld [vmem:[%s3 + $0x8] sm:$0xf]
  %v23 = vld [vmem:[%s3 + $0xc] sm:$0xff]
  %v24 = vld [vmem:[%s3 + $0x14] sm:$0xf]
  %v25 = vld [vmem:[%s3 + $0x18] sm:$0xff]
  %v26 = vld [vmem:[%s3 + $0x20] sm:$0xf]
  %v27 = vld [vmem:[%s3 + $0x24] sm:$0xff]
  %v28 = vld [vmem:[%s3 + $0x2c] sm:$0xf]
  %v29 = vld [vmem:[%s3 + $0x30] sm:$0xff]
  %v30 = vld [vmem:[%s3 + $0x38] sm:$0xf]
  %v31 = vld [vmem:[%s3 + $0x3c] sm:$0xff]
  %v32 = vld [vmem:[%s3 + $0x44] sm:$0xf]
  %v33 = vld [vmem:[%s3 + $0x48] sm:$0xff]
  %v34 = vld [vmem:[%s3 + $0x50] sm:$0xf]
  %v35 = vld [vmem:[%s3 + $0x54] sm:$0xff]
  %v36 = vld [vmem:[%s3 + $0x5c] sm:$0xf]
  %v37 = vld [vmem:[%s3 + $0x60] sm:$0xff]
  %v38 = vld [vmem:[%s3 + $0x68] sm:$0xf]
  %v39 = vld [vmem:[%s3 + $0x6c] sm:$0xff]
  %v40 = vld [vmem:[%s3 + $0x74] sm:$0xf]
  %v41 = vld [vmem:[%s3 + $0x78] sm:$0xff]
  %v42 = vld [vmem:[%s3 + $0x80] sm:$0xf]
  %v43 = vld [vmem:[%s3 + $0x84] sm:$0xff]
  %v44 = vld [vmem:[%s3 + $0x8c] sm:$0xf]
  %v45 = vld [vmem:[%s3 + $0x90] sm:$0xff]
  %v46 = vld [vmem:[%s3 + $0x98] sm:$0xf]
  %v47 = vld [vmem:[%s3 + $0x9c] sm:$0xff]
  %v48 = vld [vmem:[%s3 + $0xa4] sm:$0xf]
  %v49 = vld [vmem:[%s3 + $0xa8] sm:$0xff]
  %v50 = vld [vmem:[%s3 + $0xb0] sm:$0xf]
  %v51 = vld [vmem:[%s3 + $0xb4] sm:$0xff]
  %v52 = vld [vmem:[%s3 + $0xbc] sm:$0xf]
  %v53 = vld [vmem:[%s3 + $0xc0] sm:$0xff]
  %v54 = vld [vmem:[%s3 + $0xc8] sm:$0xf]
  %v55 = vld [vmem:[%s3 + $0xcc] sm:$0xff]
  %v56 = vld [vmem:[%s3 + $0xd4] sm:$0xf]
  %v57 = vld [vmem:[%s3 + $0xd8] sm:$0xff]
  %v58 = vld [vmem:[%s3 + $0xe0] sm:$0xf]
  %v59 = vld [vmem:[%s3 + $0xe4] sm:$0xff]
  %v60 = vld [vmem:[%s3 + $0xec] sm:$0xf]
  %v61 = vld [vmem:[%s3 + $0xf0] sm:$0xff]
  %v62 = vld [vmem:[%s3 + $0xf8] sm:$0xf]
  %v63 = vld [vmem:[%s3 + $0xfc] sm:$0xff]
  %v64 = vld [vmem:[%s3 + $0x104] sm:$0xf]
  %v65 = vld [vmem:[%s3 + $0x108] sm:$0xff]
  %v66 = vld [vmem:[%s3 + $0x110] sm:$0xf]
  %v67 = vld [vmem:[%s3 + $0x114] sm:$0xff]
  %v68 = vld [vmem:[%s3 + $0x11c] sm:$0xf]
  %v69 = vld [vmem:[%s3 + $0x120] sm:$0xff]
  %v70 = vld [vmem:[%s3 + $0x128] sm:$0xf]
  %v71 = vld [vmem:[%s3 + $0x12c] sm:$0xff]
  %v72 = vld [vmem:[%s3 + $0x134] sm:$0xf]
  %v73 = vld [vmem:[%s3 + $0x138] sm:$0xff]
  %v74 = vld [vmem:[%s3 + $0x140] sm:$0xf]
  %v75 = vld [vmem:[%s3 + $0x144] sm:$0xff]
  %v76 = vld [vmem:[%s3 + $0x14c] sm:$0xf]
  %v77 = vld [vmem:[%s3 + $0x150] sm:$0xff]
  %v78 = vld [vmem:[%s3 + $0x158] sm:$0xf]
  %v79 = vld [vmem:[%s3 + $0x15c] sm:$0xff]
  %v80 = vld [vmem:[%s3 + $0x164] sm:$0xf]
  %v81 = vld [vmem:[%s3 + $0x168] sm:$0xff]
  %v82 = vld [vmem:[%s3 + $0x170] sm:$0xf]
  %v83 = vld [vmem:[%s3 + $0x174] sm:$0xff]
  %v84 = vld [vmem:[%s3 + $0x17c] sm:$0xf]
  %v85 = vld [vmem:[%s0] sm:$0xff]
  %v86 = vld [vmem:[%s0 + $0x8] sm:$0xff]
  %v87 = vld [vmem:[%s0 + $0x10] sm:$0xff]
  %v88 = vld [vmem:[%s0 + $0x18] sm:$0xff]
  %v89 = vld [vmem:[%s0 + $0x20] sm:$0xff]
  %v90 = vld [vmem:[%s0 + $0x28] sm:$0xff]
  %v91 = vld [vmem:[%s0 + $0x30] sm:$0xff]
  %v92 = vld [vmem:[%s0 + $0x38] sm:$0xff]
  %v93 = vld [vmem:[%s0 + $0x40] sm:$0xff]
  %v94 = vld [vmem:[%s0 + $0x48] sm:$0xff]
  %v95 = vld [vmem:[%s0 + $0x50] sm:$0xff]
  %v96 = vld [vmem:[%s0 + $0x58] sm:$0xff]
  %v97 = vld [vmem:[%s0 + $0x60] sm:$0xff]
  %v98 = vld [vmem:[%s0 + $0x68] sm:$0xff]
  %v99 = vld [vmem:[%s0 + $0x70] sm:$0xff]
  %v100 = vld [vmem:[%s0 + $0x78] sm:$0xff]
  %v117 = vunpack.c.l.b16 %v85
  %v118 = vunpack.c.h.b16 %v85
  %v119 = vunpack.c.l.b16 %v86
  %v120 = vunpack.c.h.b16 %v86
  %v121 = vunpack.c.l.b16 %v87
  %v122 = vunpack.c.h.b16 %v87
  %v123 = vunpack.c.l.b16 %v88
  %v124 = vunpack.c.h.b16 %v88
  %v125 = vunpack.c.l.b16 %v89
  %v126 = vunpack.c.h.b16 %v89
  %v127 = vunpack.c.l.b16 %v90
  %v128 = vunpack.c.h.b16 %v90
  %v129 = vunpack.c.l.b16 %v91
  %v130 = vunpack.c.h.b16 %v91
  %v131 = vunpack.c.l.b16 %v92
  %v132 = vunpack.c.h.b16 %v92
  %v133 = vunpack.c.l.b16 %v93
  %v134 = vunpack.c.h.b16 %v93
  %v135 = vunpack.c.l.b16 %v94
  %v136 = vunpack.c.h.b16 %v94
  %v137 = vunpack.c.l.b16 %v95
  %v138 = vunpack.c.h.b16 %v95
  %v139 = vunpack.c.l.b16 %v96
  %v140 = vunpack.c.h.b16 %v96
  %v141 = vunpack.c.l.b16 %v97
  %v142 = vunpack.c.h.b16 %v97
  %v143 = vunpack.c.l.b16 %v98
  %v144 = vunpack.c.h.b16 %v98
  %v145 = vunpack.c.l.b16 %v99
  %v146 = vunpack.c.h.b16 %v99
  %v147 = vunpack.c.l.b16 %v100
  %v148 = vunpack.c.h.b16 %v100
  %v149 = vpack.c.b16 %v119, %v117
  %v150 = vpack.c.b16 %v120, %v118
  %v151 = vpack.c.b16 %v123, %v121
  %v152 = vpack.c.b16 %v124, %v122
  %v153 = vpack.c.b16 %v127, %v125
  %v154 = vpack.c.b16 %v128, %v126
  %v155 = vpack.c.b16 %v131, %v129
  %v156 = vpack.c.b16 %v132, %v130
  %v157 = vpack.c.b16 %v135, %v133
  %v158 = vpack.c.b16 %v136, %v134
  %v159 = vpack.c.b16 %v139, %v137
  %v160 = vpack.c.b16 %v140, %v138
  %v161 = vpack.c.b16 %v143, %v141
  %v162 = vpack.c.b16 %v144, %v142
  %v163 = vpack.c.b16 %v147, %v145
  %v164 = vpack.c.b16 %v148, %v146
  %v245 = vunpack.c.l.b16 %v21
  %v246 = vunpack.c.h.b16 %v21
  %v247 = vunpack.c.l.b16 %v22
  %v248 = vunpack.c.l.b16 %v23
  %v249 = vunpack.c.h.b16 %v23
  %v250 = vunpack.c.l.b16 %v24
  %v251 = vunpack.c.l.b16 %v25
  %v252 = vunpack.c.h.b16 %v25
  %v253 = vunpack.c.l.b16 %v26
  %v254 = vunpack.c.l.b16 %v27
  %v255 = vunpack.c.h.b16 %v27
  %v256 = vunpack.c.l.b16 %v28
  %v257 = vunpack.c.l.b16 %v29
  %v258 = vunpack.c.h.b16 %v29
  %v259 = vunpack.c.l.b16 %v30
  %v260 = vunpack.c.l.b16 %v31
  %v261 = vunpack.c.h.b16 %v31
  %v262 = vunpack.c.l.b16 %v32
  %v263 = vunpack.c.l.b16 %v33
  %v264 = vunpack.c.h.b16 %v33
  %v265 = vunpack.c.l.b16 %v34
  %v266 = vunpack.c.l.b16 %v35
  %v267 = vunpack.c.h.b16 %v35
  %v268 = vunpack.c.l.b16 %v36
  %v269 = vunpack.c.l.b16 %v37
  %v270 = vunpack.c.h.b16 %v37
  %v271 = vunpack.c.l.b16 %v38
  %v272 = vunpack.c.l.b16 %v39
  %v273 = vunpack.c.h.b16 %v39
  %v274 = vunpack.c.l.b16 %v40
  %v275 = vunpack.c.l.b16 %v41
  %v276 = vunpack.c.h.b16 %v41
  %v277 = vunpack.c.l.b16 %v42
  %v278 = vunpack.c.l.b16 %v43
  %v279 = vunpack.c.h.b16 %v43
  %v280 = vunpack.c.l.b16 %v44
  %v281 = vunpack.c.l.b16 %v45
  %v282 = vunpack.c.h.b16 %v45
  %v283 = vunpack.c.l.b16 %v46
  %v284 = vunpack.c.l.b16 %v47
  %v285 = vunpack.c.h.b16 %v47
  %v286 = vunpack.c.l.b16 %v48
  %v287 = vunpack.c.l.b16 %v49
  %v288 = vunpack.c.h.b16 %v49
  %v289 = vunpack.c.l.b16 %v50
  %v290 = vunpack.c.l.b16 %v51
  %v291 = vunpack.c.h.b16 %v51
  %v292 = vunpack.c.l.b16 %v52
  %v293 = vunpack.c.l.b16 %v53
  %v294 = vunpack.c.h.b16 %v53
  %v295 = vunpack.c.l.b16 %v54
  %v296 = vunpack.c.l.b16 %v55
  %v297 = vunpack.c.h.b16 %v55
  %v298 = vunpack.c.l.b16 %v56
  %v299 = vunpack.c.l.b16 %v57
  %v300 = vunpack.c.h.b16 %v57
  %v301 = vunpack.c.l.b16 %v58
  %v302 = vunpack.c.l.b16 %v59
  %v303 = vunpack.c.h.b16 %v59
  %v304 = vunpack.c.l.b16 %v60
  %v305 = vunpack.c.l.b16 %v61
  %v306 = vunpack.c.h.b16 %v61
  %v307 = vunpack.c.l.b16 %v62
  %v308 = vunpack.c.l.b16 %v63
  %v309 = vunpack.c.h.b16 %v63
  %v310 = vunpack.c.l.b16 %v64
  %v311 = vunpack.c.l.b16 %v65
  %v312 = vunpack.c.h.b16 %v65
  %v313 = vunpack.c.l.b16 %v66
  %v314 = vunpack.c.l.b16 %v67
  %v315 = vunpack.c.h.b16 %v67
  %v316 = vunpack.c.l.b16 %v68
  %v317 = vunpack.c.l.b16 %v69
  %v318 = vunpack.c.h.b16 %v69
  %v319 = vunpack.c.l.b16 %v70
  %v320 = vunpack.c.l.b16 %v71
  %v321 = vunpack.c.h.b16 %v71
  %v322 = vunpack.c.l.b16 %v72
  %v323 = vunpack.c.l.b16 %v73
  %v324 = vunpack.c.h.b16 %v73
  %v325 = vunpack.c.l.b16 %v74
  %v326 = vunpack.c.l.b16 %v75
  %v327 = vunpack.c.h.b16 %v75
  %v328 = vunpack.c.l.b16 %v76
  %v329 = vunpack.c.l.b16 %v77
  %v330 = vunpack.c.h.b16 %v77
  %v331 = vunpack.c.l.b16 %v78
  %v332 = vunpack.c.l.b16 %v79
  %v333 = vunpack.c.h.b16 %v79
  %v334 = vunpack.c.l.b16 %v80
  %v335 = vunpack.c.l.b16 %v81
  %v336 = vunpack.c.h.b16 %v81
  %v337 = vunpack.c.l.b16 %v82
  %v338 = vunpack.c.l.b16 %v83
  %v339 = vunpack.c.h.b16 %v83
  %v340 = vunpack.c.l.b16 %v84
  %v341 = vpack.c.b16 %v248, %v245
  %v342 = vpack.c.b16 %v249, %v246
  %v343 = vpack.c.b16 %v250, %v247
  %v344 = vpack.c.b16 %v254, %v251
  %v345 = vpack.c.b16 %v255, %v252
  %v346 = vpack.c.b16 %v256, %v253
  %v347 = vpack.c.b16 %v260, %v257
  %v348 = vpack.c.b16 %v261, %v258
  %v349 = vpack.c.b16 %v262, %v259
  %v350 = vpack.c.b16 %v266, %v263
  %v351 = vpack.c.b16 %v267, %v264
  %v352 = vpack.c.b16 %v268, %v265
  %v353 = vpack.c.b16 %v272, %v269
  %v354 = vpack.c.b16 %v273, %v270
  %v355 = vpack.c.b16 %v274, %v271
  %v356 = vpack.c.b16 %v278, %v275
  %v357 = vpack.c.b16 %v279, %v276
  %v358 = vpack.c.b16 %v280, %v277
  %v359 = vpack.c.b16 %v284, %v281
  %v360 = vpack.c.b16 %v285, %v282
  %v361 = vpack.c.b16 %v286, %v283
  %v362 = vpack.c.b16 %v290, %v287
  %v363 = vpack.c.b16 %v291, %v288
  %v364 = vpack.c.b16 %v292, %v289
  %v365 = vpack.c.b16 %v296, %v293
  %v366 = vpack.c.b16 %v297, %v294
  %v367 = vpack.c.b16 %v298, %v295
  %v368 = vpack.c.b16 %v302, %v299
  %v369 = vpack.c.b16 %v303, %v300
  %v370 = vpack.c.b16 %v304, %v301
  %v371 = vpack.c.b16 %v308, %v305
  %v372 = vpack.c.b16 %v309, %v306
  %v373 = vpack.c.b16 %v310, %v307
  %v374 = vpack.c.b16 %v314, %v311
  %v375 = vpack.c.b16 %v315, %v312
  %v376 = vpack.c.b16 %v316, %v313
  %v377 = vpack.c.b16 %v320, %v317
  %v378 = vpack.c.b16 %v321, %v318
  %v379 = vpack.c.b16 %v322, %v319
  %v380 = vpack.c.b16 %v326, %v323
  %v381 = vpack.c.b16 %v327, %v324
  %v382 = vpack.c.b16 %v328, %v325
  %v383 = vpack.c.b16 %v332, %v329
  %v384 = vpack.c.b16 %v333, %v330
  %v385 = vpack.c.b16 %v334, %v331
  %v386 = vpack.c.b16 %v338, %v335
  %v387 = vpack.c.b16 %v339, %v336
  %v388 = vpack.c.b16 %v340, %v337
  %437 = vmatprep.subr.bf16.mxu0 %v342
  %438 = vmatpush1.bf16.msra.mxu0 %v341
  %439 = vmatprep.subr.bf16.mxu0 %v345
  %440 = vmatpush1.bf16.msra.mxu0 %v344
  %441 = vmatprep.subr.bf16.mxu0 %v348
  %442 = vmatpush1.bf16.msra.mxu0 %v347
  %443 = vmatprep.subr.bf16.mxu0 %v351
  %444 = vmatpush1.bf16.msra.mxu0 %v350
  %445 = vmatprep.subr.bf16.mxu0 %v354
  %446 = vmatpush1.bf16.msra.mxu0 %v353
  %447 = vmatprep.subr.bf16.mxu0 %v357
  %448 = vmatpush1.bf16.msra.mxu0 %v356
  %449 = vmatprep.subr.bf16.mxu0 %v360
  %450 = vmatpush1.bf16.msra.mxu0 %v359
  %451 = vmatprep.subr.bf16.mxu0 %v363
  %452 = vmatpush1.bf16.msra.mxu0 %v362
  %453 = vmatprep.subr.bf16.mxu0 %v366
  %454 = vmatpush1.bf16.msra.mxu0 %v365
  %455 = vmatprep.subr.bf16.mxu0 %v369
  %456 = vmatpush1.bf16.msra.mxu0 %v368
  %457 = vmatprep.subr.bf16.mxu0 %v372
  %458 = vmatpush1.bf16.msra.mxu0 %v371
  %459 = vmatprep.subr.bf16.mxu0 %v375
  %460 = vmatpush1.bf16.msra.mxu0 %v374
  %461 = vmatprep.subr.bf16.mxu0 %v378
  %462 = vmatpush1.bf16.msra.mxu0 %v377
  %463 = vmatprep.subr.bf16.mxu0 %v381
  %464 = vmatpush1.bf16.msra.mxu0 %v380
  %465 = vmatprep.subr.bf16.mxu0 %v384
  %466 = vmatpush1.bf16.msra.mxu0 %v383
  %467 = vmatprep.subr.bf16.mxu0 %v387
  %468 = vmatpush1.bf16.msra.mxu0 %v386
  %469 = vmatprep.mubr.bf16.mxu0 %v150
  %470 = vmatmul.mubr.bf16.gmra.mrb[0].mxu0 %v149
  %v471 = vpop.f32.mrb[0].mxu0
  %v472 = vadd.f32 0.0, %v471
  %v473 = vpop.f32.mrb[0].mxu0
  %v474 = vadd.f32 0.0, %v473
  %v475 = vpop.f32.mrb[0].mxu0
  %v476 = vadd.f32 0.0, %v475
  %v477 = vpop.f32.mrb[0].mxu0
  %v478 = vadd.f32 0.0, %v477
  %479 = vmatprep.mubr.bf16.mxu0 %v152
  %480 = vmatmul.mubr.bf16.gmra.mrb[0].mxu0 %v151
  %v481 = vpop.f32.mrb[0].mxu0
  %v482 = vadd.f32 0.0, %v481
  %v483 = vpop.f32.mrb[0].mxu0
  %v484 = vadd.f32 0.0, %v483
  %v485 = vpop.f32.mrb[0].mxu0
  %v486 = vadd.f32 0.0, %v485
  %v487 = vpop.f32.mrb[0].mxu0
  %v488 = vadd.f32 0.0, %v487
  %489 = vmatprep.mubr.bf16.mxu0 %v154
  %490 = vmatmul.mubr.bf16.gmra.mrb[0].mxu0 %v153
  %v491 = vpop.f32.mrb[0].mxu0
  %v492 = vadd.f32 0.0, %v491
  %v493 = vpop.f32.mrb[0].mxu0
  %v494 = vadd.f32 0.0, %v493
  %v495 = vpop.f32.mrb[0].mxu0
  %v496 = vadd.f32 0.0, %v495
  %v497 = vpop.f32.mrb[0].mxu0
  %v498 = vadd.f32 0.0, %v497
  %499 = vmatprep.mubr.bf16.mxu0 %v156
  %500 = vmatmul.mubr.bf16.gmra.mrb[0].mxu0 %v155
  %v501 = vpop.f32.mrb[0].mxu0
  %v502 = vadd.f32 0.0, %v501
  %v503 = vpop.f32.mrb[0].mxu0
  %v504 = vadd.f32 0.0, %v503
  %v505 = vpop.f32.mrb[0].mxu0
  %v506 = vadd.f32 0.0, %v505
  %v507 = vpop.f32.mrb[0].mxu0
  %v508 = vadd.f32 0.0, %v507
  %509 = vmatprep.mubr.bf16.mxu0 %v158
  %510 = vmatmul.mubr.bf16.gmra.mrb[0].mxu0 %v157
  %v511 = vpop.f32.mrb[0].mxu0
  %v512 = vadd.f32 0.0, %v511
  %v513 = vpop.f32.mrb[0].mxu0
  %v514 = vadd.f32 0.0, %v513
  %v515 = vpop.f32.mrb[0].mxu0
  %v516 = vadd.f32 0.0, %v515
  %v517 = vpop.f32.mrb[0].mxu0
  %v518 = vadd.f32 0.0, %v517
  %519 = vmatprep.mubr.bf16.mxu0 %v160
  %520 = vmatmul.mubr.bf16.gmra.mrb[0].mxu0 %v159
  %v521 = vpop.f32.mrb[0].mxu0
  %v522 = vadd.f32 0.0, %v521
  %v523 = vpop.f32.mrb[0].mxu0
  %v524 = vadd.f32 0.0, %v523
  %v525 = vpop.f32.mrb[0].mxu0
  %v526 = vadd.f32 0.0, %v525
  %v527 = vpop.f32.mrb[0].mxu0
  %v528 = vadd.f32 0.0, %v527
  %529 = vmatprep.mubr.bf16.mxu0 %v162
  %530 = vmatmul.mubr.bf16.gmra.mrb[0].mxu0 %v161
  %v531 = vpop.f32.mrb[0].mxu0
  %v532 = vadd.f32 0.0, %v531
  %v533 = vpop.f32.mrb[0].mxu0
  %v534 = vadd.f32 0.0, %v533
  %v535 = vpop.f32.mrb[0].mxu0
  %v536 = vadd.f32 0.0, %v535
  %v537 = vpop.f32.mrb[0].mxu0
  %v538 = vadd.f32 0.0, %v537
  %539 = vmatprep.mubr.bf16.mxu0 %v164
  %540 = vmatmul.mubr.bf16.gmra.mrb[0].mxu0 %v163
  %v541 = vpop.f32.mrb[0].mxu0
  %v542 = vadd.f32 0.0, %v541
  %v543 = vpop.f32.mrb[0].mxu0
  %v544 = vadd.f32 0.0, %v543
  %v545 = vpop.f32.mrb[0].mxu0
  %v546 = vadd.f32 0.0, %v545
  %v547 = vpop.f32.mrb[0].mxu0
  %v548 = vadd.f32 0.0, %v547
  %549 = vdwg.mxu0
  %550 = vmatprep.subr.bf16.mxu0 0
  %551 = vmatpush1.bf16.msra.mxu0 %v343
  %552 = vmatprep.subr.bf16.mxu0 0
  %553 = vmatpush1.bf16.msra.mxu0 %v346
  %554 = vmatprep.subr.bf16.mxu0 0
  %555 = vmatpush1.bf16.msra.mxu0 %v349
  %556 = vmatprep.subr.bf16.mxu0 0
  %557 = vmatpush1.bf16.msra.mxu0 %v352
  %558 = vmatprep.subr.bf16.mxu0 0
  %559 = vmatpush1.bf16.msra.mxu0 %v355
  %560 = vmatprep.subr.bf16.mxu0 0
  %561 = vmatpush1.bf16.msra.mxu0 %v358
  %562 = vmatprep.subr.bf16.mxu0 0
  %563 = vmatpush1.bf16.msra.mxu0 %v361
  %564 = vmatprep.subr.bf16.mxu0 0
  %565 = vmatpush1.bf16.msra.mxu0 %v364
  %566 = vmatprep.subr.bf16.mxu0 0
  %567 = vmatpush1.bf16.msra.mxu0 %v367
  %568 = vmatprep.subr.bf16.mxu0 0
  %569 = vmatpush1.bf16.msra.mxu0 %v370
  %570 = vmatprep.subr.bf16.mxu0 0
  %571 = vmatpush1.bf16.msra.mxu0 %v373
  %572 = vmatprep.subr.bf16.mxu0 0
  %573 = vmatpush1.bf16.msra.mxu0 %v376
  %574 = vmatprep.subr.bf16.mxu0 0
  %575 = vmatpush1.bf16.msra.mxu0 %v379
  %576 = vmatprep.subr.bf16.mxu0 0
  %577 = vmatpush1.bf16.msra.mxu0 %v382
  %578 = vmatprep.subr.bf16.mxu0 0
  %579 = vmatpush1.bf16.msra.mxu0 %v385
  %580 = vmatprep.subr.bf16.mxu0 0
  %581 = vmatpush1.bf16.msra.mxu0 %v388
  %582 = vmatprep.mubr.bf16.mxu0 %v150
  %583 = vmatmul.mubr.bf16.gmra.mrb[0].mxu0 %v149
  %v584 = vpop.f32.mrb[0].mxu0
  %v585 = vadd.f32 0.0, %v584
  %v586 = vpop.f32.mrb[0].mxu0
  %v587 = vpop.f32.mrb[0].mxu0
  %v588 = vadd.f32 0.0, %v587
  %v589 = vpop.f32.mrb[0].mxu0
  %590 = vmatprep.mubr.bf16.mxu0 %v152
  %591 = vmatmul.mubr.bf16.gmra.mrb[0].mxu0 %v151
  %v592 = vpop.f32.mrb[0].mxu0
  %v593 = vadd.f32 0.0, %v592
  %v594 = vpop.f32.mrb[0].mxu0
  %v595 = vpop.f32.mrb[0].mxu0
  %v596 = vadd.f32 0.0, %v595
  %v597 = vpop.f32.mrb[0].mxu0
  %598 = vmatprep.mubr.bf16.mxu0 %v154
  %599 = vmatmul.mubr.bf16.gmra.mrb[0].mxu0 %v153
  %v600 = vpop.f32.mrb[0].mxu0
  %v601 = vadd.f32 0.0, %v600
  %v602 = vpop.f32.mrb[0].mxu0
  %v603 = vpop.f32.mrb[0].mxu0
  %v604 = vadd.f32 0.0, %v603
  %v605 = vpop.f32.mrb[0].mxu0
  %606 = vmatprep.mubr.bf16.mxu0 %v156
  %607 = vmatmul.mubr.bf16.gmra.mrb[0].mxu0 %v155
  %v608 = vpop.f32.mrb[0].mxu0
  %v609 = vadd.f32 0.0, %v608
  %v610 = vpop.f32.mrb[0].mxu0
  %v611 = vpop.f32.mrb[0].mxu0
  %v612 = vadd.f32 0.0, %v611
  %v613 = vpop.f32.mrb[0].mxu0
  %614 = vmatprep.mubr.bf16.mxu0 %v158
  %615 = vmatmul.mubr.bf16.gmra.mrb[0].mxu0 %v157
  %v616 = vpop.f32.mrb[0].mxu0
  %v617 = vadd.f32 0.0, %v616
  %v618 = vpop.f32.mrb[0].mxu0
  %v619 = vpop.f32.mrb[0].mxu0
  %v620 = vadd.f32 0.0, %v619
  %v621 = vpop.f32.mrb[0].mxu0
  %622 = vmatprep.mubr.bf16.mxu0 %v160
  %623 = vmatmul.mubr.bf16.gmra.mrb[0].mxu0 %v159
  %v624 = vpop.f32.mrb[0].mxu0
  %v625 = vadd.f32 0.0, %v624
  %v626 = vpop.f32.mrb[0].mxu0
  %v627 = vpop.f32.mrb[0].mxu0
  %v628 = vadd.f32 0.0, %v627
  %v629 = vpop.f32.mrb[0].mxu0
  %630 = vmatprep.mubr.bf16.mxu0 %v162
  %631 = vmatmul.mubr.bf16.gmra.mrb[0].mxu0 %v161
  %v632 = vpop.f32.mrb[0].mxu0
  %v633 = vadd.f32 0.0, %v632
  %v634 = vpop.f32.mrb[0].mxu0
  %v635 = vpop.f32.mrb[0].mxu0
  %v636 = vadd.f32 0.0, %v635
  %v637 = vpop.f32.mrb[0].mxu0
  %638 = vmatprep.mubr.bf16.mxu0 %v164
  %639 = vmatmul.mubr.bf16.gmra.mrb[0].mxu0 %v163
  %v640 = vpop.f32.mrb[0].mxu0
  %v641 = vadd.f32 0.0, %v640
  %v642 = vpop.f32.mrb[0].mxu0
  %v643 = vpop.f32.mrb[0].mxu0
  %v644 = vadd.f32 0.0, %v643
  %v645 = vpop.f32.mrb[0].mxu0
  %646 = vdwg.mxu0
  %647 = vxpose.xlu0.b32.start [1/16] %v585, 128
  %648 = vxpose.xlu0.b32.cont [2/16] %v588, 128
  %649 = vxpose.xlu0.b32.cont [3/16] %v593, 128
  %650 = vxpose.xlu0.b32.cont [4/16] %v596, 128
  %651 = vxpose.xlu0.b32.cont [5/16] %v601, 128
  %652 = vxpose.xlu0.b32.cont [6/16] %v604, 128
  %653 = vxpose.xlu0.b32.cont [7/16] %v609, 128
  %654 = vxpose.xlu0.b32.cont [8/16] %v612, 128
  %655 = vxpose.xlu0.b32.cont [9/16] %v617, 128
  %656 = vxpose.xlu0.b32.cont [10/16] %v620, 128
  %657 = vxpose.xlu0.b32.cont [11/16] %v625, 128
  %658 = vxpose.xlu0.b32.cont [12/16] %v628, 128
  %659 = vxpose.xlu0.b32.cont [13/16] %v633, 128
  %660 = vxpose.xlu0.b32.cont [14/16] %v636, 128
  %661 = vxpose.xlu0.b32.cont [15/16] %v641, 128
  %662 = vxpose.xlu0.b32.end [16/16] %v644, 128
  %v663 = vpop.trf.xlu0
  %v664 = vpop.trf.xlu0
  %v665 = vpop.trf.xlu0
  %v666 = vpop.trf.xlu0
  %v667 = vpop.trf.xlu0
  %v668 = vpop.trf.xlu0
  %v669 = vpop.trf.xlu0
  %v670 = vpop.trf.xlu0
  %v671 = vpop.trf.xlu0
  %v672 = vpop.trf.xlu0
  %v673 = vpop.trf.xlu0
  %v674 = vpop.trf.xlu0
  %v675 = vpop.trf.xlu0
  %v676 = vpop.trf.xlu0
  %v677 = vpop.trf.xlu0
  %v678 = vpop.trf.xlu0
  %v679 = vld [vmem:[%s1] sm:$0xff]
  %v680 = vld [vmem:[%s1 + $0x8] sm:$0xff]
  %v681 = vld [vmem:[%s1 + $0x10] sm:$0xff]
  %v682 = vld [vmem:[%s1 + $0x18] sm:$0xff]
  %v683 = vld [vmem:[%s1 + $0x20] sm:$0xff]
  %v684 = vld [vmem:[%s1 + $0x28] sm:$0xff]
  %v685 = vld [vmem:[%s1 + $0x30] sm:$0xff]
  %v686 = vld [vmem:[%s1 + $0x38] sm:$0xff]
  %v687 = vld [vmem:[%s1 + $0x40] sm:$0xff]
  %v688 = vld [vmem:[%s1 + $0x48] sm:$0xff]
  %v689 = vld [vmem:[%s1 + $0x50] sm:$0xff]
  %v690 = vld [vmem:[%s1 + $0x58] sm:$0xff]
  %v691 = vld [vmem:[%s1 + $0x60] sm:$0xff]
  %v692 = vld [vmem:[%s1 + $0x68] sm:$0xff]
  %v693 = vld [vmem:[%s1 + $0x70] sm:$0xff]
  %v694 = vld [vmem:[%s1 + $0x78] sm:$0xff]
  %v711 = vunpack.c.l.b16 %v679
  %v712 = vunpack.c.h.b16 %v679
  %v713 = vunpack.c.l.b16 %v680
  %v714 = vunpack.c.h.b16 %v680
  %v715 = vunpack.c.l.b16 %v681
  %v716 = vunpack.c.h.b16 %v681
  %v717 = vunpack.c.l.b16 %v682
  %v718 = vunpack.c.h.b16 %v682
  %v719 = vunpack.c.l.b16 %v683
  %v720 = vunpack.c.h.b16 %v683
  %v721 = vunpack.c.l.b16 %v684
  %v722 = vunpack.c.h.b16 %v684
  %v723 = vunpack.c.l.b16 %v685
  %v724 = vunpack.c.h.b16 %v685
  %v725 = vunpack.c.l.b16 %v686
  %v726 = vunpack.c.h.b16 %v686
  %v727 = vunpack.c.l.b16 %v687
  %v728 = vunpack.c.h.b16 %v687
  %v729 = vunpack.c.l.b16 %v688
  %v730 = vunpack.c.h.b16 %v688
  %v731 = vunpack.c.l.b16 %v689
  %v732 = vunpack.c.h.b16 %v689
  %v733 = vunpack.c.l.b16 %v690
  %v734 = vunpack.c.h.b16 %v690
  %v735 = vunpack.c.l.b16 %v691
  %v736 = vunpack.c.h.b16 %v691
  %v737 = vunpack.c.l.b16 %v692
  %v738 = vunpack.c.h.b16 %v692
  %v739 = vunpack.c.l.b16 %v693
  %v740 = vunpack.c.h.b16 %v693
  %v741 = vunpack.c.l.b16 %v694
  %v742 = vunpack.c.h.b16 %v694
  %v743 = vpack.c.b16 %v713, %v711
  %v744 = vpack.c.b16 %v714, %v712
  %v745 = vpack.c.b16 %v717, %v715
  %v746 = vpack.c.b16 %v718, %v716
  %v747 = vpack.c.b16 %v721, %v719
  %v748 = vpack.c.b16 %v722, %v720
  %v749 = vpack.c.b16 %v725, %v723
  %v750 = vpack.c.b16 %v726, %v724
  %v751 = vpack.c.b16 %v729, %v727
  %v752 = vpack.c.b16 %v730, %v728
  %v753 = vpack.c.b16 %v733, %v731
  %v754 = vpack.c.b16 %v734, %v732
  %v755 = vpack.c.b16 %v737, %v735
  %v756 = vpack.c.b16 %v738, %v736
  %v757 = vpack.c.b16 %v741, %v739
  %v758 = vpack.c.b16 %v742, %v740
  %775 = vmatprep.subr.bf16.mxu0 0
  %776 = vmatpush1.bf16.msra.mxu0 %v343
  %777 = vmatprep.subr.bf16.mxu0 0
  %778 = vmatpush1.bf16.msra.mxu0 %v346
  %779 = vmatprep.subr.bf16.mxu0 0
  %780 = vmatpush1.bf16.msra.mxu0 %v349
  %781 = vmatprep.subr.bf16.mxu0 0
  %782 = vmatpush1.bf16.msra.mxu0 %v352
  %783 = vmatprep.subr.bf16.mxu0 0
  %784 = vmatpush1.bf16.msra.mxu0 %v355
  %785 = vmatprep.subr.bf16.mxu0 0
  %786 = vmatpush1.bf16.msra.mxu0 %v358
  %787 = vmatprep.subr.bf16.mxu0 0
  %788 = vmatpush1.bf16.msra.mxu0 %v361
  %789 = vmatprep.subr.bf16.mxu0 0
  %790 = vmatpush1.bf16.msra.mxu0 %v364
  %791 = vmatprep.subr.bf16.mxu0 0
  %792 = vmatpush1.bf16.msra.mxu0 %v367
  %793 = vmatprep.subr.bf16.mxu0 0
  %794 = vmatpush1.bf16.msra.mxu0 %v370
  %795 = vmatprep.subr.bf16.mxu0 0
  %796 = vmatpush1.bf16.msra.mxu0 %v373
  %797 = vmatprep.subr.bf16.mxu0 0
  %798 = vmatpush1.bf16.msra.mxu0 %v376
  %799 = vmatprep.subr.bf16.mxu0 0
  %800 = vmatpush1.bf16.msra.mxu0 %v379
  %801 = vmatprep.subr.bf16.mxu0 0
  %802 = vmatpush1.bf16.msra.mxu0 %v382
  %803 = vmatprep.subr.bf16.mxu0 0
  %804 = vmatpush1.bf16.msra.mxu0 %v385
  %805 = vmatprep.subr.bf16.mxu0 0
  %806 = vmatpush1.bf16.msra.mxu0 %v388
  %807 = vmatprep.mubr.bf16.mxu0 %v744
  %808 = vmatmul.mubr.bf16.gmra.mrb[0].mxu0 %v743
  %v809 = vpop.f32.mrb[0].mxu0
  %v810 = vadd.f32 0.0, %v809
  %v811 = vpop.f32.mrb[0].mxu0
  %v812 = vpop.f32.mrb[0].mxu0
  %v813 = vadd.f32 0.0, %v812
  %v814 = vpop.f32.mrb[0].mxu0
  %815 = vmatprep.mubr.bf16.mxu0 %v746
  %816 = vmatmul.mubr.bf16.gmra.mrb[0].mxu0 %v745
  %v817 = vpop.f32.mrb[0].mxu0
  %v818 = vadd.f32 0.0, %v817
  %v819 = vpop.f32.mrb[0].mxu0
  %v820 = vpop.f32.mrb[0].mxu0
  %v821 = vadd.f32 0.0, %v820
  %v822 = vpop.f32.mrb[0].mxu0
  %823 = vmatprep.mubr.bf16.mxu0 %v748
  %824 = vmatmul.mubr.bf16.gmra.mrb[0].mxu0 %v747
  %v825 = vpop.f32.mrb[0].mxu0
  %v826 = vadd.f32 0.0, %v825
  %v827 = vpop.f32.mrb[0].mxu0
  %v828 = vpop.f32.mrb[0].mxu0
  %v829 = vadd.f32 0.0, %v828
  %v830 = vpop.f32.mrb[0].mxu0
  %831 = vmatprep.mubr.bf16.mxu0 %v750
  %832 = vmatmul.mubr.bf16.gmra.mrb[0].mxu0 %v749
  %v833 = vpop.f32.mrb[0].mxu0
  %v834 = vadd.f32 0.0, %v833
  %v835 = vpop.f32.mrb[0].mxu0
  %v836 = vpop.f32.mrb[0].mxu0
  %v837 = vadd.f32 0.0, %v836
  %v838 = vpop.f32.mrb[0].mxu0
  %839 = vmatprep.mubr.bf16.mxu0 %v752
  %840 = vmatmul.mubr.bf16.gmra.mrb[0].mxu0 %v751
  %v841 = vpop.f32.mrb[0].mxu0
  %v842 = vadd.f32 0.0, %v841
  %v843 = vpop.f32.mrb[0].mxu0
  %v844 = vpop.f32.mrb[0].mxu0
  %v845 = vadd.f32 0.0, %v844
  %v846 = vpop.f32.mrb[0].mxu0
  %847 = vmatprep.mubr.bf16.mxu0 %v754
  %848 = vmatmul.mubr.bf16.gmra.mrb[0].mxu0 %v753
  %v849 = vpop.f32.mrb[0].mxu0
  %v850 = vadd.f32 0.0, %v849
  %v851 = vpop.f32.mrb[0].mxu0
  %v852 = vpop.f32.mrb[0].mxu0
  %v853 = vadd.f32 0.0, %v852
  %v854 = vpop.f32.mrb[0].mxu0
  %855 = vmatprep.mubr.bf16.mxu0 %v756
  %856 = vmatmul.mubr.bf16.gmra.mrb[0].mxu0 %v755
  %v857 = vpop.f32.mrb[0].mxu0
  %v858 = vadd.f32 0.0, %v857
  %v859 = vpop.f32.mrb[0].mxu0
  %v860 = vpop.f32.mrb[0].mxu0
  %v861 = vadd.f32 0.0, %v860
  %v862 = vpop.f32.mrb[0].mxu0
  %863 = vmatprep.mubr.bf16.mxu0 %v758
  %864 = vmatmul.mubr.bf16.gmra.mrb[0].mxu0 %v757
  %v865 = vpop.f32.mrb[0].mxu0
  %v866 = vadd.f32 0.0, %v865
  %v867 = vpop.f32.mrb[0].mxu0
  %v868 = vpop.f32.mrb[0].mxu0
  %v869 = vadd.f32 0.0, %v868
  %v870 = vpop.f32.mrb[0].mxu0
  %871 = vdwg.mxu0
  %v872 = vld [vmem:[%s2] sm:$0x3]
  %v873 = vld [vmem:[%s2 + $0x2] sm:$0x3]
  %v874 = vld [vmem:[%s2 + $0x4] sm:$0x3]
  %v875 = vld [vmem:[%s2 + $0x6] sm:$0x3]
  %v876 = vld [vmem:[%s2 + $0x8] sm:$0x3]
  %v877 = vld [vmem:[%s2 + $0xa] sm:$0x3]
  %v878 = vld [vmem:[%s2 + $0xc] sm:$0x3]
  %v879 = vld [vmem:[%s2 + $0xe] sm:$0x3]
  %v880 = vld [vmem:[%s2 + $0x10] sm:$0x3]
  %v881 = vld [vmem:[%s2 + $0x12] sm:$0x3]
  %v882 = vld [vmem:[%s2 + $0x14] sm:$0x3]
  %v883 = vld [vmem:[%s2 + $0x16] sm:$0x3]
  %v884 = vld [vmem:[%s2 + $0x18] sm:$0x3]
  %v885 = vld [vmem:[%s2 + $0x1a] sm:$0x3]
  %v886 = vld [vmem:[%s2 + $0x1c] sm:$0x3]
  %v887 = vld [vmem:[%s2 + $0x1e] sm:$0x3]
  %v888 = vunpack.c.0.s8 %v872
  %v889 = vunpack.c.0.s8 %v873
  %v890 = vunpack.c.0.s8 %v874
  %v891 = vunpack.c.0.s8 %v875
  %v892 = vunpack.c.0.s8 %v876
  %v893 = vunpack.c.0.s8 %v877
  %v894 = vunpack.c.0.s8 %v878
  %v895 = vunpack.c.0.s8 %v879
  %v896 = vunpack.c.0.s8 %v880
  %v897 = vunpack.c.0.s8 %v881
  %v898 = vunpack.c.0.s8 %v882
  %v899 = vunpack.c.0.s8 %v883
  %v900 = vunpack.c.0.s8 %v884
  %v901 = vunpack.c.0.s8 %v885
  %v902 = vunpack.c.0.s8 %v886
  %v903 = vunpack.c.0.s8 %v887
  %v904 = vcvt.s32.f32 %v888
  %v905 = vcvt.s32.f32 %v889
  %v906 = vcvt.s32.f32 %v890
  %v907 = vcvt.s32.f32 %v891
  %v908 = vcvt.s32.f32 %v892
  %v909 = vcvt.s32.f32 %v893
  %v910 = vcvt.s32.f32 %v894
  %v911 = vcvt.s32.f32 %v895
  %v912 = vcvt.s32.f32 %v896
  %v913 = vcvt.s32.f32 %v897
  %v914 = vcvt.s32.f32 %v898
  %v915 = vcvt.s32.f32 %v899
  %v916 = vcvt.s32.f32 %v900
  %v917 = vcvt.s32.f32 %v901
  %v918 = vcvt.s32.f32 %v902
  %v919 = vcvt.s32.f32 %v903
  %vm920 = vcmp.gt.f32.partialorder %v904, 0.0
  %vm921 = vcmp.gt.f32.partialorder %v905, 0.0
  %vm922 = vcmp.gt.f32.partialorder %v906, 0.0
  %vm923 = vcmp.gt.f32.partialorder %v907, 0.0
  %vm924 = vcmp.gt.f32.partialorder %v908, 0.0
  %vm925 = vcmp.gt.f32.partialorder %v909, 0.0
  %vm926 = vcmp.gt.f32.partialorder %v910, 0.0
  %vm927 = vcmp.gt.f32.partialorder %v911, 0.0
  %vm928 = vcmp.gt.f32.partialorder %v912, 0.0
  %vm929 = vcmp.gt.f32.partialorder %v913, 0.0
  %vm930 = vcmp.gt.f32.partialorder %v914, 0.0
  %vm931 = vcmp.gt.f32.partialorder %v915, 0.0
  %vm932 = vcmp.gt.f32.partialorder %v916, 0.0
  %vm933 = vcmp.gt.f32.partialorder %v917, 0.0
  %vm934 = vcmp.gt.f32.partialorder %v918, 0.0
  %vm935 = vcmp.gt.f32.partialorder %v919, 0.0
  %937 = vset.pattern.permute.xlu0 2
  %938 = vperm.xlu0 %937, %v810
  %v939 = vpop.permute.xlu0 %938
  %942 = vset.pattern.permute.xlu0 2
  %943 = vperm.xlu0 %942, %v813
  %v944 = vpop.permute.xlu0 %943
  %947 = vset.pattern.permute.xlu0 2
  %948 = vperm.xlu0 %947, %v818
  %v949 = vpop.permute.xlu0 %948
  %952 = vset.pattern.permute.xlu0 2
  %953 = vperm.xlu0 %952, %v821
  %v954 = vpop.permute.xlu0 %953
  %957 = vset.pattern.permute.xlu0 2
  %958 = vperm.xlu0 %957, %v826
  %v959 = vpop.permute.xlu0 %958
  %962 = vset.pattern.permute.xlu0 2
  %963 = vperm.xlu0 %962, %v829
  %v964 = vpop.permute.xlu0 %963
  %967 = vset.pattern.permute.xlu0 2
  %968 = vperm.xlu0 %967, %v834
  %v969 = vpop.permute.xlu0 %968
  %972 = vset.pattern.permute.xlu0 2
  %973 = vperm.xlu0 %972, %v837
  %v974 = vpop.permute.xlu0 %973
  %977 = vset.pattern.permute.xlu0 2
  %978 = vperm.xlu0 %977, %v842
  %v979 = vpop.permute.xlu0 %978
  %982 = vset.pattern.permute.xlu0 2
  %983 = vperm.xlu0 %982, %v845
  %v984 = vpop.permute.xlu0 %983
  %987 = vset.pattern.permute.xlu0 2
  %988 = vperm.xlu0 %987, %v850
  %v989 = vpop.permute.xlu0 %988
  %992 = vset.pattern.permute.xlu0 2
  %993 = vperm.xlu0 %992, %v853
  %v994 = vpop.permute.xlu0 %993
  %997 = vset.pattern.permute.xlu0 2
  %998 = vperm.xlu0 %997, %v858
  %v999 = vpop.permute.xlu0 %998
  %1002 = vset.pattern.permute.xlu0 2
  %1003 = vperm.xlu0 %1002, %v861
  %v1004 = vpop.permute.xlu0 %1003
  %1007 = vset.pattern.permute.xlu0 2
  %1008 = vperm.xlu0 %1007, %v866
  %v1009 = vpop.permute.xlu0 %1008
  %1012 = vset.pattern.permute.xlu0 2
  %1013 = vperm.xlu0 %1012, %v869
  %v1014 = vpop.permute.xlu0 %1013
  %v1016 = vlaneseq
  %v1017 = vshrl.u32 %v1016, 7
  %v1018 = vsub.s32 0, %v1017
  %v1019 = vrot.slane %v663, %v1018
  %v1020 = vadd.f32 %v939, %v1019
  %v1021 = vadd.f32 %v944, %v1019
  %v1022 = vadd.f32 %v949, %v1019
  %v1023 = vadd.f32 %v954, %v1019
  %v1024 = vadd.f32 %v959, %v1019
  %v1025 = vadd.f32 %v964, %v1019
  %v1026 = vadd.f32 %v969, %v1019
  %v1027 = vadd.f32 %v974, %v1019
  %v1028 = vadd.f32 %v979, %v1019
  %v1029 = vadd.f32 %v984, %v1019
  %v1030 = vadd.f32 %v989, %v1019
  %v1031 = vadd.f32 %v994, %v1019
  %v1032 = vadd.f32 %v999, %v1019
  %v1033 = vadd.f32 %v1004, %v1019
  %v1034 = vadd.f32 %v1009, %v1019
  %v1035 = vadd.f32 %v1014, %v1019
  %v1036 = vmul.f32 %v1020, 0.2
  %v1037 = vmul.f32 %v1021, 0.2
  %v1038 = vmul.f32 %v1022, 0.2
  %v1039 = vmul.f32 %v1023, 0.2
  %v1040 = vmul.f32 %v1024, 0.2
  %v1041 = vmul.f32 %v1025, 0.2
  %v1042 = vmul.f32 %v1026, 0.2
  %v1043 = vmul.f32 %v1027, 0.2
  %v1044 = vmul.f32 %v1028, 0.2
  %v1045 = vmul.f32 %v1029, 0.2
  %v1046 = vmul.f32 %v1030, 0.2
  %v1047 = vmul.f32 %v1031, 0.2
  %v1048 = vmul.f32 %v1032, 0.2
  %v1049 = vmul.f32 %v1033, 0.2
  %v1050 = vmul.f32 %v1034, 0.2
  %v1051 = vmul.f32 %v1035, 0.2
  %v1052 = vmax.f32 %v1020, %v1036
  %v1053 = vmax.f32 %v1021, %v1037
  %v1054 = vmax.f32 %v1022, %v1038
  %v1055 = vmax.f32 %v1023, %v1039
  %v1056 = vmax.f32 %v1024, %v1040
  %v1057 = vmax.f32 %v1025, %v1041
  %v1058 = vmax.f32 %v1026, %v1042
  %v1059 = vmax.f32 %v1027, %v1043
  %v1060 = vmax.f32 %v1028, %v1044
  %v1061 = vmax.f32 %v1029, %v1045
  %v1062 = vmax.f32 %v1030, %v1046
  %v1063 = vmax.f32 %v1031, %v1047
  %v1064 = vmax.f32 %v1032, %v1048
  %v1065 = vmax.f32 %v1033, %v1049
  %v1066 = vmax.f32 %v1034, %v1050
  %v1067 = vmax.f32 %v1035, %v1051
  %v1068 = vsel %vm920, %v1052, -1e+30
  %v1069 = vsel %vm921, %v1053, -1e+30
  %v1070 = vsel %vm922, %v1054, -1e+30
  %v1071 = vsel %vm923, %v1055, -1e+30
  %v1072 = vsel %vm924, %v1056, -1e+30
  %v1073 = vsel %vm925, %v1057, -1e+30
  %v1074 = vsel %vm926, %v1058, -1e+30
  %v1075 = vsel %vm927, %v1059, -1e+30
  %v1076 = vsel %vm928, %v1060, -1e+30
  %v1077 = vsel %vm929, %v1061, -1e+30
  %v1078 = vsel %vm930, %v1062, -1e+30
  %v1079 = vsel %vm931, %v1063, -1e+30
  %v1080 = vsel %vm932, %v1064, -1e+30
  %v1081 = vsel %vm933, %v1065, -1e+30
  %v1082 = vsel %vm934, %v1066, -1e+30
  %v1083 = vsel %vm935, %v1067, -1e+30
  %1084 = vmax.xlane.f32.xlu0 %v1068
  %v1085 = vpop.xlane.xlu0 %1084
  %1086 = vmax.xlane.f32.xlu0 %v1069
  %v1087 = vpop.xlane.xlu0 %1086
  %1088 = vmax.xlane.f32.xlu0 %v1070
  %v1089 = vpop.xlane.xlu0 %1088
  %1090 = vmax.xlane.f32.xlu0 %v1071
  %v1091 = vpop.xlane.xlu0 %1090
  %1092 = vmax.xlane.f32.xlu0 %v1072
  %v1093 = vpop.xlane.xlu0 %1092
  %1094 = vmax.xlane.f32.xlu0 %v1073
  %v1095 = vpop.xlane.xlu0 %1094
  %1096 = vmax.xlane.f32.xlu0 %v1074
  %v1097 = vpop.xlane.xlu0 %1096
  %1098 = vmax.xlane.f32.xlu0 %v1075
  %v1099 = vpop.xlane.xlu0 %1098
  %1100 = vmax.xlane.f32.xlu0 %v1076
  %v1101 = vpop.xlane.xlu0 %1100
  %1102 = vmax.xlane.f32.xlu0 %v1077
  %v1103 = vpop.xlane.xlu0 %1102
  %1104 = vmax.xlane.f32.xlu0 %v1078
  %v1105 = vpop.xlane.xlu0 %1104
  %1106 = vmax.xlane.f32.xlu0 %v1079
  %v1107 = vpop.xlane.xlu0 %1106
  %1108 = vmax.xlane.f32.xlu0 %v1080
  %v1109 = vpop.xlane.xlu0 %1108
  %1110 = vmax.xlane.f32.xlu0 %v1081
  %v1111 = vpop.xlane.xlu0 %1110
  %1112 = vmax.xlane.f32.xlu0 %v1082
  %v1113 = vpop.xlane.xlu0 %1112
  %1114 = vmax.xlane.f32.xlu0 %v1083
  %v1115 = vpop.xlane.xlu0 %1114
  %v1116 = vsub.f32 %v1068, %v1085
  %v1117 = vsub.f32 %v1069, %v1087
  %v1118 = vsub.f32 %v1070, %v1089
  %v1119 = vsub.f32 %v1071, %v1091
  %v1120 = vsub.f32 %v1072, %v1093
  %v1121 = vsub.f32 %v1073, %v1095
  %v1122 = vsub.f32 %v1074, %v1097
  %v1123 = vsub.f32 %v1075, %v1099
  %v1124 = vsub.f32 %v1076, %v1101
  %v1125 = vsub.f32 %v1077, %v1103
  %v1126 = vsub.f32 %v1078, %v1105
  %v1127 = vsub.f32 %v1079, %v1107
  %v1128 = vsub.f32 %v1080, %v1109
  %v1129 = vsub.f32 %v1081, %v1111
  %v1130 = vsub.f32 %v1082, %v1113
  %v1131 = vsub.f32 %v1083, %v1115
  %v1132 = vmul.f32 %v1116, 1.442695
  %v1133 = vpow.pop %v1132
  %v1134 = vmul.f32 %v1117, 1.442695
  %v1135 = vpow.pop %v1134
  %v1136 = vmul.f32 %v1118, 1.442695
  %v1137 = vpow.pop %v1136
  %v1138 = vmul.f32 %v1119, 1.442695
  %v1139 = vpow.pop %v1138
  %v1140 = vmul.f32 %v1120, 1.442695
  %v1141 = vpow.pop %v1140
  %v1142 = vmul.f32 %v1121, 1.442695
  %v1143 = vpow.pop %v1142
  %v1144 = vmul.f32 %v1122, 1.442695
  %v1145 = vpow.pop %v1144
  %v1146 = vmul.f32 %v1123, 1.442695
  %v1147 = vpow.pop %v1146
  %v1148 = vmul.f32 %v1124, 1.442695
  %v1149 = vpow.pop %v1148
  %v1150 = vmul.f32 %v1125, 1.442695
  %v1151 = vpow.pop %v1150
  %v1152 = vmul.f32 %v1126, 1.442695
  %v1153 = vpow.pop %v1152
  %v1154 = vmul.f32 %v1127, 1.442695
  %v1155 = vpow.pop %v1154
  %v1156 = vmul.f32 %v1128, 1.442695
  %v1157 = vpow.pop %v1156
  %v1158 = vmul.f32 %v1129, 1.442695
  %v1159 = vpow.pop %v1158
  %v1160 = vmul.f32 %v1130, 1.442695
  %v1161 = vpow.pop %v1160
  %v1162 = vmul.f32 %v1131, 1.442695
  %v1163 = vpow.pop %v1162
  %1164 = vadd.xlane.f32.xlu0 %v1133
  %v1165 = vpop.xlane.xlu0 %1164
  %1166 = vadd.xlane.f32.xlu0 %v1135
  %v1167 = vpop.xlane.xlu0 %1166
  %1168 = vadd.xlane.f32.xlu0 %v1137
  %v1169 = vpop.xlane.xlu0 %1168
  %1170 = vadd.xlane.f32.xlu0 %v1139
  %v1171 = vpop.xlane.xlu0 %1170
  %1172 = vadd.xlane.f32.xlu0 %v1141
  %v1173 = vpop.xlane.xlu0 %1172
  %1174 = vadd.xlane.f32.xlu0 %v1143
  %v1175 = vpop.xlane.xlu0 %1174
  %1176 = vadd.xlane.f32.xlu0 %v1145
  %v1177 = vpop.xlane.xlu0 %1176
  %1178 = vadd.xlane.f32.xlu0 %v1147
  %v1179 = vpop.xlane.xlu0 %1178
  %1180 = vadd.xlane.f32.xlu0 %v1149
  %v1181 = vpop.xlane.xlu0 %1180
  %1182 = vadd.xlane.f32.xlu0 %v1151
  %v1183 = vpop.xlane.xlu0 %1182
  %1184 = vadd.xlane.f32.xlu0 %v1153
  %v1185 = vpop.xlane.xlu0 %1184
  %1186 = vadd.xlane.f32.xlu0 %v1155
  %v1187 = vpop.xlane.xlu0 %1186
  %1188 = vadd.xlane.f32.xlu0 %v1157
  %v1189 = vpop.xlane.xlu0 %1188
  %1190 = vadd.xlane.f32.xlu0 %v1159
  %v1191 = vpop.xlane.xlu0 %1190
  %1192 = vadd.xlane.f32.xlu0 %v1161
  %v1193 = vpop.xlane.xlu0 %1192
  %1194 = vadd.xlane.f32.xlu0 %v1163
  %v1195 = vpop.xlane.xlu0 %1194
  %v1196 = vrcp.pop %v1165
  %v1197 = vrcp.pop %v1167
  %v1198 = vrcp.pop %v1169
  %v1199 = vrcp.pop %v1171
  %v1200 = vrcp.pop %v1173
  %v1201 = vrcp.pop %v1175
  %v1202 = vrcp.pop %v1177
  %v1203 = vrcp.pop %v1179
  %v1204 = vrcp.pop %v1181
  %v1205 = vrcp.pop %v1183
  %v1206 = vrcp.pop %v1185
  %v1207 = vrcp.pop %v1187
  %v1208 = vrcp.pop %v1189
  %v1209 = vrcp.pop %v1191
  %v1210 = vrcp.pop %v1193
  %v1211 = vrcp.pop %v1195
  %v1212 = vmul.f32 %v1133, %v1196
  %v1213 = vmul.f32 %v1135, %v1197
  %v1214 = vmul.f32 %v1137, %v1198
  %v1215 = vmul.f32 %v1139, %v1199
  %v1216 = vmul.f32 %v1141, %v1200
  %v1217 = vmul.f32 %v1143, %v1201
  %v1218 = vmul.f32 %v1145, %v1202
  %v1219 = vmul.f32 %v1147, %v1203
  %v1220 = vmul.f32 %v1149, %v1204
  %v1221 = vmul.f32 %v1151, %v1205
  %v1222 = vmul.f32 %v1153, %v1206
  %v1223 = vmul.f32 %v1155, %v1207
  %v1224 = vmul.f32 %v1157, %v1208
  %v1225 = vmul.f32 %v1159, %v1209
  %v1226 = vmul.f32 %v1161, %v1210
  %v1227 = vmul.f32 %v1163, %v1211
  %v1228 = vpack.c.bf16 %v1213, %v1212
  %v1229 = vpack.c.bf16 %v1215, %v1214
  %v1230 = vpack.c.bf16 %v1217, %v1216
  %v1231 = vpack.c.bf16 %v1219, %v1218
  %v1232 = vpack.c.bf16 %v1221, %v1220
  %v1233 = vpack.c.bf16 %v1223, %v1222
  %v1234 = vpack.c.bf16 %v1225, %v1224
  %v1235 = vpack.c.bf16 %v1227, %v1226
  %v1236 = vpack.c.bf16 %v476, %v472
  %v1237 = vpack.c.bf16 %v486, %v482
  %v1238 = vpack.c.bf16 %v496, %v492
  %v1239 = vpack.c.bf16 %v506, %v502
  %v1240 = vpack.c.bf16 %v516, %v512
  %v1241 = vpack.c.bf16 %v526, %v522
  %v1242 = vpack.c.bf16 %v536, %v532
  %v1243 = vpack.c.bf16 %v546, %v542
  %1244 = vset.pattern.permute.xlu0 3
  %1245 = vperm.xlu0 %1244, %v810
  %v1246 = vpop.permute.xlu0 %1245
  %1248 = vset.pattern.permute.xlu0 3
  %1249 = vperm.xlu0 %1248, %v813
  %v1250 = vpop.permute.xlu0 %1249
  %1252 = vset.pattern.permute.xlu0 3
  %1253 = vperm.xlu0 %1252, %v818
  %v1254 = vpop.permute.xlu0 %1253
  %1256 = vset.pattern.permute.xlu0 3
  %1257 = vperm.xlu0 %1256, %v821
  %v1258 = vpop.permute.xlu0 %1257
  %1260 = vset.pattern.permute.xlu0 3
  %1261 = vperm.xlu0 %1260, %v826
  %v1262 = vpop.permute.xlu0 %1261
  %1264 = vset.pattern.permute.xlu0 3
  %1265 = vperm.xlu0 %1264, %v829
  %v1266 = vpop.permute.xlu0 %1265
  %1268 = vset.pattern.permute.xlu0 3
  %1269 = vperm.xlu0 %1268, %v834
  %v1270 = vpop.permute.xlu0 %1269
  %1272 = vset.pattern.permute.xlu0 3
  %1273 = vperm.xlu0 %1272, %v837
  %v1274 = vpop.permute.xlu0 %1273
  %1276 = vset.pattern.permute.xlu0 3
  %1277 = vperm.xlu0 %1276, %v842
  %v1278 = vpop.permute.xlu0 %1277
  %1280 = vset.pattern.permute.xlu0 3
  %1281 = vperm.xlu0 %1280, %v845
  %v1282 = vpop.permute.xlu0 %1281
  %1284 = vset.pattern.permute.xlu0 3
  %1285 = vperm.xlu0 %1284, %v850
  %v1286 = vpop.permute.xlu0 %1285
  %1288 = vset.pattern.permute.xlu0 3
  %1289 = vperm.xlu0 %1288, %v853
  %v1290 = vpop.permute.xlu0 %1289
  %1292 = vset.pattern.permute.xlu0 3
  %1293 = vperm.xlu0 %1292, %v858
  %v1294 = vpop.permute.xlu0 %1293
  %1296 = vset.pattern.permute.xlu0 3
  %1297 = vperm.xlu0 %1296, %v861
  %v1298 = vpop.permute.xlu0 %1297
  %1300 = vset.pattern.permute.xlu0 3
  %1301 = vperm.xlu0 %1300, %v866
  %v1302 = vpop.permute.xlu0 %1301
  %1304 = vset.pattern.permute.xlu0 3
  %1305 = vperm.xlu0 %1304, %v869
  %v1306 = vpop.permute.xlu0 %1305
  %v1308 = vlaneseq
  %v1309 = vshrl.u32 %v1308, 7
  %v1310 = vsub.s32 1, %v1309
  %v1311 = vrot.slane %v663, %v1310
  %v1312 = vadd.f32 %v1246, %v1311
  %v1313 = vadd.f32 %v1250, %v1311
  %v1314 = vadd.f32 %v1254, %v1311
  %v1315 = vadd.f32 %v1258, %v1311
  %v1316 = vadd.f32 %v1262, %v1311
  %v1317 = vadd.f32 %v1266, %v1311
  %v1318 = vadd.f32 %v1270, %v1311
  %v1319 = vadd.f32 %v1274, %v1311
  %v1320 = vadd.f32 %v1278, %v1311
  %v1321 = vadd.f32 %v1282, %v1311
  %v1322 = vadd.f32 %v1286, %v1311
  %v1323 = vadd.f32 %v1290, %v1311
  %v1324 = vadd.f32 %v1294, %v1311
  %v1325 = vadd.f32 %v1298, %v1311
  %v1326 = vadd.f32 %v1302, %v1311
  %v1327 = vadd.f32 %v1306, %v1311
  %v1328 = vmul.f32 %v1312, 0.2
  %v1329 = vmul.f32 %v1313, 0.2
  %v1330 = vmul.f32 %v1314, 0.2
  %v1331 = vmul.f32 %v1315, 0.2
  %v1332 = vmul.f32 %v1316, 0.2
  %v1333 = vmul.f32 %v1317, 0.2
  %v1334 = vmul.f32 %v1318, 0.2
  %v1335 = vmul.f32 %v1319, 0.2
  %v1336 = vmul.f32 %v1320, 0.2
  %v1337 = vmul.f32 %v1321, 0.2
  %v1338 = vmul.f32 %v1322, 0.2
  %v1339 = vmul.f32 %v1323, 0.2
  %v1340 = vmul.f32 %v1324, 0.2
  %v1341 = vmul.f32 %v1325, 0.2
  %v1342 = vmul.f32 %v1326, 0.2
  %v1343 = vmul.f32 %v1327, 0.2
  %v1344 = vmax.f32 %v1312, %v1328
  %v1345 = vmax.f32 %v1313, %v1329
  %v1346 = vmax.f32 %v1314, %v1330
  %v1347 = vmax.f32 %v1315, %v1331
  %v1348 = vmax.f32 %v1316, %v1332
  %v1349 = vmax.f32 %v1317, %v1333
  %v1350 = vmax.f32 %v1318, %v1334
  %v1351 = vmax.f32 %v1319, %v1335
  %v1352 = vmax.f32 %v1320, %v1336
  %v1353 = vmax.f32 %v1321, %v1337
  %v1354 = vmax.f32 %v1322, %v1338
  %v1355 = vmax.f32 %v1323, %v1339
  %v1356 = vmax.f32 %v1324, %v1340
  %v1357 = vmax.f32 %v1325, %v1341
  %v1358 = vmax.f32 %v1326, %v1342
  %v1359 = vmax.f32 %v1327, %v1343
  %v1360 = vsel %vm920, %v1344, -1e+30
  %v1361 = vsel %vm921, %v1345, -1e+30
  %v1362 = vsel %vm922, %v1346, -1e+30
  %v1363 = vsel %vm923, %v1347, -1e+30
  %v1364 = vsel %vm924, %v1348, -1e+30
  %v1365 = vsel %vm925, %v1349, -1e+30
  %v1366 = vsel %vm926, %v1350, -1e+30
  %v1367 = vsel %vm927, %v1351, -1e+30
  %v1368 = vsel %vm928, %v1352, -1e+30
  %v1369 = vsel %vm929, %v1353, -1e+30
  %v1370 = vsel %vm930, %v1354, -1e+30
  %v1371 = vsel %vm931, %v1355, -1e+30
  %v1372 = vsel %vm932, %v1356, -1e+30
  %v1373 = vsel %vm933, %v1357, -1e+30
  %v1374 = vsel %vm934, %v1358, -1e+30
  %v1375 = vsel %vm935, %v1359, -1e+30
  %1376 = vmax.xlane.f32.xlu0 %v1360
  %v1377 = vpop.xlane.xlu0 %1376
  %1378 = vmax.xlane.f32.xlu0 %v1361
  %v1379 = vpop.xlane.xlu0 %1378
  %1380 = vmax.xlane.f32.xlu0 %v1362
  %v1381 = vpop.xlane.xlu0 %1380
  %1382 = vmax.xlane.f32.xlu0 %v1363
  %v1383 = vpop.xlane.xlu0 %1382
  %1384 = vmax.xlane.f32.xlu0 %v1364
  %v1385 = vpop.xlane.xlu0 %1384
  %1386 = vmax.xlane.f32.xlu0 %v1365
  %v1387 = vpop.xlane.xlu0 %1386
  %1388 = vmax.xlane.f32.xlu0 %v1366
  %v1389 = vpop.xlane.xlu0 %1388
  %1390 = vmax.xlane.f32.xlu0 %v1367
  %v1391 = vpop.xlane.xlu0 %1390
  %1392 = vmax.xlane.f32.xlu0 %v1368
  %v1393 = vpop.xlane.xlu0 %1392
  %1394 = vmax.xlane.f32.xlu0 %v1369
  %v1395 = vpop.xlane.xlu0 %1394
  %1396 = vmax.xlane.f32.xlu0 %v1370
  %v1397 = vpop.xlane.xlu0 %1396
  %1398 = vmax.xlane.f32.xlu0 %v1371
  %v1399 = vpop.xlane.xlu0 %1398
  %1400 = vmax.xlane.f32.xlu0 %v1372
  %v1401 = vpop.xlane.xlu0 %1400
  %1402 = vmax.xlane.f32.xlu0 %v1373
  %v1403 = vpop.xlane.xlu0 %1402
  %1404 = vmax.xlane.f32.xlu0 %v1374
  %v1405 = vpop.xlane.xlu0 %1404
  %1406 = vmax.xlane.f32.xlu0 %v1375
  %v1407 = vpop.xlane.xlu0 %1406
  %v1408 = vsub.f32 %v1360, %v1377
  %v1409 = vsub.f32 %v1361, %v1379
  %v1410 = vsub.f32 %v1362, %v1381
  %v1411 = vsub.f32 %v1363, %v1383
  %v1412 = vsub.f32 %v1364, %v1385
  %v1413 = vsub.f32 %v1365, %v1387
  %v1414 = vsub.f32 %v1366, %v1389
  %v1415 = vsub.f32 %v1367, %v1391
  %v1416 = vsub.f32 %v1368, %v1393
  %v1417 = vsub.f32 %v1369, %v1395
  %v1418 = vsub.f32 %v1370, %v1397
  %v1419 = vsub.f32 %v1371, %v1399
  %v1420 = vsub.f32 %v1372, %v1401
  %v1421 = vsub.f32 %v1373, %v1403
  %v1422 = vsub.f32 %v1374, %v1405
  %v1423 = vsub.f32 %v1375, %v1407
  %v1424 = vmul.f32 %v1408, 1.442695
  %v1425 = vpow.pop %v1424
  %v1426 = vmul.f32 %v1409, 1.442695
  %v1427 = vpow.pop %v1426
  %v1428 = vmul.f32 %v1410, 1.442695
  %v1429 = vpow.pop %v1428
  %v1430 = vmul.f32 %v1411, 1.442695
  %v1431 = vpow.pop %v1430
  %v1432 = vmul.f32 %v1412, 1.442695
  %v1433 = vpow.pop %v1432
  %v1434 = vmul.f32 %v1413, 1.442695
  %v1435 = vpow.pop %v1434
  %v1436 = vmul.f32 %v1414, 1.442695
  %v1437 = vpow.pop %v1436
  %v1438 = vmul.f32 %v1415, 1.442695
  %v1439 = vpow.pop %v1438
  %v1440 = vmul.f32 %v1416, 1.442695
  %v1441 = vpow.pop %v1440
  %v1442 = vmul.f32 %v1417, 1.442695
  %v1443 = vpow.pop %v1442
  %v1444 = vmul.f32 %v1418, 1.442695
  %v1445 = vpow.pop %v1444
  %v1446 = vmul.f32 %v1419, 1.442695
  %v1447 = vpow.pop %v1446
  %v1448 = vmul.f32 %v1420, 1.442695
  %v1449 = vpow.pop %v1448
  %v1450 = vmul.f32 %v1421, 1.442695
  %v1451 = vpow.pop %v1450
  %v1452 = vmul.f32 %v1422, 1.442695
  %v1453 = vpow.pop %v1452
  %v1454 = vmul.f32 %v1423, 1.442695
  %v1455 = vpow.pop %v1454
  %1456 = vadd.xlane.f32.xlu0 %v1425
  %v1457 = vpop.xlane.xlu0 %1456
  %1458 = vadd.xlane.f32.xlu0 %v1427
  %v1459 = vpop.xlane.xlu0 %1458
  %1460 = vadd.xlane.f32.xlu0 %v1429
  %v1461 = vpop.xlane.xlu0 %1460
  %1462 = vadd.xlane.f32.xlu0 %v1431
  %v1463 = vpop.xlane.xlu0 %1462
  %1464 = vadd.xlane.f32.xlu0 %v1433
  %v1465 = vpop.xlane.xlu0 %1464
  %1466 = vadd.xlane.f32.xlu0 %v1435
  %v1467 = vpop.xlane.xlu0 %1466
  %1468 = vadd.xlane.f32.xlu0 %v1437
  %v1469 = vpop.xlane.xlu0 %1468
  %1470 = vadd.xlane.f32.xlu0 %v1439
  %v1471 = vpop.xlane.xlu0 %1470
  %1472 = vadd.xlane.f32.xlu0 %v1441
  %v1473 = vpop.xlane.xlu0 %1472
  %1474 = vadd.xlane.f32.xlu0 %v1443
  %v1475 = vpop.xlane.xlu0 %1474
  %1476 = vadd.xlane.f32.xlu0 %v1445
  %v1477 = vpop.xlane.xlu0 %1476
  %1478 = vadd.xlane.f32.xlu0 %v1447
  %v1479 = vpop.xlane.xlu0 %1478
  %1480 = vadd.xlane.f32.xlu0 %v1449
  %v1481 = vpop.xlane.xlu0 %1480
  %1482 = vadd.xlane.f32.xlu0 %v1451
  %v1483 = vpop.xlane.xlu0 %1482
  %1484 = vadd.xlane.f32.xlu0 %v1453
  %v1485 = vpop.xlane.xlu0 %1484
  %1486 = vadd.xlane.f32.xlu0 %v1455
  %v1487 = vpop.xlane.xlu0 %1486
  %v1488 = vrcp.pop %v1457
  %v1489 = vrcp.pop %v1459
  %v1490 = vrcp.pop %v1461
  %v1491 = vrcp.pop %v1463
  %v1492 = vrcp.pop %v1465
  %v1493 = vrcp.pop %v1467
  %v1494 = vrcp.pop %v1469
  %v1495 = vrcp.pop %v1471
  %v1496 = vrcp.pop %v1473
  %v1497 = vrcp.pop %v1475
  %v1498 = vrcp.pop %v1477
  %v1499 = vrcp.pop %v1479
  %v1500 = vrcp.pop %v1481
  %v1501 = vrcp.pop %v1483
  %v1502 = vrcp.pop %v1485
  %v1503 = vrcp.pop %v1487
  %v1504 = vmul.f32 %v1425, %v1488
  %v1505 = vmul.f32 %v1427, %v1489
  %v1506 = vmul.f32 %v1429, %v1490
  %v1507 = vmul.f32 %v1431, %v1491
  %v1508 = vmul.f32 %v1433, %v1492
  %v1509 = vmul.f32 %v1435, %v1493
  %v1510 = vmul.f32 %v1437, %v1494
  %v1511 = vmul.f32 %v1439, %v1495
  %v1512 = vmul.f32 %v1441, %v1496
  %v1513 = vmul.f32 %v1443, %v1497
  %v1514 = vmul.f32 %v1445, %v1498
  %v1515 = vmul.f32 %v1447, %v1499
  %v1516 = vmul.f32 %v1449, %v1500
  %v1517 = vmul.f32 %v1451, %v1501
  %v1518 = vmul.f32 %v1453, %v1502
  %v1519 = vmul.f32 %v1455, %v1503
  %v1520 = vpack.c.bf16 %v1505, %v1504
  %v1521 = vpack.c.bf16 %v1507, %v1506
  %v1522 = vpack.c.bf16 %v1509, %v1508
  %v1523 = vpack.c.bf16 %v1511, %v1510
  %v1524 = vpack.c.bf16 %v1513, %v1512
  %v1525 = vpack.c.bf16 %v1515, %v1514
  %v1526 = vpack.c.bf16 %v1517, %v1516
  %v1527 = vpack.c.bf16 %v1519, %v1518
  %v1528 = vpack.c.bf16 %v478, %v474
  %v1529 = vpack.c.bf16 %v488, %v484
  %v1530 = vpack.c.bf16 %v498, %v494
  %v1531 = vpack.c.bf16 %v508, %v504
  %v1532 = vpack.c.bf16 %v518, %v514
  %v1533 = vpack.c.bf16 %v528, %v524
  %v1534 = vpack.c.bf16 %v538, %v534
  %v1535 = vpack.c.bf16 %v548, %v544
  %1536 = vmatprep.subr.bf16.mxu0 0
  %1537 = vmatpush1.bf16.msra.mxu0 %v1528
  %1538 = vmatprep.subr.bf16.mxu0 0
  %1539 = vmatpush1.bf16.msra.mxu0 %v1529
  %1540 = vmatprep.subr.bf16.mxu0 0
  %1541 = vmatpush1.bf16.msra.mxu0 %v1530
  %1542 = vmatprep.subr.bf16.mxu0 0
  %1543 = vmatpush1.bf16.msra.mxu0 %v1531
  %1544 = vmatprep.subr.bf16.mxu0 0
  %1545 = vmatpush1.bf16.msra.mxu0 %v1532
  %1546 = vmatprep.subr.bf16.mxu0 0
  %1547 = vmatpush1.bf16.msra.mxu0 %v1533
  %1548 = vmatprep.subr.bf16.mxu0 0
  %1549 = vmatpush1.bf16.msra.mxu0 %v1534
  %1550 = vmatprep.subr.bf16.mxu0 0
  %1551 = vmatpush1.bf16.msra.mxu0 %v1535
  %1552 = vmatprep.subr.bf16.mxu0 0
  %1553 = vmatpush1.bf16.msra.mxu0 0
  %1554 = vmatprep.subr.bf16.mxu0 0
  %1555 = vmatpush1.bf16.msra.mxu0 0
  %1556 = vmatprep.subr.bf16.mxu0 0
  %1557 = vmatpush1.bf16.msra.mxu0 0
  %1558 = vmatprep.subr.bf16.mxu0 0
  %1559 = vmatpush1.bf16.msra.mxu0 0
  %1560 = vmatprep.subr.bf16.mxu0 0
  %1561 = vmatpush1.bf16.msra.mxu0 0
  %1562 = vmatprep.subr.bf16.mxu0 0
  %1563 = vmatpush1.bf16.msra.mxu0 0
  %1564 = vmatprep.subr.bf16.mxu0 0
  %1565 = vmatpush1.bf16.msra.mxu0 0
  %1566 = vmatprep.subr.bf16.mxu0 0
  %1567 = vmatpush1.bf16.msra.mxu0 0
  %1568 = vmatprep.mubr.bf16.mxu0 0
  %1569 = vmatmul.mubr.bf16.gmra.mrb[0].mxu0 %v1520
  %v1570 = vpop.f32.mrb[0].mxu0
  %v1571 = vadd.f32 0.0, %v1570
  %v1572 = vpop.f32.mrb[0].mxu0
  %v1573 = vpop.f32.mrb[0].mxu0
  %v1574 = vadd.f32 0.0, %v1573
  %v1575 = vpop.f32.mrb[0].mxu0
  %1576 = vmatprep.mubr.bf16.mxu0 0
  %1577 = vmatmul.mubr.bf16.gmra.mrb[0].mxu0 %v1521
  %v1578 = vpop.f32.mrb[0].mxu0
  %v1579 = vadd.f32 0.0, %v1578
  %v1580 = vpop.f32.mrb[0].mxu0
  %v1581 = vpop.f32.mrb[0].mxu0
  %v1582 = vadd.f32 0.0, %v1581
  %v1583 = vpop.f32.mrb[0].mxu0
  %1584 = vmatprep.mubr.bf16.mxu0 0
  %1585 = vmatmul.mubr.bf16.gmra.mrb[0].mxu0 %v1522
  %v1586 = vpop.f32.mrb[0].mxu0
  %v1587 = vadd.f32 0.0, %v1586
  %v1588 = vpop.f32.mrb[0].mxu0
  %v1589 = vpop.f32.mrb[0].mxu0
  %v1590 = vadd.f32 0.0, %v1589
  %v1591 = vpop.f32.mrb[0].mxu0
  %1592 = vmatprep.mubr.bf16.mxu0 0
  %1593 = vmatmul.mubr.bf16.gmra.mrb[0].mxu0 %v1523
  %v1594 = vpop.f32.mrb[0].mxu0
  %v1595 = vadd.f32 0.0, %v1594
  %v1596 = vpop.f32.mrb[0].mxu0
  %v1597 = vpop.f32.mrb[0].mxu0
  %v1598 = vadd.f32 0.0, %v1597
  %v1599 = vpop.f32.mrb[0].mxu0
  %1600 = vmatprep.mubr.bf16.mxu0 0
  %1601 = vmatmul.mubr.bf16.gmra.mrb[0].mxu0 %v1524
  %v1602 = vpop.f32.mrb[0].mxu0
  %v1603 = vadd.f32 0.0, %v1602
  %v1604 = vpop.f32.mrb[0].mxu0
  %v1605 = vpop.f32.mrb[0].mxu0
  %v1606 = vadd.f32 0.0, %v1605
  %v1607 = vpop.f32.mrb[0].mxu0
  %1608 = vmatprep.mubr.bf16.mxu0 0
  %1609 = vmatmul.mubr.bf16.gmra.mrb[0].mxu0 %v1525
  %v1610 = vpop.f32.mrb[0].mxu0
  %v1611 = vadd.f32 0.0, %v1610
  %v1612 = vpop.f32.mrb[0].mxu0
  %v1613 = vpop.f32.mrb[0].mxu0
  %v1614 = vadd.f32 0.0, %v1613
  %v1615 = vpop.f32.mrb[0].mxu0
  %1616 = vmatprep.mubr.bf16.mxu0 0
  %1617 = vmatmul.mubr.bf16.gmra.mrb[0].mxu0 %v1526
  %v1618 = vpop.f32.mrb[0].mxu0
  %v1619 = vadd.f32 0.0, %v1618
  %v1620 = vpop.f32.mrb[0].mxu0
  %v1621 = vpop.f32.mrb[0].mxu0
  %v1622 = vadd.f32 0.0, %v1621
  %v1623 = vpop.f32.mrb[0].mxu0
  %1624 = vmatprep.mubr.bf16.mxu0 0
  %1625 = vmatmul.mubr.bf16.gmra.mrb[0].mxu0 %v1527
  %v1626 = vpop.f32.mrb[0].mxu0
  %v1627 = vadd.f32 0.0, %v1626
  %v1628 = vpop.f32.mrb[0].mxu0
  %v1629 = vpop.f32.mrb[0].mxu0
  %v1630 = vadd.f32 0.0, %v1629
  %v1631 = vpop.f32.mrb[0].mxu0
  %1632 = vdwg.mxu0
  %1633 = vmatprep.subr.bf16.mxu0 0
  %1634 = vmatpush1.bf16.msra.mxu0 %v1236
  %1635 = vmatprep.subr.bf16.mxu0 0
  %1636 = vmatpush1.bf16.msra.mxu0 %v1237
  %1637 = vmatprep.subr.bf16.mxu0 0
  %1638 = vmatpush1.bf16.msra.mxu0 %v1238
  %1639 = vmatprep.subr.bf16.mxu0 0
  %1640 = vmatpush1.bf16.msra.mxu0 %v1239
  %1641 = vmatprep.subr.bf16.mxu0 0
  %1642 = vmatpush1.bf16.msra.mxu0 %v1240
  %1643 = vmatprep.subr.bf16.mxu0 0
  %1644 = vmatpush1.bf16.msra.mxu0 %v1241
  %1645 = vmatprep.subr.bf16.mxu0 0
  %1646 = vmatpush1.bf16.msra.mxu0 %v1242
  %1647 = vmatprep.subr.bf16.mxu0 0
  %1648 = vmatpush1.bf16.msra.mxu0 %v1243
  %1649 = vmatprep.subr.bf16.mxu0 0
  %1650 = vmatpush1.bf16.msra.mxu0 0
  %1651 = vmatprep.subr.bf16.mxu0 0
  %1652 = vmatpush1.bf16.msra.mxu0 0
  %1653 = vmatprep.subr.bf16.mxu0 0
  %1654 = vmatpush1.bf16.msra.mxu0 0
  %1655 = vmatprep.subr.bf16.mxu0 0
  %1656 = vmatpush1.bf16.msra.mxu0 0
  %1657 = vmatprep.subr.bf16.mxu0 0
  %1658 = vmatpush1.bf16.msra.mxu0 0
  %1659 = vmatprep.subr.bf16.mxu0 0
  %1660 = vmatpush1.bf16.msra.mxu0 0
  %1661 = vmatprep.subr.bf16.mxu0 0
  %1662 = vmatpush1.bf16.msra.mxu0 0
  %1663 = vmatprep.subr.bf16.mxu0 0
  %1664 = vmatpush1.bf16.msra.mxu0 0
  %1665 = vmatprep.mubr.bf16.mxu0 0
  %1666 = vmatmul.mubr.bf16.gmra.mrb[0].mxu0 %v1228
  %v1667 = vpop.f32.mrb[0].mxu0
  %v1668 = vadd.f32 %v1571, %v1667
  %v1669 = vpop.f32.mrb[0].mxu0
  %v1670 = vpop.f32.mrb[0].mxu0
  %v1671 = vadd.f32 %v1574, %v1670
  %v1672 = vpop.f32.mrb[0].mxu0
  %1673 = vmatprep.mubr.bf16.mxu0 0
  %1674 = vmatmul.mubr.bf16.gmra.mrb[0].mxu0 %v1229
  %v1675 = vpop.f32.mrb[0].mxu0
  %v1676 = vadd.f32 %v1579, %v1675
  %v1677 = vpop.f32.mrb[0].mxu0
  %v1678 = vpop.f32.mrb[0].mxu0
  %v1679 = vadd.f32 %v1582, %v1678
  %v1680 = vpop.f32.mrb[0].mxu0
  %1681 = vmatprep.mubr.bf16.mxu0 0
  %1682 = vmatmul.mubr.bf16.gmra.mrb[0].mxu0 %v1230
  %v1683 = vpop.f32.mrb[0].mxu0
  %v1684 = vadd.f32 %v1587, %v1683
  %v1685 = vpop.f32.mrb[0].mxu0
  %v1686 = vpop.f32.mrb[0].mxu0
  %v1687 = vadd.f32 %v1590, %v1686
  %v1688 = vpop.f32.mrb[0].mxu0
  %1689 = vmatprep.mubr.bf16.mxu0 0
  %1690 = vmatmul.mubr.bf16.gmra.mrb[0].mxu0 %v1231
  %v1691 = vpop.f32.mrb[0].mxu0
  %v1692 = vadd.f32 %v1595, %v1691
  %v1693 = vpop.f32.mrb[0].mxu0
  %v1694 = vpop.f32.mrb[0].mxu0
  %v1695 = vadd.f32 %v1598, %v1694
  %v1696 = vpop.f32.mrb[0].mxu0
  %1697 = vmatprep.mubr.bf16.mxu0 0
  %1698 = vmatmul.mubr.bf16.gmra.mrb[0].mxu0 %v1232
  %v1699 = vpop.f32.mrb[0].mxu0
  %v1700 = vadd.f32 %v1603, %v1699
  %v1701 = vpop.f32.mrb[0].mxu0
  %v1702 = vpop.f32.mrb[0].mxu0
  %v1703 = vadd.f32 %v1606, %v1702
  %v1704 = vpop.f32.mrb[0].mxu0
  %1705 = vmatprep.mubr.bf16.mxu0 0
  %1706 = vmatmul.mubr.bf16.gmra.mrb[0].mxu0 %v1233
  %v1707 = vpop.f32.mrb[0].mxu0
  %v1708 = vadd.f32 %v1611, %v1707
  %v1709 = vpop.f32.mrb[0].mxu0
  %v1710 = vpop.f32.mrb[0].mxu0
  %v1711 = vadd.f32 %v1614, %v1710
  %v1712 = vpop.f32.mrb[0].mxu0
  %1713 = vmatprep.mubr.bf16.mxu0 0
  %1714 = vmatmul.mubr.bf16.gmra.mrb[0].mxu0 %v1234
  %v1715 = vpop.f32.mrb[0].mxu0
  %v1716 = vadd.f32 %v1619, %v1715
  %v1717 = vpop.f32.mrb[0].mxu0
  %v1718 = vpop.f32.mrb[0].mxu0
  %v1719 = vadd.f32 %v1622, %v1718
  %v1720 = vpop.f32.mrb[0].mxu0
  %1721 = vmatprep.mubr.bf16.mxu0 0
  %1722 = vmatmul.mubr.bf16.gmra.mrb[0].mxu0 %v1235
  %v1723 = vpop.f32.mrb[0].mxu0
  %v1724 = vadd.f32 %v1627, %v1723
  %v1725 = vpop.f32.mrb[0].mxu0
  %v1726 = vpop.f32.mrb[0].mxu0
  %v1727 = vadd.f32 %v1630, %v1726
  %v1728 = vpop.f32.mrb[0].mxu0
  %1729 = vdwg.mxu0
  %v1730 = vmul.f32 %v1668, 0.5
  %v1731 = vmul.f32 %v1671, 0.5
  %v1732 = vmul.f32 %v1676, 0.5
  %v1733 = vmul.f32 %v1679, 0.5
  %v1734 = vmul.f32 %v1684, 0.5
  %v1735 = vmul.f32 %v1687, 0.5
  %v1736 = vmul.f32 %v1692, 0.5
  %v1737 = vmul.f32 %v1695, 0.5
  %v1738 = vmul.f32 %v1700, 0.5
  %v1739 = vmul.f32 %v1703, 0.5
  %v1740 = vmul.f32 %v1708, 0.5
  %v1741 = vmul.f32 %v1711, 0.5
  %v1742 = vmul.f32 %v1716, 0.5
  %v1743 = vmul.f32 %v1719, 0.5
  %v1744 = vmul.f32 %v1724, 0.5
  %v1745 = vmul.f32 %v1727, 0.5
  %v1746 = vld [vmem:[%s4] sm:$0x1]
  %v1748 = vlaneseq
  %v1749 = vshrl.u32 %v1748, 7
  %v1750 = vsub.s32 0, %v1749
  %v1751 = vrot.slane %v1746, %v1750
  %v1753 = vadd.f32 %v1730, %v1751
  %v1754 = vadd.f32 %v1731, %v1751
  %v1755 = vadd.f32 %v1732, %v1751
  %v1756 = vadd.f32 %v1733, %v1751
  %v1757 = vadd.f32 %v1734, %v1751
  %v1758 = vadd.f32 %v1735, %v1751
  %v1759 = vadd.f32 %v1736, %v1751
  %v1760 = vadd.f32 %v1737, %v1751
  %v1761 = vadd.f32 %v1738, %v1751
  %v1762 = vadd.f32 %v1739, %v1751
  %v1763 = vadd.f32 %v1740, %v1751
  %v1764 = vadd.f32 %v1741, %v1751
  %v1765 = vadd.f32 %v1742, %v1751
  %v1766 = vadd.f32 %v1743, %v1751
  %v1767 = vadd.f32 %v1744, %v1751
  %v1768 = vadd.f32 %v1745, %v1751
  %1769 = vst [vmem:[%s5] sm:$0xff] %v1753
  %1770 = vst [vmem:[%s5 + $0x8] sm:$0xff] %v1754
  %1771 = vst [vmem:[%s5 + $0x10] sm:$0xff] %v1755
  %1772 = vst [vmem:[%s5 + $0x18] sm:$0xff] %v1756
  %1773 = vst [vmem:[%s5 + $0x20] sm:$0xff] %v1757
  %1774 = vst [vmem:[%s5 + $0x28] sm:$0xff] %v1758
  %1775 = vst [vmem:[%s5 + $0x30] sm:$0xff] %v1759
  %1776 = vst [vmem:[%s5 + $0x38] sm:$0xff] %v1760
  %1777 = vst [vmem:[%s5 + $0x40] sm:$0xff] %v1761
  %1778 = vst [vmem:[%s5 + $0x48] sm:$0xff] %v1762
  %1779 = vst [vmem:[%s5 + $0x50] sm:$0xff] %v1763
  %1780 = vst [vmem:[%s5 + $0x58] sm:$0xff] %v1764
  %1781 = vst [vmem:[%s5 + $0x60] sm:$0xff] %v1765
  %1782 = vst [vmem:[%s5 + $0x68] sm:$0xff] %v1766
  %1783 = vst [vmem:[%s5 + $0x70] sm:$0xff] %v1767
  %1784 = vst [vmem:[%s5 + $0x78] sm:$0xff] %v1768
  // Predicated region
  $region22: #{gat_forward.3} parent=0 // pred_check
    _
  $region23: #{gat_forward.3} parent=0 // pred_check_branch
    %1786 = sbr.rel (0) target = $region25
  $region24: #{gat_forward.3} parent=0 // pred_region
    _
  $region25: #{gat_forward.3} parent=0 // pred_fallthru
    _
  // Predicated region
  $region26: #{gat_forward.3} parent=0 // pred_check
    _
  $region27: #{gat_forward.3} parent=0 // pred_check_branch
    %1788 = sbr.rel (0) target = $region29
  $region28: #{gat_forward.3} parent=0 // pred_region
    _
  $region29: #{gat_forward.3} parent=0 // pred_fallthru
    _

</llo_original>
